<compile_context>
chip_gen: v7x
topology: tpu7x:2x2x1
jax: 0.10.0
libtpu: 0.0.40
codegen_flags: <defaults>
</compile_context>

<pallas_src>
import functools
import math

import jax
import jax.numpy as jnp
from jax.experimental import pallas as pl
from jax.experimental.pallas import tpu as pltpu

LANE = 128
BN_EPS = 1e-5
MXU_DTYPE = jnp.bfloat16      # MXU operand dtype (f32 accumulation is kept)
ACT_DTYPE = jnp.bfloat16      # inter-layer activation storage dtype in HBM
ROW_GRAN = 16                 # row granularity (bf16 sublane packing = 16)
MAX_TILE_ROWS = 4096          # ~1-2 MiB blocks; fine for v5e/v6e/v7x VMEM

# Module configuration (RefineBlock_withoutmask defaults).
FE_MLP1 = (128, 64, 64)       # FlowEmbedding mlp1
FE_MLP2 = (128, 64)           # FlowEmbedding mlp2
UP_MLP1 = (128, 64)           # set_upconv mlp1
UP_MLP2 = (64,)               # set_upconv mlp2
SMLP_OUT = 64                 # SharedMLPBlock out_channel
UP_LAST_CHANNEL = 64          # set_upconv last_channel (hard-coded in module)


def _round_up(x, m):
    return (x + m - 1) // m * m


def _pick_tp(P, S):
    """Point tile TP: multiple of ROW_GRAN, divides the row-padded point count,
    keeps TP*S near MAX_TILE_ROWS."""
    Pp = _round_up(P, ROW_GRAN)
    cap = max(ROW_GRAN, min(Pp, (MAX_TILE_ROWS // max(S, 1)) // ROW_GRAN * ROW_GRAN))
    m = Pp // ROW_GRAN
    best = ROW_GRAN
    for d in range(1, m + 1):
        if m % d == 0 and d * ROW_GRAN <= cap:
            best = d * ROW_GRAN
    return best, Pp


# ---------------------------------------------------------------------------
# Kernel 1: fused [prev-layer BN + ReLU] -> matmul -> partial BN stats.
# ---------------------------------------------------------------------------
def _mlp_kernel(pre_act, n_valid_rows, tile_rows, needs_mask, *refs):
    if pre_act:
        x_ref, scale_ref, shift_ref, w_ref, y_ref, stats_ref = refs
    else:
        x_ref, w_ref, y_ref, stats_ref = refs
        scale_ref = shift_ref = None

    x = x_ref[...].astype(jnp.float32)          # element-wise math in f32 (v5e)
    if pre_act:                                 # fold previous layer's BN+ReLU
        x = jnp.maximum(x * scale_ref[...] + shift_ref[...], 0.0)
    y = jnp.dot(x.astype(MXU_DTYPE), w_ref[...].astype(MXU_DTYPE),
                preferred_element_type=jnp.float32)
    y_ref[...] = y.astype(y_ref.dtype)          # bf16 activation storage

    def write_stats(ym):
        ssum = jnp.sum(ym, axis=0, keepdims=True)        # (1, Cout)
        ssq = jnp.sum(ym * y, axis=0, keepdims=True)     # (1, Cout)
        stats_ref[...] = jnp.concatenate([ssum, ssq], axis=0)[None]

    if needs_mask:
        is_last = pl.program_id(0) == pl.num_programs(0) - 1

        @pl.when(jnp.logical_not(is_last))
        def _():
            write_stats(y)

        @pl.when(is_last)                       # only last tile has padded rows
        def _():
            row0 = pl.program_id(0) * tile_rows
            rows = row0 + jax.lax.broadcasted_iota(jnp.int32, (tile_rows, 1), 0)
            write_stats(y * (rows < n_valid_rows).astype(jnp.float32))
    else:
        write_stats(y)


def mlp_layer(x, scale, shift, w, *, pre_act, n_valid_rows, tile_rows,
              needs_mask):
    R, Cin = x.shape
    Cout = w.shape[1]
    G = R // tile_rows
    kernel = functools.partial(_mlp_kernel, pre_act, n_valid_rows, tile_rows,
                               needs_mask)
    x_spec = pl.BlockSpec((tile_rows, Cin), lambda g: (g, 0))
    ss_spec = pl.BlockSpec((1, Cin), lambda g: (0, 0))
    w_spec = pl.BlockSpec((Cin, Cout), lambda g: (0, 0))
    if pre_act:
        in_arrays = (x, scale, shift, w)
        in_specs = [x_spec, ss_spec, ss_spec, w_spec]
    else:
        in_arrays = (x, w)
        in_specs = [x_spec, w_spec]
    y, stats = pl.pallas_call(
        kernel,
        out_shape=(jax.ShapeDtypeStruct((R, Cout), ACT_DTYPE),
                   jax.ShapeDtypeStruct((G, 2, Cout), jnp.float32)),
        grid=(G,),
        in_specs=in_specs,
        out_specs=[pl.BlockSpec((tile_rows, Cout), lambda g: (g, 0)),
                   pl.BlockSpec((1, 2, Cout), lambda g: (g, 0, 0))],
        compiler_params=pltpu.CompilerParams(
            dimension_semantics=("parallel",)),
    )(*in_arrays)
    return y, stats


# ---------------------------------------------------------------------------
# Kernel 2: final BN + activation (+ neighbor pooling when S > 1).
# ---------------------------------------------------------------------------
def bn_act_pool_kernel(y_ref, scale_ref, shift_ref, out_ref, *, act, pool):
    z = y_ref[...].astype(jnp.float32) * scale_ref[...][None] + shift_ref[...][None]
    if act == "relu":
        z = jnp.maximum(z, 0.0)
    else:  # swish
        z = z * jax.nn.sigmoid(z)
    if pool == "max":
        out_ref[...] = jnp.max(z, axis=1)
    else:  # sum
        out_ref[...] = jnp.sum(z, axis=1)


def bn_act_2d_kernel(y_ref, scale_ref, shift_ref, out_ref, *, act):
    z = y_ref[...].astype(jnp.float32) * scale_ref[...] + shift_ref[...]
    if act == "relu":
        z = jnp.maximum(z, 0.0)
    else:  # swish
        z = z * jax.nn.sigmoid(z)
    out_ref[...] = z


def bn_act_pool(y3, scale, shift, *, act, pool, tile_pts):
    P, S, C = y3.shape
    G = P // tile_pts
    kernel = functools.partial(bn_act_pool_kernel, act=act, pool=pool)
    return pl.pallas_call(
        kernel,
        out_shape=jax.ShapeDtypeStruct((P, C), jnp.float32),
        grid=(G,),
        in_specs=[pl.BlockSpec((tile_pts, S, C), lambda g: (g, 0, 0)),
                  pl.BlockSpec((1, C), lambda g: (0, 0)),
                  pl.BlockSpec((1, C), lambda g: (0, 0))],
        out_specs=pl.BlockSpec((tile_pts, C), lambda g: (g, 0)),
        compiler_params=pltpu.CompilerParams(
            dimension_semantics=("parallel",)),
    )(y3, scale, shift)


def bn_act_2d(y2, scale, shift, *, act, tile_pts):
    P, C = y2.shape
    G = P // tile_pts
    kernel = functools.partial(bn_act_2d_kernel, act=act)
    return pl.pallas_call(
        kernel,
        out_shape=jax.ShapeDtypeStruct((P, C), jnp.float32),
        grid=(G,),
        in_specs=[pl.BlockSpec((tile_pts, C), lambda g: (g, 0)),
                  pl.BlockSpec((1, C), lambda g: (0, 0)),
                  pl.BlockSpec((1, C), lambda g: (0, 0))],
        out_specs=pl.BlockSpec((tile_pts, C), lambda g: (g, 0)),
        compiler_params=pltpu.CompilerParams(
            dimension_semantics=("parallel",)),
    )(y2, scale, shift)


def _bn_scale_shift(stats, gamma, beta, n_valid):
    """Finalize training-mode BN scale/shift from fused partial sums (tiny)."""
    s = jnp.sum(stats[:, 0, :], axis=0)
    ss = jnp.sum(stats[:, 1, :], axis=0)
    mean = s / n_valid
    # E[x^2]-E[x]^2 (biased, like BN forward); clamp against fp cancellation.
    var = jnp.maximum(ss / n_valid - mean * mean, 0.0)
    scale = gamma * jax.lax.rsqrt(var + BN_EPS)
    shift = beta - mean * scale
    return scale[None, :], shift[None, :]


def run_mlp_stack(x_grouped, layers, *, pre_scale=None, pre_shift=None):
    """Runs the Conv->BN-stat layers of a stack.  Returns the LAST layer's raw
    (pre-BN) bf16 output (rows, C_pad), its BN scale/shift, and tiling meta."""
    B, N, S, Cin = x_grouped.shape
    P = B * N
    TP, Pp = _pick_tp(P, S)
    tile_rows = TP * S
    n_valid = P * S
    needs_mask = (Pp != P)

    x = x_grouped.reshape(P, S, Cin)
    if needs_mask:
        x = jnp.pad(x, ((0, Pp - P), (0, 0), (0, 0)))
    y = x.reshape(Pp * S, Cin)

    scale, shift = pre_scale, pre_shift
    for li, lay in enumerate(layers):
        pre_act = (li > 0) or (scale is not None)
        y, stats = mlp_layer(y, scale, shift, lay["w"], pre_act=pre_act,
                             n_valid_rows=n_valid, tile_rows=tile_rows,
                             needs_mask=needs_mask)
        scale, shift = _bn_scale_shift(stats, lay["gamma"], lay["beta"],
                                       float(n_valid))
    meta = dict(B=B, N=N, S=S, P=P, Pp=Pp, TP=TP, C_pad=y.shape[-1])
    return y, scale, shift, meta


def conv_bn_stack_pool(x_grouped, layers, *, pool, final_act, c_out,
                       pre_scale=None, pre_shift=None):
    """Repeated 1x1 Conv -> BatchNorm2d(train stats) -> act, then pool over the
    neighbor axis.  x_grouped: (B, N, S, Cin_real) -> (B, N, c_out)."""
    y, scale, shift, meta = run_mlp_stack(x_grouped, layers,
                                          pre_scale=pre_scale,
                                          pre_shift=pre_shift)
    B, N, S = meta["B"], meta["N"], meta["S"]
    P, Pp, TP, C_pad = meta["P"], meta["Pp"], meta["TP"], meta["C_pad"]
    if S == 1:   # no neighbor axis -> 2-D BN+act, no singleton reduction
        out = bn_act_2d(y, scale, shift, act=final_act, tile_pts=TP)
    else:
        out = bn_act_pool(y.reshape(Pp, S, C_pad), scale, shift,
                          act=final_act, pool=pool, tile_pts=TP)
    return out[:P, :c_out].reshape(B, N, c_out)


# ---------------------------------------------------------------------------
# Plain-JAX glue (KNN, gathers, quaternion algebra, tiny heads).
# ---------------------------------------------------------------------------
def square_distance(src, dst):
    d = -2.0 * jnp.einsum("bnc,bmc->bnm", src, dst)
    d = d + jnp.sum(src * src, axis=-1)[:, :, None]
    d = d + jnp.sum(dst * dst, axis=-1)[:, None, :]
    return d


def knn_indices(k, xyz, new_xyz):
    # TODO(synk): top-k neighbor selection (data-dependent sort) has no clean
    # rectangular-tile Pallas equivalent; kept in XLA.
    _, idx = jax.lax.top_k(-square_distance(new_xyz, xyz), k)
    return idx


def index_points(points, idx):
    # points (B, M, C), idx (B, N, S) -> (B, N, S, C).
    # TODO(synk): data-dependent gather kept in XLA.
    return jax.vmap(lambda p, i: p[i])(points, idx)


def inv_q(q):
    q = jnp.squeeze(q, axis=1)
    q2 = jnp.sum(q * q, axis=-1, keepdims=True) + 1e-10
    return jnp.concatenate([q[:, :1], -q[:, 1:4]], axis=-1) / q2


def mul_q_point(q_a, q_b, mode):
    if mode:
        q_a = q_a.reshape(q_a.shape[0], 1, 4)
    else:
        q_b = q_b.reshape(q_b.shape[0], 1, 4)
    a0, a1, a2, a3 = (q_a[:, :, i] for i in range(4))
    b0, b1, b2, b3 = (q_b[:, :, i] for i in range(4))
    r0 = a0 * b0 - a1 * b1 - a2 * b2 - a3 * b3
    r1 = a0 * b1 + a1 * b0 + a2 * b3 - a3 * b2
    r2 = a0 * b2 - a1 * b3 + a2 * b0 + a3 * b1
    r3 = a0 * b3 + a1 * b2 - a2 * b1 + a3 * b0
    return jnp.stack([r0, r1, r2, r3], axis=-1)


# ---------------------------------------------------------------------------
# Parameter initialization (mirrors PyTorch defaults, deterministic, in-script)
# ---------------------------------------------------------------------------
def _conv_layer(key, cin, cout, *, pad_in):
    # 1x1 Conv2d weight with kaiming_uniform(a=sqrt(5)) bound.  The conv bias of
    # the PyTorch module (where bias=True) is dropped: under training-mode
    # BatchNorm it is exactly cancelled by the mean subtraction, so the forward
    # output is identical without it.
    bound = 1.0 / math.sqrt(cin)
    cin_p = _round_up(cin, LANE) if pad_in else cin      # first layer stays narrow
    cout_p = _round_up(cout, LANE)
    w = jax.random.uniform(key, (cin, cout), jnp.float32, -bound, bound)
    w_pad = jnp.zeros((cin_p, cout_p), jnp.float32).at[:cin, :cout].set(w)
    gamma = jnp.zeros((cout_p,), jnp.float32).at[:cout].set(1.0)   # BN weight=1
    beta = jnp.zeros((cout_p,), jnp.float32)                       # BN bias=0
    return dict(w=w_pad.astype(MXU_DTYPE), gamma=gamma, beta=beta)


def _linear(key, cin, cout):
    kw, kb = jax.random.split(key)
    bound = 1.0 / math.sqrt(cin)
    w = jax.random.uniform(kw, (cin, cout), jnp.float32, -bound, bound)
    b = jax.random.uniform(kb, (cout,), jnp.float32, -bound, bound)
    return w, b


def init_params(key, in_channel):
    keys = jax.random.split(key, 8)
    C = in_channel

    def stack(k, chans):
        ks = jax.random.split(k, len(chans) - 1)
        return [_conv_layer(ks[i], chans[i], chans[i + 1], pad_in=(i > 0))
                for i in range(len(chans) - 1)]

    p = {}
    # FlowEmbedding (corr_func='concat')
    p["fe_mlp1"] = stack(keys[0], [2 * C + 3] + list(FE_MLP1))
    p["fe_mlp2"] = stack(keys[1], [FE_MLP1[-1] + C + 3] + list(FE_MLP2))
    # set_upconv_module
    p["up_mlp1"] = stack(keys[2], [UP_LAST_CHANNEL + 3] + list(UP_MLP1))
    p["up_mlp2"] = stack(keys[3], [UP_MLP1[-1] + C] + list(UP_MLP2))
    # SharedMLPBlock (128 -> 64) + BN + Swish
    p["smlp"] = stack(keys[4], [FE_MLP2[-1] + UP_MLP2[-1], SMLP_OUT])
    # pose head linears
    p["lin1_w"], p["lin1_b"] = _linear(keys[5], FE_MLP2[-1], 256)
    p["lin2_w"], p["lin2_b"] = _linear(keys[6], 256, 4)
    p["lin3_w"], p["lin3_b"] = _linear(keys[7], 256, 3)
    return p


# ---------------------------------------------------------------------------
# RefineBlock_withoutmask.forward
# ---------------------------------------------------------------------------
def refine_block_forward(params, pos1, pos2, pos1_l, feature1, feature2,
                         pre_q, pre_t, points_predict, *,
                         nsample=4, nsample_q=6, up_nsample=8):
    B, N, _ = pos1.shape
    C = feature1.shape[-1]

    # ---- coarse pose warp (tiny per-batch quaternion algebra; plain JAX) ----
    q_coarse = pre_q.reshape(B, 1, 4)
    t_coarse = pre_t.reshape(B, 1, 3)
    q_inv = inv_q(q_coarse)                                        # (B, 4)
    pc1_q = jnp.concatenate([jnp.zeros((B, N, 1), jnp.float32), pos1], axis=-1)
    xyz_warped = mul_q_point(q_coarse, pc1_q, mode=True)           # (B, N, 4)
    pos1_warped = mul_q_point(xyz_warped, q_inv, mode=False)[:, :, 1:] + t_coarse

    # ---- FlowEmbedding(pos1_warped, pos2, feature1, feature2) ---------------
    idx2 = knn_indices(nsample_q, pos2, pos1_warped)               # (B, N, Kq)
    xyz2_g = index_points(pos2, idx2)
    xyz_diff2 = xyz2_g - pos1_warped[:, :, None, :]
    feat2_g = index_points(feature2, idx2)
    feat2_rep = jnp.broadcast_to(feature2[:, :, None, :], (B, N, nsample_q, C))
    x_fe1 = jnp.concatenate([xyz_diff2, feat2_g, feat2_rep], axis=-1)
    fe1 = conv_bn_stack_pool(x_fe1, params["fe_mlp1"], pool="sum",
                             final_act="relu", c_out=FE_MLP1[-1])  # (B, N, 64)

    idx1 = knn_indices(nsample, pos1_warped, pos1_warped)
    xyz1_g = index_points(pos1_warped, idx1)
    xyz_diff1 = xyz1_g - pos1_warped[:, :, None, :]
    feat1_g = index_points(fe1, idx1)
    feat1_rep = jnp.broadcast_to(feature1[:, :, None, :], (B, N, nsample, C))
    x_fe2 = jnp.concatenate([xyz_diff1, feat1_g, feat1_rep], axis=-1)
    flow_feature = conv_bn_stack_pool(x_fe2, params["fe_mlp2"], pool="sum",
                                      final_act="relu",
                                      c_out=FE_MLP2[-1])           # (B, N, 64)

    # ---- set_upconv(pos1, pos1_l, feature1, points_predict) -----------------
    idx_u = knn_indices(up_nsample, pos1_l, pos1)
    xyz2_gu = index_points(pos1_l, idx_u)
    feat2_gu = index_points(points_predict, idx_u)
    xyz_diff_u = xyz2_gu - pos1[:, :, None, :]
    net = jnp.concatenate([feat2_gu, xyz_diff_u], axis=-1)         # (B, N, 8, 67)
    up1 = conv_bn_stack_pool(net, params["up_mlp1"], pool="max",
                             final_act="relu", c_out=UP_MLP1[-1])  # (B, N, 64)

    # set_upconv mlp2: raw conv + fused BN stats only; its BN+ReLU is deferred
    # into the SharedMLP layer's fused pre-activation (saves one HBM pass).
    up_cat = jnp.concatenate([up1, feature1], axis=-1)[:, :, None, :]  # (B,N,1,68)
    y_up, up_scale, up_shift, meta_up = run_mlp_stack(up_cat, params["up_mlp2"])
    P = meta_up["P"]
    flow_up_raw = y_up[:P, :UP_MLP2[-1]]               # (P, 64) bf16 pre-BN conv

    # ---- SharedMLPBlock (Conv + BN + Swish) ---------------------------------
    # Input channels = [flow_feature (already BN+ReLU'd, >=0) | raw up conv].
    # The kernel's pre-activation applies (1,0)+ReLU to the first half (a no-op
    # on non-negative values) and the deferred up_mlp2 BN+ReLU to the second.
    smlp_in = jnp.concatenate(
        [flow_feature.reshape(P, FE_MLP2[-1]).astype(ACT_DTYPE), flow_up_raw],
        axis=-1).reshape(B, N, 1, FE_MLP2[-1] + UP_MLP2[-1])
    pre_scale = jnp.concatenate(
        [jnp.ones((1, FE_MLP2[-1]), jnp.float32), up_scale[:, :UP_MLP2[-1]]],
        axis=-1)
    pre_shift = jnp.concatenate(
        [jnp.zeros((1, FE_MLP2[-1]), jnp.float32), up_shift[:, :UP_MLP2[-1]]],
        axis=-1)
    flow_feature_new = conv_bn_stack_pool(smlp_in, params["smlp"], pool="sum",
                                          final_act="swish", c_out=SMLP_OUT,
                                          pre_scale=pre_scale,
                                          pre_shift=pre_shift)     # (B, N, 64)

    # ---- pose head (tiny (B,1,*) tensors; plain JAX) ------------------------
    pooled = jnp.mean(flow_feature_new, axis=1, keepdims=True)     # AdaptiveAvgPool1d(1)
    pose = pooled @ params["lin1_w"] + params["lin1_b"]            # (B, 1, 256)
    # TODO(synk): nn.Dropout(0.5) treated as identity (inference-mode forward).
    new_q_det = pose @ params["lin2_w"] + params["lin2_b"]         # (B, 1, 4)
    new_t_det = pose @ params["lin3_w"] + params["lin3_b"]         # (B, 1, 3)
    new_q_det = new_q_det / (jnp.sqrt(
        jnp.sum(new_q_det * new_q_det, axis=-1, keepdims=True) + 1e-10) + 1e-10)

    t4 = jnp.concatenate([jnp.zeros((B, 1, 1), jnp.float32), t_coarse], axis=-1)
    t4 = mul_q_point(q_coarse, t4, mode=True)
    new_t_coarse_trans = mul_q_point(t4, q_inv, mode=False)[:, :, 1:]
    new_q = jnp.squeeze(mul_q_point(new_q_det, q_coarse, mode=False), axis=1)
    new_t = jnp.squeeze(new_t_coarse_trans + new_t_det, axis=1)
    return new_q, new_t, flow_feature_new


if __name__ == "__main__":
    B, N, NL, C_IN = 2, 16, 8, 4        # npoint=16, coarse-level points=8

    key = jax.random.PRNGKey(0)
    ks = jax.random.split(key, 10)
    params = init_params(ks[0], C_IN)

    pos1 = jax.random.normal(ks[1], (B, N, 3), jnp.float32)
    pos2 = pos1 + 0.1 * jax.random.normal(ks[2], (B, N, 3), jnp.float32)
    pos1_l = jax.random.normal(ks[3], (B, NL, 3), jnp.float32)
    feature1 = jax.random.normal(ks[4], (B, N, C_IN), jnp.float32)
    feature2 = jax.random.normal(ks[5], (B, N, C_IN), jnp.float32)
    points_predict = jax.random.normal(ks[6], (B, NL, 64), jnp.float32)
    pre_q = jax.random.normal(ks[7], (B, 4), jnp.float32)
    pre_q = pre_q / jnp.linalg.norm(pre_q, axis=-1, keepdims=True)
    pre_t = 0.1 * jax.random.normal(ks[8], (B, 3), jnp.float32)

    fwd = jax.jit(functools.partial(refine_block_forward,
                                    nsample=4, nsample_q=6, up_nsample=8))
    new_q, new_t, flow_feature_new = fwd(params, pos1, pos2, pos1_l, feature1,
                                         feature2, pre_q, pre_t, points_predict)
    jax.block_until_ready((new_q, new_t, flow_feature_new))

    assert new_q.shape == (B, 4)
    assert new_t.shape == (B, 3)
    assert flow_feature_new.shape == (B, N, 64)
    assert bool(jnp.all(jnp.isfinite(new_q)))
    assert bool(jnp.all(jnp.isfinite(new_t)))
    assert bool(jnp.all(jnp.isfinite(flow_feature_new)))
    print("KERNEL_OK")
</pallas_src>

<mosaic_0001>
module attributes {stable_mosaic.version = 11 : i64} {
  func.func @_mlp_kernel(%arg0: i32, %arg1: memref<192x11xf32, #tpu.memory_space<vmem>>, %arg2: memref<11x128xbf16, #tpu.memory_space<vmem>>, %arg3: memref<192x128xbf16, #tpu.memory_space<vmem>>, %arg4: memref<1x2x128xf32, #tpu.memory_space<vmem>>) attributes {dimension_semantics = [#tpu.dimension_semantics<parallel>], iteration_bounds = array<i64: 1>, scalar_prefetch = 0 : i64, scratch_operands = 0 : i64, tpu.core_type = #tpu.core_type<tc>, window_params = [{transform_indices = @transform_0, window_bounds = array<i64: 192, 11>}, {pipeline_mode = #tpu.pipeline_mode<synchronous>, transform_indices = @transform_1, window_bounds = array<i64: 11, 128>}, {transform_indices = @transform_2, window_bounds = array<i64: 192, 128>}, {transform_indices = @transform_3, window_bounds = array<i64: 1, 2, 128>}]} {
    %c0 = arith.constant 0 : index
    %c0_0 = arith.constant 0 : index
    %0 = vector.load %arg1[%c0, %c0_0] : memref<192x11xf32, #tpu.memory_space<vmem>>, vector<192x11xf32>
    %1 = arith.truncf %0 : vector<192x11xf32> to vector<192x11xbf16>
    %c0_1 = arith.constant 0 : index
    %c0_2 = arith.constant 0 : index
    %2 = vector.load %arg2[%c0_1, %c0_2] : memref<11x128xbf16, #tpu.memory_space<vmem>>, vector<11x128xbf16>
    %cst = arith.constant dense<0.000000e+00> : vector<192x128xf32>
    %3 = tpu.matmul %1, %2, %cst {dimension_numbers = #tpu.dot_dimension_numbers<[1], [0], [0], [1], [0, 0, 1, 1], [], []>} : vector<192x11xbf16>, vector<11x128xbf16>, vector<192x128xf32> -> vector<192x128xf32>
    %4 = arith.truncf %3 : vector<192x128xf32> to vector<192x128xbf16>
    %c0_3 = arith.constant 0 : index
    %c0_4 = arith.constant 0 : index
    %5 = vector.load %arg3[%c0_3, %c0_4] : memref<192x128xbf16, #tpu.memory_space<vmem>>, vector<192x128xbf16>
    tpu.vector_store %arg3[%c0_3, %c0_4], %4 {strides = array<i32>} : memref<192x128xbf16, #tpu.memory_space<vmem>>, vector<192x128xbf16>,
    %cst_5 = arith.constant dense<0.000000e+00> : vector<128xf32>
    %6 = vector.multi_reduction <add>, %3, %cst_5 [0] : vector<192x128xf32> to vector<128xf32>
    %7 = vector.shape_cast %6 : vector<128xf32> to vector<1x128xf32>
    %8 = arith.mulf %3, %3 : vector<192x128xf32>
    %cst_6 = arith.constant dense<0.000000e+00> : vector<128xf32>
    %9 = vector.multi_reduction <add>, %8, %cst_6 [0] : vector<192x128xf32> to vector<128xf32>
    %10 = vector.shape_cast %9 : vector<128xf32> to vector<1x128xf32>
    %11 = tpu.concatenate %7, %10 in 0 : vector<1x128xf32>, vector<1x128xf32> -> vector<2x128xf32>
    %12 = vector.shape_cast %11 : vector<2x128xf32> to vector<1x2x128xf32>
    %c0_7 = arith.constant 0 : index
    %c0_8 = arith.constant 0 : index
    %c0_9 = arith.constant 0 : index
    %13 = vector.load %arg4[%c0_7, %c0_8, %c0_9] : memref<1x2x128xf32, #tpu.memory_space<vmem>>, vector<1x2x128xf32>
    tpu.vector_store %arg4[%c0_7, %c0_8, %c0_9], %12 {strides = array<i32>} : memref<1x2x128xf32, #tpu.memory_space<vmem>>, vector<1x2x128xf32>,
    return
  }
  func.func @transform_0(%arg0: i32) -> (i32, i32) {
    %c0_i32 = arith.constant 0 : i32
    %c0_i32_0 = arith.constant 0 : i32
    return %arg0, %c0_i32 : i32, i32
  }
  func.func @transform_1(%arg0: i32) -> (i32, i32) {
    %c0_i32 = arith.constant 0 : i32
    %c0_i32_0 = arith.constant 0 : i32
    %c0_i32_1 = arith.constant 0 : i32
    return %c0_i32, %c0_i32_0 : i32, i32
  }
  func.func @transform_2(%arg0: i32) -> (i32, i32) {
    %c0_i32 = arith.constant 0 : i32
    %c0_i32_0 = arith.constant 0 : i32
    return %arg0, %c0_i32 : i32, i32
  }
  func.func @transform_3(%arg0: i32) -> (i32, i32, i32) {
    %c0_i32 = arith.constant 0 : i32
    %c0_i32_0 = arith.constant 0 : i32
    %c0_i32_1 = arith.constant 0 : i32
    return %arg0, %c0_i32, %c0_i32_0 : i32, i32, i32
  }
}

module attributes {stable_mosaic.version = 11 : i64} {
  func.func @_mlp_kernel(%arg0: i32, %arg1: memref<192x128xbf16, #tpu.memory_space<vmem>>, %arg2: memref<1x128xf32, #tpu.memory_space<vmem>>, %arg3: memref<1x128xf32, #tpu.memory_space<vmem>>, %arg4: memref<128x128xbf16, #tpu.memory_space<vmem>>, %arg5: memref<192x128xbf16, #tpu.memory_space<vmem>>, %arg6: memref<1x2x128xf32, #tpu.memory_space<vmem>>) attributes {dimension_semantics = [#tpu.dimension_semantics<parallel>], iteration_bounds = array<i64: 1>, scalar_prefetch = 0 : i64, scratch_operands = 0 : i64, tpu.core_type = #tpu.core_type<tc>, window_params = [{transform_indices = @transform_0, window_bounds = array<i64: 192, 128>}, {pipeline_mode = #tpu.pipeline_mode<synchronous>, transform_indices = @transform_1, window_bounds = array<i64: 1, 128>}, {pipeline_mode = #tpu.pipeline_mode<synchronous>, transform_indices = @transform_2, window_bounds = array<i64: 1, 128>}, {pipeline_mode = #tpu.pipeline_mode<synchronous>, transform_indices = @transform_3, window_bounds = array<i64: 128, 128>}, {transform_indices = @transform_4, window_bounds = array<i64: 192, 128>}, {transform_indices = @transform_5, window_bounds = array<i64: 1, 2, 128>}]} {
    %c0 = arith.constant 0 : index
    %c0_0 = arith.constant 0 : index
    %0 = vector.load %arg1[%c0, %c0_0] : memref<192x128xbf16, #tpu.memory_space<vmem>>, vector<192x128xbf16>
    %1 = arith.extf %0 : vector<192x128xbf16> to vector<192x128xf32>
    %c0_1 = arith.constant 0 : index
    %c0_2 = arith.constant 0 : index
    %2 = vector.load %arg2[%c0_1, %c0_2] : memref<1x128xf32, #tpu.memory_space<vmem>>, vector<1x128xf32>
    %3 = vector.broadcast %2 : vector<1x128xf32> to vector<192x128xf32>
    %4 = arith.mulf %1, %3 : vector<192x128xf32>
    %c0_3 = arith.constant 0 : index
    %c0_4 = arith.constant 0 : index
    %5 = vector.load %arg3[%c0_3, %c0_4] : memref<1x128xf32, #tpu.memory_space<vmem>>, vector<1x128xf32>
    %6 = vector.broadcast %5 : vector<1x128xf32> to vector<192x128xf32>
    %7 = arith.addf %4, %6 : vector<192x128xf32>
    %cst = arith.constant 0.000000e+00 : f32
    %8 = vector.broadcast %cst : f32 to vector<192x128xf32>
    %9 = arith.maximumf %7, %8 : vector<192x128xf32>
    %10 = arith.truncf %9 : vector<192x128xf32> to vector<192x128xbf16>
    %c0_5 = arith.constant 0 : index
    %c0_6 = arith.constant 0 : index
    %11 = vector.load %arg4[%c0_5, %c0_6] : memref<128x128xbf16, #tpu.memory_space<vmem>>, vector<128x128xbf16>
    %cst_7 = arith.constant dense<0.000000e+00> : vector<192x128xf32>
    %12 = tpu.matmul %10, %11, %cst_7 {dimension_numbers = #tpu.dot_dimension_numbers<[1], [0], [0], [1], [0, 0, 1, 1], [], []>} : vector<192x128xbf16>, vector<128x128xbf16>, vector<192x128xf32> -> vector<192x128xf32>
    %13 = arith.truncf %12 : vector<192x128xf32> to vector<192x128xbf16>
    %c0_8 = arith.constant 0 : index
    %c0_9 = arith.constant 0 : index
    %14 = vector.load %arg5[%c0_8, %c0_9] : memref<192x128xbf16, #tpu.memory_space<vmem>>, vector<192x128xbf16>
    tpu.vector_store %arg5[%c0_8, %c0_9], %13 {strides = array<i32>} : memref<192x128xbf16, #tpu.memory_space<vmem>>, vector<192x128xbf16>,
    %cst_10 = arith.constant dense<0.000000e+00> : vector<128xf32>
    %15 = vector.multi_reduction <add>, %12, %cst_10 [0] : vector<192x128xf32> to vector<128xf32>
    %16 = vector.shape_cast %15 : vector<128xf32> to vector<1x128xf32>
    %17 = arith.mulf %12, %12 : vector<192x128xf32>
    %cst_11 = arith.constant dense<0.000000e+00> : vector<128xf32>
    %18 = vector.multi_reduction <add>, %17, %cst_11 [0] : vector<192x128xf32> to vector<128xf32>
    %19 = vector.shape_cast %18 : vector<128xf32> to vector<1x128xf32>
    %20 = tpu.concatenate %16, %19 in 0 : vector<1x128xf32>, vector<1x128xf32> -> vector<2x128xf32>
    %21 = vector.shape_cast %20 : vector<2x128xf32> to vector<1x2x128xf32>
    %c0_12 = arith.constant 0 : index
    %c0_13 = arith.constant 0 : index
    %c0_14 = arith.constant 0 : index
    %22 = vector.load %arg6[%c0_12, %c0_13, %c0_14] : memref<1x2x128xf32, #tpu.memory_space<vmem>>, vector<1x2x128xf32>
    tpu.vector_store %arg6[%c0_12, %c0_13, %c0_14], %21 {strides = array<i32>} : memref<1x2x128xf32, #tpu.memory_space<vmem>>, vector<1x2x128xf32>,
    return
  }
  func.func @transform_0(%arg0: i32) -> (i32, i32) {
    %c0_i32 = arith.constant 0 : i32
    %c0_i32_0 = arith.constant 0 : i32
    return %arg0, %c0_i32 : i32, i32
  }
  func.func @transform_1(%arg0: i32) -> (i32, i32) {
    %c0_i32 = arith.constant 0 : i32
    %c0_i32_0 = arith.constant 0 : i32
    %c0_i32_1 = arith.constant 0 : i32
    return %c0_i32, %c0_i32_0 : i32, i32
  }
  func.func @transform_2(%arg0: i32) -> (i32, i32) {
    %c0_i32 = arith.constant 0 : i32
    %c0_i32_0 = arith.constant 0 : i32
    %c0_i32_1 = arith.constant 0 : i32
    return %c0_i32, %c0_i32_0 : i32, i32
  }
  func.func @transform_3(%arg0: i32) -> (i32, i32) {
    %c0_i32 = arith.constant 0 : i32
    %c0_i32_0 = arith.constant 0 : i32
    %c0_i32_1 = arith.constant 0 : i32
    return %c0_i32, %c0_i32_0 : i32, i32
  }
  func.func @transform_4(%arg0: i32) -> (i32, i32) {
    %c0_i32 = arith.constant 0 : i32
    %c0_i32_0 = arith.constant 0 : i32
    return %arg0, %c0_i32 : i32, i32
  }
  func.func @transform_5(%arg0: i32) -> (i32, i32, i32) {
    %c0_i32 = arith.constant 0 : i32
    %c0_i32_0 = arith.constant 0 : i32
    %c0_i32_1 = arith.constant 0 : i32
    return %arg0, %c0_i32, %c0_i32_0 : i32, i32, i32
  }
}

module attributes {stable_mosaic.version = 11 : i64} {
  func.func @bn_act_pool_kernel(%arg0: i32, %arg1: memref<32x6x128xbf16, #tpu.memory_space<vmem>>, %arg2: memref<1x128xf32, #tpu.memory_space<vmem>>, %arg3: memref<1x128xf32, #tpu.memory_space<vmem>>, %arg4: memref<32x128xf32, #tpu.memory_space<vmem>>) attributes {dimension_semantics = [#tpu.dimension_semantics<parallel>], iteration_bounds = array<i64: 1>, scalar_prefetch = 0 : i64, scratch_operands = 0 : i64, tpu.core_type = #tpu.core_type<tc>, window_params = [{transform_indices = @transform_0, window_bounds = array<i64: 32, 6, 128>}, {pipeline_mode = #tpu.pipeline_mode<synchronous>, transform_indices = @transform_1, window_bounds = array<i64: 1, 128>}, {pipeline_mode = #tpu.pipeline_mode<synchronous>, transform_indices = @transform_2, window_bounds = array<i64: 1, 128>}, {transform_indices = @transform_3, window_bounds = array<i64: 32, 128>}]} {
    %c0 = arith.constant 0 : index
    %c0_0 = arith.constant 0 : index
    %c0_1 = arith.constant 0 : index
    %0 = vector.load %arg1[%c0, %c0_0, %c0_1] : memref<32x6x128xbf16, #tpu.memory_space<vmem>>, vector<32x6x128xbf16>
    %1 = arith.extf %0 : vector<32x6x128xbf16> to vector<32x6x128xf32>
    %c0_2 = arith.constant 0 : index
    %c0_3 = arith.constant 0 : index
    %2 = vector.load %arg2[%c0_2, %c0_3] : memref<1x128xf32, #tpu.memory_space<vmem>>, vector<1x128xf32>
    %3 = vector.shape_cast %2 : vector<1x128xf32> to vector<1x1x128xf32>
    %4 = vector.broadcast %3 : vector<1x1x128xf32> to vector<32x6x128xf32>
    %5 = arith.mulf %1, %4 : vector<32x6x128xf32>
    %c0_4 = arith.constant 0 : index
    %c0_5 = arith.constant 0 : index
    %6 = vector.load %arg3[%c0_4, %c0_5] : memref<1x128xf32, #tpu.memory_space<vmem>>, vector<1x128xf32>
    %7 = vector.shape_cast %6 : vector<1x128xf32> to vector<1x1x128xf32>
    %8 = vector.broadcast %7 : vector<1x1x128xf32> to vector<32x6x128xf32>
    %9 = arith.addf %5, %8 : vector<32x6x128xf32>
    %cst = arith.constant 0.000000e+00 : f32
    %10 = vector.broadcast %cst : f32 to vector<32x6x128xf32>
    %11 = arith.maximumf %9, %10 : vector<32x6x128xf32>
    %cst_6 = arith.constant dense<0.000000e+00> : vector<32x128xf32>
    %12 = vector.multi_reduction <add>, %11, %cst_6 [1] : vector<32x6x128xf32> to vector<32x128xf32>
    %c0_7 = arith.constant 0 : index
    %c0_8 = arith.constant 0 : index
    %13 = vector.load %arg4[%c0_7, %c0_8] : memref<32x128xf32, #tpu.memory_space<vmem>>, vector<32x128xf32>
    tpu.vector_store %arg4[%c0_7, %c0_8], %12 {strides = array<i32>} : memref<32x128xf32, #tpu.memory_space<vmem>>, vector<32x128xf32>,
    return
  }
  func.func @transform_0(%arg0: i32) -> (i32, i32, i32) {
    %c0_i32 = arith.constant 0 : i32
    %c0_i32_0 = arith.constant 0 : i32
    %c0_i32_1 = arith.constant 0 : i32
    return %arg0, %c0_i32, %c0_i32_0 : i32, i32, i32
  }
  func.func @transform_1(%arg0: i32) -> (i32, i32) {
    %c0_i32 = arith.constant 0 : i32
    %c0_i32_0 = arith.constant 0 : i32
    %c0_i32_1 = arith.constant 0 : i32
    return %c0_i32, %c0_i32_0 : i32, i32
  }
  func.func @transform_2(%arg0: i32) -> (i32, i32) {
    %c0_i32 = arith.constant 0 : i32
    %c0_i32_0 = arith.constant 0 : i32
    %c0_i32_1 = arith.constant 0 : i32
    return %c0_i32, %c0_i32_0 : i32, i32
  }
  func.func @transform_3(%arg0: i32) -> (i32, i32) {
    %c0_i32 = arith.constant 0 : i32
    %c0_i32_0 = arith.constant 0 : i32
    return %arg0, %c0_i32 : i32, i32
  }
}

module attributes {stable_mosaic.version = 11 : i64} {
  func.func @_mlp_kernel(%arg0: i32, %arg1: memref<128x71xf32, #tpu.memory_space<vmem>>, %arg2: memref<71x128xbf16, #tpu.memory_space<vmem>>, %arg3: memref<128x128xbf16, #tpu.memory_space<vmem>>, %arg4: memref<1x2x128xf32, #tpu.memory_space<vmem>>) attributes {dimension_semantics = [#tpu.dimension_semantics<parallel>], iteration_bounds = array<i64: 1>, scalar_prefetch = 0 : i64, scratch_operands = 0 : i64, tpu.core_type = #tpu.core_type<tc>, window_params = [{transform_indices = @transform_0, window_bounds = array<i64: 128, 71>}, {pipeline_mode = #tpu.pipeline_mode<synchronous>, transform_indices = @transform_1, window_bounds = array<i64: 71, 128>}, {transform_indices = @transform_2, window_bounds = array<i64: 128, 128>}, {transform_indices = @transform_3, window_bounds = array<i64: 1, 2, 128>}]} {
    %c0 = arith.constant 0 : index
    %c0_0 = arith.constant 0 : index
    %0 = vector.load %arg1[%c0, %c0_0] : memref<128x71xf32, #tpu.memory_space<vmem>>, vector<128x71xf32>
    %1 = arith.truncf %0 : vector<128x71xf32> to vector<128x71xbf16>
    %c0_1 = arith.constant 0 : index
    %c0_2 = arith.constant 0 : index
    %2 = vector.load %arg2[%c0_1, %c0_2] : memref<71x128xbf16, #tpu.memory_space<vmem>>, vector<71x128xbf16>
    %cst = arith.constant dense<0.000000e+00> : vector<128x128xf32>
    %3 = tpu.matmul %1, %2, %cst {dimension_numbers = #tpu.dot_dimension_numbers<[1], [0], [0], [1], [0, 0, 1, 1], [], []>} : vector<128x71xbf16>, vector<71x128xbf16>, vector<128x128xf32> -> vector<128x128xf32>
    %4 = arith.truncf %3 : vector<128x128xf32> to vector<128x128xbf16>
    %c0_3 = arith.constant 0 : index
    %c0_4 = arith.constant 0 : index
    %5 = vector.load %arg3[%c0_3, %c0_4] : memref<128x128xbf16, #tpu.memory_space<vmem>>, vector<128x128xbf16>
    tpu.vector_store %arg3[%c0_3, %c0_4], %4 {strides = array<i32>} : memref<128x128xbf16, #tpu.memory_space<vmem>>, vector<128x128xbf16>,
    %cst_5 = arith.constant dense<0.000000e+00> : vector<128xf32>
    %6 = vector.multi_reduction <add>, %3, %cst_5 [0] : vector<128x128xf32> to vector<128xf32>
    %7 = vector.shape_cast %6 : vector<128xf32> to vector<1x128xf32>
    %8 = arith.mulf %3, %3 : vector<128x128xf32>
    %cst_6 = arith.constant dense<0.000000e+00> : vector<128xf32>
    %9 = vector.multi_reduction <add>, %8, %cst_6 [0] : vector<128x128xf32> to vector<128xf32>
    %10 = vector.shape_cast %9 : vector<128xf32> to vector<1x128xf32>
    %11 = tpu.concatenate %7, %10 in 0 : vector<1x128xf32>, vector<1x128xf32> -> vector<2x128xf32>
    %12 = vector.shape_cast %11 : vector<2x128xf32> to vector<1x2x128xf32>
    %c0_7 = arith.constant 0 : index
    %c0_8 = arith.constant 0 : index
    %c0_9 = arith.constant 0 : index
    %13 = vector.load %arg4[%c0_7, %c0_8, %c0_9] : memref<1x2x128xf32, #tpu.memory_space<vmem>>, vector<1x2x128xf32>
    tpu.vector_store %arg4[%c0_7, %c0_8, %c0_9], %12 {strides = array<i32>} : memref<1x2x128xf32, #tpu.memory_space<vmem>>, vector<1x2x128xf32>,
    return
  }
  func.func @transform_0(%arg0: i32) -> (i32, i32) {
    %c0_i32 = arith.constant 0 : i32
    %c0_i32_0 = arith.constant 0 : i32
    return %arg0, %c0_i32 : i32, i32
  }
  func.func @transform_1(%arg0: i32) -> (i32, i32) {
    %c0_i32 = arith.constant 0 : i32
    %c0_i32_0 = arith.constant 0 : i32
    %c0_i32_1 = arith.constant 0 : i32
    return %c0_i32, %c0_i32_0 : i32, i32
  }
  func.func @transform_2(%arg0: i32) -> (i32, i32) {
    %c0_i32 = arith.constant 0 : i32
    %c0_i32_0 = arith.constant 0 : i32
    return %arg0, %c0_i32 : i32, i32
  }
  func.func @transform_3(%arg0: i32) -> (i32, i32, i32) {
    %c0_i32 = arith.constant 0 : i32
    %c0_i32_0 = arith.constant 0 : i32
    %c0_i32_1 = arith.constant 0 : i32
    return %arg0, %c0_i32, %c0_i32_0 : i32, i32, i32
  }
}

module attributes {stable_mosaic.version = 11 : i64} {
  func.func @_mlp_kernel(%arg0: i32, %arg1: memref<128x128xbf16, #tpu.memory_space<vmem>>, %arg2: memref<1x128xf32, #tpu.memory_space<vmem>>, %arg3: memref<1x128xf32, #tpu.memory_space<vmem>>, %arg4: memref<128x128xbf16, #tpu.memory_space<vmem>>, %arg5: memref<128x128xbf16, #tpu.memory_space<vmem>>, %arg6: memref<1x2x128xf32, #tpu.memory_space<vmem>>) attributes {dimension_semantics = [#tpu.dimension_semantics<parallel>], iteration_bounds = array<i64: 1>, scalar_prefetch = 0 : i64, scratch_operands = 0 : i64, tpu.core_type = #tpu.core_type<tc>, window_params = [{transform_indices = @transform_0, window_bounds = array<i64: 128, 128>}, {pipeline_mode = #tpu.pipeline_mode<synchronous>, transform_indices = @transform_1, window_bounds = array<i64: 1, 128>}, {pipeline_mode = #tpu.pipeline_mode<synchronous>, transform_indices = @transform_2, window_bounds = array<i64: 1, 128>}, {pipeline_mode = #tpu.pipeline_mode<synchronous>, transform_indices = @transform_3, window_bounds = array<i64: 128, 128>}, {transform_indices = @transform_4, window_bounds = array<i64: 128, 128>}, {transform_indices = @transform_5, window_bounds = array<i64: 1, 2, 128>}]} {
    %c0 = arith.constant 0 : index
    %c0_0 = arith.constant 0 : index
    %0 = vector.load %arg1[%c0, %c0_0] : memref<128x128xbf16, #tpu.memory_space<vmem>>, vector<128x128xbf16>
    %1 = arith.extf %0 : vector<128x128xbf16> to vector<128x128xf32>
    %c0_1 = arith.constant 0 : index
    %c0_2 = arith.constant 0 : index
    %2 = vector.load %arg2[%c0_1, %c0_2] : memref<1x128xf32, #tpu.memory_space<vmem>>, vector<1x128xf32>
    %3 = vector.broadcast %2 : vector<1x128xf32> to vector<128x128xf32>
    %4 = arith.mulf %1, %3 : vector<128x128xf32>
    %c0_3 = arith.constant 0 : index
    %c0_4 = arith.constant 0 : index
    %5 = vector.load %arg3[%c0_3, %c0_4] : memref<1x128xf32, #tpu.memory_space<vmem>>, vector<1x128xf32>
    %6 = vector.broadcast %5 : vector<1x128xf32> to vector<128x128xf32>
    %7 = arith.addf %4, %6 : vector<128x128xf32>
    %cst = arith.constant 0.000000e+00 : f32
    %8 = vector.broadcast %cst : f32 to vector<128x128xf32>
    %9 = arith.maximumf %7, %8 : vector<128x128xf32>
    %10 = arith.truncf %9 : vector<128x128xf32> to vector<128x128xbf16>
    %c0_5 = arith.constant 0 : index
    %c0_6 = arith.constant 0 : index
    %11 = vector.load %arg4[%c0_5, %c0_6] : memref<128x128xbf16, #tpu.memory_space<vmem>>, vector<128x128xbf16>
    %cst_7 = arith.constant dense<0.000000e+00> : vector<128x128xf32>
    %12 = tpu.matmul %10, %11, %cst_7 {dimension_numbers = #tpu.dot_dimension_numbers<[1], [0], [0], [1], [0, 0, 1, 1], [], []>} : vector<128x128xbf16>, vector<128x128xbf16>, vector<128x128xf32> -> vector<128x128xf32>
    %13 = arith.truncf %12 : vector<128x128xf32> to vector<128x128xbf16>
    %c0_8 = arith.constant 0 : index
    %c0_9 = arith.constant 0 : index
    %14 = vector.load %arg5[%c0_8, %c0_9] : memref<128x128xbf16, #tpu.memory_space<vmem>>, vector<128x128xbf16>
    tpu.vector_store %arg5[%c0_8, %c0_9], %13 {strides = array<i32>} : memref<128x128xbf16, #tpu.memory_space<vmem>>, vector<128x128xbf16>,
    %cst_10 = arith.constant dense<0.000000e+00> : vector<128xf32>
    %15 = vector.multi_reduction <add>, %12, %cst_10 [0] : vector<128x128xf32> to vector<128xf32>
    %16 = vector.shape_cast %15 : vector<128xf32> to vector<1x128xf32>
    %17 = arith.mulf %12, %12 : vector<128x128xf32>
    %cst_11 = arith.constant dense<0.000000e+00> : vector<128xf32>
    %18 = vector.multi_reduction <add>, %17, %cst_11 [0] : vector<128x128xf32> to vector<128xf32>
    %19 = vector.shape_cast %18 : vector<128xf32> to vector<1x128xf32>
    %20 = tpu.concatenate %16, %19 in 0 : vector<1x128xf32>, vector<1x128xf32> -> vector<2x128xf32>
    %21 = vector.shape_cast %20 : vector<2x128xf32> to vector<1x2x128xf32>
    %c0_12 = arith.constant 0 : index
    %c0_13 = arith.constant 0 : index
    %c0_14 = arith.constant 0 : index
    %22 = vector.load %arg6[%c0_12, %c0_13, %c0_14] : memref<1x2x128xf32, #tpu.memory_space<vmem>>, vector<1x2x128xf32>
    tpu.vector_store %arg6[%c0_12, %c0_13, %c0_14], %21 {strides = array<i32>} : memref<1x2x128xf32, #tpu.memory_space<vmem>>, vector<1x2x128xf32>,
    return
  }
  func.func @transform_0(%arg0: i32) -> (i32, i32) {
    %c0_i32 = arith.constant 0 : i32
    %c0_i32_0 = arith.constant 0 : i32
    return %arg0, %c0_i32 : i32, i32
  }
  func.func @transform_1(%arg0: i32) -> (i32, i32) {
    %c0_i32 = arith.constant 0 : i32
    %c0_i32_0 = arith.constant 0 : i32
    %c0_i32_1 = arith.constant 0 : i32
    return %c0_i32, %c0_i32_0 : i32, i32
  }
  func.func @transform_2(%arg0: i32) -> (i32, i32) {
    %c0_i32 = arith.constant 0 : i32
    %c0_i32_0 = arith.constant 0 : i32
    %c0_i32_1 = arith.constant 0 : i32
    return %c0_i32, %c0_i32_0 : i32, i32
  }
  func.func @transform_3(%arg0: i32) -> (i32, i32) {
    %c0_i32 = arith.constant 0 : i32
    %c0_i32_0 = arith.constant 0 : i32
    %c0_i32_1 = arith.constant 0 : i32
    return %c0_i32, %c0_i32_0 : i32, i32
  }
  func.func @transform_4(%arg0: i32) -> (i32, i32) {
    %c0_i32 = arith.constant 0 : i32
    %c0_i32_0 = arith.constant 0 : i32
    return %arg0, %c0_i32 : i32, i32
  }
  func.func @transform_5(%arg0: i32) -> (i32, i32, i32) {
    %c0_i32 = arith.constant 0 : i32
    %c0_i32_0 = arith.constant 0 : i32
    %c0_i32_1 = arith.constant 0 : i32
    return %arg0, %c0_i32, %c0_i32_0 : i32, i32, i32
  }
}

module attributes {stable_mosaic.version = 11 : i64} {
  func.func @bn_act_pool_kernel(%arg0: i32, %arg1: memref<32x4x128xbf16, #tpu.memory_space<vmem>>, %arg2: memref<1x128xf32, #tpu.memory_space<vmem>>, %arg3: memref<1x128xf32, #tpu.memory_space<vmem>>, %arg4: memref<32x128xf32, #tpu.memory_space<vmem>>) attributes {dimension_semantics = [#tpu.dimension_semantics<parallel>], iteration_bounds = array<i64: 1>, scalar_prefetch = 0 : i64, scratch_operands = 0 : i64, tpu.core_type = #tpu.core_type<tc>, window_params = [{transform_indices = @transform_0, window_bounds = array<i64: 32, 4, 128>}, {pipeline_mode = #tpu.pipeline_mode<synchronous>, transform_indices = @transform_1, window_bounds = array<i64: 1, 128>}, {pipeline_mode = #tpu.pipeline_mode<synchronous>, transform_indices = @transform_2, window_bounds = array<i64: 1, 128>}, {transform_indices = @transform_3, window_bounds = array<i64: 32, 128>}]} {
    %c0 = arith.constant 0 : index
    %c0_0 = arith.constant 0 : index
    %c0_1 = arith.constant 0 : index
    %0 = vector.load %arg1[%c0, %c0_0, %c0_1] : memref<32x4x128xbf16, #tpu.memory_space<vmem>>, vector<32x4x128xbf16>
    %1 = arith.extf %0 : vector<32x4x128xbf16> to vector<32x4x128xf32>
    %c0_2 = arith.constant 0 : index
    %c0_3 = arith.constant 0 : index
    %2 = vector.load %arg2[%c0_2, %c0_3] : memref<1x128xf32, #tpu.memory_space<vmem>>, vector<1x128xf32>
    %3 = vector.shape_cast %2 : vector<1x128xf32> to vector<1x1x128xf32>
    %4 = vector.broadcast %3 : vector<1x1x128xf32> to vector<32x4x128xf32>
    %5 = arith.mulf %1, %4 : vector<32x4x128xf32>
    %c0_4 = arith.constant 0 : index
    %c0_5 = arith.constant 0 : index
    %6 = vector.load %arg3[%c0_4, %c0_5] : memref<1x128xf32, #tpu.memory_space<vmem>>, vector<1x128xf32>
    %7 = vector.shape_cast %6 : vector<1x128xf32> to vector<1x1x128xf32>
    %8 = vector.broadcast %7 : vector<1x1x128xf32> to vector<32x4x128xf32>
    %9 = arith.addf %5, %8 : vector<32x4x128xf32>
    %cst = arith.constant 0.000000e+00 : f32
    %10 = vector.broadcast %cst : f32 to vector<32x4x128xf32>
    %11 = arith.maximumf %9, %10 : vector<32x4x128xf32>
    %cst_6 = arith.constant dense<0.000000e+00> : vector<32x128xf32>
    %12 = vector.multi_reduction <add>, %11, %cst_6 [1] : vector<32x4x128xf32> to vector<32x128xf32>
    %c0_7 = arith.constant 0 : index
    %c0_8 = arith.constant 0 : index
    %13 = vector.load %arg4[%c0_7, %c0_8] : memref<32x128xf32, #tpu.memory_space<vmem>>, vector<32x128xf32>
    tpu.vector_store %arg4[%c0_7, %c0_8], %12 {strides = array<i32>} : memref<32x128xf32, #tpu.memory_space<vmem>>, vector<32x128xf32>,
    return
  }
  func.func @transform_0(%arg0: i32) -> (i32, i32, i32) {
    %c0_i32 = arith.constant 0 : i32
    %c0_i32_0 = arith.constant 0 : i32
    %c0_i32_1 = arith.constant 0 : i32
    return %arg0, %c0_i32, %c0_i32_0 : i32, i32, i32
  }
  func.func @transform_1(%arg0: i32) -> (i32, i32) {
    %c0_i32 = arith.constant 0 : i32
    %c0_i32_0 = arith.constant 0 : i32
    %c0_i32_1 = arith.constant 0 : i32
    return %c0_i32, %c0_i32_0 : i32, i32
  }
  func.func @transform_2(%arg0: i32) -> (i32, i32) {
    %c0_i32 = arith.constant 0 : i32
    %c0_i32_0 = arith.constant 0 : i32
    %c0_i32_1 = arith.constant 0 : i32
    return %c0_i32, %c0_i32_0 : i32, i32
  }
  func.func @transform_3(%arg0: i32) -> (i32, i32) {
    %c0_i32 = arith.constant 0 : i32
    %c0_i32_0 = arith.constant 0 : i32
    return %arg0, %c0_i32 : i32, i32
  }
}

module attributes {stable_mosaic.version = 11 : i64} {
  func.func @_mlp_kernel(%arg0: i32, %arg1: memref<256x67xf32, #tpu.memory_space<vmem>>, %arg2: memref<67x128xbf16, #tpu.memory_space<vmem>>, %arg3: memref<256x128xbf16, #tpu.memory_space<vmem>>, %arg4: memref<1x2x128xf32, #tpu.memory_space<vmem>>) attributes {dimension_semantics = [#tpu.dimension_semantics<parallel>], iteration_bounds = array<i64: 1>, scalar_prefetch = 0 : i64, scratch_operands = 0 : i64, tpu.core_type = #tpu.core_type<tc>, window_params = [{transform_indices = @transform_0, window_bounds = array<i64: 256, 67>}, {pipeline_mode = #tpu.pipeline_mode<synchronous>, transform_indices = @transform_1, window_bounds = array<i64: 67, 128>}, {transform_indices = @transform_2, window_bounds = array<i64: 256, 128>}, {transform_indices = @transform_3, window_bounds = array<i64: 1, 2, 128>}]} {
    %c0 = arith.constant 0 : index
    %c0_0 = arith.constant 0 : index
    %0 = vector.load %arg1[%c0, %c0_0] : memref<256x67xf32, #tpu.memory_space<vmem>>, vector<256x67xf32>
    %1 = arith.truncf %0 : vector<256x67xf32> to vector<256x67xbf16>
    %c0_1 = arith.constant 0 : index
    %c0_2 = arith.constant 0 : index
    %2 = vector.load %arg2[%c0_1, %c0_2] : memref<67x128xbf16, #tpu.memory_space<vmem>>, vector<67x128xbf16>
    %cst = arith.constant dense<0.000000e+00> : vector<256x128xf32>
    %3 = tpu.matmul %1, %2, %cst {dimension_numbers = #tpu.dot_dimension_numbers<[1], [0], [0], [1], [0, 0, 1, 1], [], []>} : vector<256x67xbf16>, vector<67x128xbf16>, vector<256x128xf32> -> vector<256x128xf32>
    %4 = arith.truncf %3 : vector<256x128xf32> to vector<256x128xbf16>
    %c0_3 = arith.constant 0 : index
    %c0_4 = arith.constant 0 : index
    %5 = vector.load %arg3[%c0_3, %c0_4] : memref<256x128xbf16, #tpu.memory_space<vmem>>, vector<256x128xbf16>
    tpu.vector_store %arg3[%c0_3, %c0_4], %4 {strides = array<i32>} : memref<256x128xbf16, #tpu.memory_space<vmem>>, vector<256x128xbf16>,
    %cst_5 = arith.constant dense<0.000000e+00> : vector<128xf32>
    %6 = vector.multi_reduction <add>, %3, %cst_5 [0] : vector<256x128xf32> to vector<128xf32>
    %7 = vector.shape_cast %6 : vector<128xf32> to vector<1x128xf32>
    %8 = arith.mulf %3, %3 : vector<256x128xf32>
    %cst_6 = arith.constant dense<0.000000e+00> : vector<128xf32>
    %9 = vector.multi_reduction <add>, %8, %cst_6 [0] : vector<256x128xf32> to vector<128xf32>
    %10 = vector.shape_cast %9 : vector<128xf32> to vector<1x128xf32>
    %11 = tpu.concatenate %7, %10 in 0 : vector<1x128xf32>, vector<1x128xf32> -> vector<2x128xf32>
    %12 = vector.shape_cast %11 : vector<2x128xf32> to vector<1x2x128xf32>
    %c0_7 = arith.constant 0 : index
    %c0_8 = arith.constant 0 : index
    %c0_9 = arith.constant 0 : index
    %13 = vector.load %arg4[%c0_7, %c0_8, %c0_9] : memref<1x2x128xf32, #tpu.memory_space<vmem>>, vector<1x2x128xf32>
    tpu.vector_store %arg4[%c0_7, %c0_8, %c0_9], %12 {strides = array<i32>} : memref<1x2x128xf32, #tpu.memory_space<vmem>>, vector<1x2x128xf32>,
    return
  }
  func.func @transform_0(%arg0: i32) -> (i32, i32) {
    %c0_i32 = arith.constant 0 : i32
    %c0_i32_0 = arith.constant 0 : i32
    return %arg0, %c0_i32 : i32, i32
  }
  func.func @transform_1(%arg0: i32) -> (i32, i32) {
    %c0_i32 = arith.constant 0 : i32
    %c0_i32_0 = arith.constant 0 : i32
    %c0_i32_1 = arith.constant 0 : i32
    return %c0_i32, %c0_i32_0 : i32, i32
  }
  func.func @transform_2(%arg0: i32) -> (i32, i32) {
    %c0_i32 = arith.constant 0 : i32
    %c0_i32_0 = arith.constant 0 : i32
    return %arg0, %c0_i32 : i32, i32
  }
  func.func @transform_3(%arg0: i32) -> (i32, i32, i32) {
    %c0_i32 = arith.constant 0 : i32
    %c0_i32_0 = arith.constant 0 : i32
    %c0_i32_1 = arith.constant 0 : i32
    return %arg0, %c0_i32, %c0_i32_0 : i32, i32, i32
  }
}

module attributes {stable_mosaic.version = 11 : i64} {
  func.func @_mlp_kernel(%arg0: i32, %arg1: memref<256x128xbf16, #tpu.memory_space<vmem>>, %arg2: memref<1x128xf32, #tpu.memory_space<vmem>>, %arg3: memref<1x128xf32, #tpu.memory_space<vmem>>, %arg4: memref<128x128xbf16, #tpu.memory_space<vmem>>, %arg5: memref<256x128xbf16, #tpu.memory_space<vmem>>, %arg6: memref<1x2x128xf32, #tpu.memory_space<vmem>>) attributes {dimension_semantics = [#tpu.dimension_semantics<parallel>], iteration_bounds = array<i64: 1>, scalar_prefetch = 0 : i64, scratch_operands = 0 : i64, tpu.core_type = #tpu.core_type<tc>, window_params = [{transform_indices = @transform_0, window_bounds = array<i64: 256, 128>}, {pipeline_mode = #tpu.pipeline_mode<synchronous>, transform_indices = @transform_1, window_bounds = array<i64: 1, 128>}, {pipeline_mode = #tpu.pipeline_mode<synchronous>, transform_indices = @transform_2, window_bounds = array<i64: 1, 128>}, {pipeline_mode = #tpu.pipeline_mode<synchronous>, transform_indices = @transform_3, window_bounds = array<i64: 128, 128>}, {transform_indices = @transform_4, window_bounds = array<i64: 256, 128>}, {transform_indices = @transform_5, window_bounds = array<i64: 1, 2, 128>}]} {
    %c0 = arith.constant 0 : index
    %c0_0 = arith.constant 0 : index
    %0 = vector.load %arg1[%c0, %c0_0] : memref<256x128xbf16, #tpu.memory_space<vmem>>, vector<256x128xbf16>
    %1 = arith.extf %0 : vector<256x128xbf16> to vector<256x128xf32>
    %c0_1 = arith.constant 0 : index
    %c0_2 = arith.constant 0 : index
    %2 = vector.load %arg2[%c0_1, %c0_2] : memref<1x128xf32, #tpu.memory_space<vmem>>, vector<1x128xf32>
    %3 = vector.broadcast %2 : vector<1x128xf32> to vector<256x128xf32>
    %4 = arith.mulf %1, %3 : vector<256x128xf32>
    %c0_3 = arith.constant 0 : index
    %c0_4 = arith.constant 0 : index
    %5 = vector.load %arg3[%c0_3, %c0_4] : memref<1x128xf32, #tpu.memory_space<vmem>>, vector<1x128xf32>
    %6 = vector.broadcast %5 : vector<1x128xf32> to vector<256x128xf32>
    %7 = arith.addf %4, %6 : vector<256x128xf32>
    %cst = arith.constant 0.000000e+00 : f32
    %8 = vector.broadcast %cst : f32 to vector<256x128xf32>
    %9 = arith.maximumf %7, %8 : vector<256x128xf32>
    %10 = arith.truncf %9 : vector<256x128xf32> to vector<256x128xbf16>
    %c0_5 = arith.constant 0 : index
    %c0_6 = arith.constant 0 : index
    %11 = vector.load %arg4[%c0_5, %c0_6] : memref<128x128xbf16, #tpu.memory_space<vmem>>, vector<128x128xbf16>
    %cst_7 = arith.constant dense<0.000000e+00> : vector<256x128xf32>
    %12 = tpu.matmul %10, %11, %cst_7 {dimension_numbers = #tpu.dot_dimension_numbers<[1], [0], [0], [1], [0, 0, 1, 1], [], []>} : vector<256x128xbf16>, vector<128x128xbf16>, vector<256x128xf32> -> vector<256x128xf32>
    %13 = arith.truncf %12 : vector<256x128xf32> to vector<256x128xbf16>
    %c0_8 = arith.constant 0 : index
    %c0_9 = arith.constant 0 : index
    %14 = vector.load %arg5[%c0_8, %c0_9] : memref<256x128xbf16, #tpu.memory_space<vmem>>, vector<256x128xbf16>
    tpu.vector_store %arg5[%c0_8, %c0_9], %13 {strides = array<i32>} : memref<256x128xbf16, #tpu.memory_space<vmem>>, vector<256x128xbf16>,
    %cst_10 = arith.constant dense<0.000000e+00> : vector<128xf32>
    %15 = vector.multi_reduction <add>, %12, %cst_10 [0] : vector<256x128xf32> to vector<128xf32>
    %16 = vector.shape_cast %15 : vector<128xf32> to vector<1x128xf32>
    %17 = arith.mulf %12, %12 : vector<256x128xf32>
    %cst_11 = arith.constant dense<0.000000e+00> : vector<128xf32>
    %18 = vector.multi_reduction <add>, %17, %cst_11 [0] : vector<256x128xf32> to vector<128xf32>
    %19 = vector.shape_cast %18 : vector<128xf32> to vector<1x128xf32>
    %20 = tpu.concatenate %16, %19 in 0 : vector<1x128xf32>, vector<1x128xf32> -> vector<2x128xf32>
    %21 = vector.shape_cast %20 : vector<2x128xf32> to vector<1x2x128xf32>
    %c0_12 = arith.constant 0 : index
    %c0_13 = arith.constant 0 : index
    %c0_14 = arith.constant 0 : index
    %22 = vector.load %arg6[%c0_12, %c0_13, %c0_14] : memref<1x2x128xf32, #tpu.memory_space<vmem>>, vector<1x2x128xf32>
    tpu.vector_store %arg6[%c0_12, %c0_13, %c0_14], %21 {strides = array<i32>} : memref<1x2x128xf32, #tpu.memory_space<vmem>>, vector<1x2x128xf32>,
    return
  }
  func.func @transform_0(%arg0: i32) -> (i32, i32) {
    %c0_i32 = arith.constant 0 : i32
    %c0_i32_0 = arith.constant 0 : i32
    return %arg0, %c0_i32 : i32, i32
  }
  func.func @transform_1(%arg0: i32) -> (i32, i32) {
    %c0_i32 = arith.constant 0 : i32
    %c0_i32_0 = arith.constant 0 : i32
    %c0_i32_1 = arith.constant 0 : i32
    return %c0_i32, %c0_i32_0 : i32, i32
  }
  func.func @transform_2(%arg0: i32) -> (i32, i32) {
    %c0_i32 = arith.constant 0 : i32
    %c0_i32_0 = arith.constant 0 : i32
    %c0_i32_1 = arith.constant 0 : i32
    return %c0_i32, %c0_i32_0 : i32, i32
  }
  func.func @transform_3(%arg0: i32) -> (i32, i32) {
    %c0_i32 = arith.constant 0 : i32
    %c0_i32_0 = arith.constant 0 : i32
    %c0_i32_1 = arith.constant 0 : i32
    return %c0_i32, %c0_i32_0 : i32, i32
  }
  func.func @transform_4(%arg0: i32) -> (i32, i32) {
    %c0_i32 = arith.constant 0 : i32
    %c0_i32_0 = arith.constant 0 : i32
    return %arg0, %c0_i32 : i32, i32
  }
  func.func @transform_5(%arg0: i32) -> (i32, i32, i32) {
    %c0_i32 = arith.constant 0 : i32
    %c0_i32_0 = arith.constant 0 : i32
    %c0_i32_1 = arith.constant 0 : i32
    return %arg0, %c0_i32, %c0_i32_0 : i32, i32, i32
  }
}

module attributes {stable_mosaic.version = 11 : i64} {
  func.func @bn_act_pool_kernel(%arg0: i32, %arg1: memref<32x8x128xbf16, #tpu.memory_space<vmem>>, %arg2: memref<1x128xf32, #tpu.memory_space<vmem>>, %arg3: memref<1x128xf32, #tpu.memory_space<vmem>>, %arg4: memref<32x128xf32, #tpu.memory_space<vmem>>) attributes {dimension_semantics = [#tpu.dimension_semantics<parallel>], iteration_bounds = array<i64: 1>, scalar_prefetch = 0 : i64, scratch_operands = 0 : i64, tpu.core_type = #tpu.core_type<tc>, window_params = [{transform_indices = @transform_0, window_bounds = array<i64: 32, 8, 128>}, {pipeline_mode = #tpu.pipeline_mode<synchronous>, transform_indices = @transform_1, window_bounds = array<i64: 1, 128>}, {pipeline_mode = #tpu.pipeline_mode<synchronous>, transform_indices = @transform_2, window_bounds = array<i64: 1, 128>}, {transform_indices = @transform_3, window_bounds = array<i64: 32, 128>}]} {
    %c0 = arith.constant 0 : index
    %c0_0 = arith.constant 0 : index
    %c0_1 = arith.constant 0 : index
    %0 = vector.load %arg1[%c0, %c0_0, %c0_1] : memref<32x8x128xbf16, #tpu.memory_space<vmem>>, vector<32x8x128xbf16>
    %1 = arith.extf %0 : vector<32x8x128xbf16> to vector<32x8x128xf32>
    %c0_2 = arith.constant 0 : index
    %c0_3 = arith.constant 0 : index
    %2 = vector.load %arg2[%c0_2, %c0_3] : memref<1x128xf32, #tpu.memory_space<vmem>>, vector<1x128xf32>
    %3 = vector.shape_cast %2 : vector<1x128xf32> to vector<1x1x128xf32>
    %4 = vector.broadcast %3 : vector<1x1x128xf32> to vector<32x8x128xf32>
    %5 = arith.mulf %1, %4 : vector<32x8x128xf32>
    %c0_4 = arith.constant 0 : index
    %c0_5 = arith.constant 0 : index
    %6 = vector.load %arg3[%c0_4, %c0_5] : memref<1x128xf32, #tpu.memory_space<vmem>>, vector<1x128xf32>
    %7 = vector.shape_cast %6 : vector<1x128xf32> to vector<1x1x128xf32>
    %8 = vector.broadcast %7 : vector<1x1x128xf32> to vector<32x8x128xf32>
    %9 = arith.addf %5, %8 : vector<32x8x128xf32>
    %cst = arith.constant 0.000000e+00 : f32
    %10 = vector.broadcast %cst : f32 to vector<32x8x128xf32>
    %11 = arith.maximumf %9, %10 : vector<32x8x128xf32>
    %cst_6 = arith.constant dense<0xFF800000> : vector<32x128xf32>
    %12 = vector.multi_reduction <maximumf>, %11, %cst_6 [1] : vector<32x8x128xf32> to vector<32x128xf32>
    %c0_7 = arith.constant 0 : index
    %c0_8 = arith.constant 0 : index
    %13 = vector.load %arg4[%c0_7, %c0_8] : memref<32x128xf32, #tpu.memory_space<vmem>>, vector<32x128xf32>
    tpu.vector_store %arg4[%c0_7, %c0_8], %12 {strides = array<i32>} : memref<32x128xf32, #tpu.memory_space<vmem>>, vector<32x128xf32>,
    return
  }
  func.func @transform_0(%arg0: i32) -> (i32, i32, i32) {
    %c0_i32 = arith.constant 0 : i32
    %c0_i32_0 = arith.constant 0 : i32
    %c0_i32_1 = arith.constant 0 : i32
    return %arg0, %c0_i32, %c0_i32_0 : i32, i32, i32
  }
  func.func @transform_1(%arg0: i32) -> (i32, i32) {
    %c0_i32 = arith.constant 0 : i32
    %c0_i32_0 = arith.constant 0 : i32
    %c0_i32_1 = arith.constant 0 : i32
    return %c0_i32, %c0_i32_0 : i32, i32
  }
  func.func @transform_2(%arg0: i32) -> (i32, i32) {
    %c0_i32 = arith.constant 0 : i32
    %c0_i32_0 = arith.constant 0 : i32
    %c0_i32_1 = arith.constant 0 : i32
    return %c0_i32, %c0_i32_0 : i32, i32
  }
  func.func @transform_3(%arg0: i32) -> (i32, i32) {
    %c0_i32 = arith.constant 0 : i32
    %c0_i32_0 = arith.constant 0 : i32
    return %arg0, %c0_i32 : i32, i32
  }
}

module attributes {stable_mosaic.version = 11 : i64} {
  func.func @_mlp_kernel(%arg0: i32, %arg1: memref<32x68xf32, #tpu.memory_space<vmem>>, %arg2: memref<68x128xbf16, #tpu.memory_space<vmem>>, %arg3: memref<32x128xbf16, #tpu.memory_space<vmem>>, %arg4: memref<1x2x128xf32, #tpu.memory_space<vmem>>) attributes {dimension_semantics = [#tpu.dimension_semantics<parallel>], iteration_bounds = array<i64: 1>, scalar_prefetch = 0 : i64, scratch_operands = 0 : i64, tpu.core_type = #tpu.core_type<tc>, window_params = [{transform_indices = @transform_0, window_bounds = array<i64: 32, 68>}, {pipeline_mode = #tpu.pipeline_mode<synchronous>, transform_indices = @transform_1, window_bounds = array<i64: 68, 128>}, {transform_indices = @transform_2, window_bounds = array<i64: 32, 128>}, {transform_indices = @transform_3, window_bounds = array<i64: 1, 2, 128>}]} {
    %c0 = arith.constant 0 : index
    %c0_0 = arith.constant 0 : index
    %0 = vector.load %arg1[%c0, %c0_0] : memref<32x68xf32, #tpu.memory_space<vmem>>, vector<32x68xf32>
    %1 = arith.truncf %0 : vector<32x68xf32> to vector<32x68xbf16>
    %c0_1 = arith.constant 0 : index
    %c0_2 = arith.constant 0 : index
    %2 = vector.load %arg2[%c0_1, %c0_2] : memref<68x128xbf16, #tpu.memory_space<vmem>>, vector<68x128xbf16>
    %cst = arith.constant dense<0.000000e+00> : vector<32x128xf32>
    %3 = tpu.matmul %1, %2, %cst {dimension_numbers = #tpu.dot_dimension_numbers<[1], [0], [0], [1], [0, 0, 1, 1], [], []>} : vector<32x68xbf16>, vector<68x128xbf16>, vector<32x128xf32> -> vector<32x128xf32>
    %4 = arith.truncf %3 : vector<32x128xf32> to vector<32x128xbf16>
    %c0_3 = arith.constant 0 : index
    %c0_4 = arith.constant 0 : index
    %5 = vector.load %arg3[%c0_3, %c0_4] : memref<32x128xbf16, #tpu.memory_space<vmem>>, vector<32x128xbf16>
    tpu.vector_store %arg3[%c0_3, %c0_4], %4 {strides = array<i32>} : memref<32x128xbf16, #tpu.memory_space<vmem>>, vector<32x128xbf16>,
    %cst_5 = arith.constant dense<0.000000e+00> : vector<128xf32>
    %6 = vector.multi_reduction <add>, %3, %cst_5 [0] : vector<32x128xf32> to vector<128xf32>
    %7 = vector.shape_cast %6 : vector<128xf32> to vector<1x128xf32>
    %8 = arith.mulf %3, %3 : vector<32x128xf32>
    %cst_6 = arith.constant dense<0.000000e+00> : vector<128xf32>
    %9 = vector.multi_reduction <add>, %8, %cst_6 [0] : vector<32x128xf32> to vector<128xf32>
    %10 = vector.shape_cast %9 : vector<128xf32> to vector<1x128xf32>
    %11 = tpu.concatenate %7, %10 in 0 : vector<1x128xf32>, vector<1x128xf32> -> vector<2x128xf32>
    %12 = vector.shape_cast %11 : vector<2x128xf32> to vector<1x2x128xf32>
    %c0_7 = arith.constant 0 : index
    %c0_8 = arith.constant 0 : index
    %c0_9 = arith.constant 0 : index
    %13 = vector.load %arg4[%c0_7, %c0_8, %c0_9] : memref<1x2x128xf32, #tpu.memory_space<vmem>>, vector<1x2x128xf32>
    tpu.vector_store %arg4[%c0_7, %c0_8, %c0_9], %12 {strides = array<i32>} : memref<1x2x128xf32, #tpu.memory_space<vmem>>, vector<1x2x128xf32>,
    return
  }
  func.func @transform_0(%arg0: i32) -> (i32, i32) {
    %c0_i32 = arith.constant 0 : i32
    %c0_i32_0 = arith.constant 0 : i32
    return %arg0, %c0_i32 : i32, i32
  }
  func.func @transform_1(%arg0: i32) -> (i32, i32) {
    %c0_i32 = arith.constant 0 : i32
    %c0_i32_0 = arith.constant 0 : i32
    %c0_i32_1 = arith.constant 0 : i32
    return %c0_i32, %c0_i32_0 : i32, i32
  }
  func.func @transform_2(%arg0: i32) -> (i32, i32) {
    %c0_i32 = arith.constant 0 : i32
    %c0_i32_0 = arith.constant 0 : i32
    return %arg0, %c0_i32 : i32, i32
  }
  func.func @transform_3(%arg0: i32) -> (i32, i32, i32) {
    %c0_i32 = arith.constant 0 : i32
    %c0_i32_0 = arith.constant 0 : i32
    %c0_i32_1 = arith.constant 0 : i32
    return %arg0, %c0_i32, %c0_i32_0 : i32, i32, i32
  }
}

module attributes {stable_mosaic.version = 11 : i64} {
  func.func @_mlp_kernel(%arg0: i32, %arg1: memref<32x128xbf16, #tpu.memory_space<vmem>>, %arg2: memref<1x128xf32, #tpu.memory_space<vmem>>, %arg3: memref<1x128xf32, #tpu.memory_space<vmem>>, %arg4: memref<128x128xbf16, #tpu.memory_space<vmem>>, %arg5: memref<32x128xbf16, #tpu.memory_space<vmem>>, %arg6: memref<1x2x128xf32, #tpu.memory_space<vmem>>) attributes {dimension_semantics = [#tpu.dimension_semantics<parallel>], iteration_bounds = array<i64: 1>, scalar_prefetch = 0 : i64, scratch_operands = 0 : i64, tpu.core_type = #tpu.core_type<tc>, window_params = [{transform_indices = @transform_0, window_bounds = array<i64: 32, 128>}, {pipeline_mode = #tpu.pipeline_mode<synchronous>, transform_indices = @transform_1, window_bounds = array<i64: 1, 128>}, {pipeline_mode = #tpu.pipeline_mode<synchronous>, transform_indices = @transform_2, window_bounds = array<i64: 1, 128>}, {pipeline_mode = #tpu.pipeline_mode<synchronous>, transform_indices = @transform_3, window_bounds = array<i64: 128, 128>}, {transform_indices = @transform_4, window_bounds = array<i64: 32, 128>}, {transform_indices = @transform_5, window_bounds = array<i64: 1, 2, 128>}]} {
    %c0 = arith.constant 0 : index
    %c0_0 = arith.constant 0 : index
    %0 = vector.load %arg1[%c0, %c0_0] : memref<32x128xbf16, #tpu.memory_space<vmem>>, vector<32x128xbf16>
    %1 = arith.extf %0 : vector<32x128xbf16> to vector<32x128xf32>
    %c0_1 = arith.constant 0 : index
    %c0_2 = arith.constant 0 : index
    %2 = vector.load %arg2[%c0_1, %c0_2] : memref<1x128xf32, #tpu.memory_space<vmem>>, vector<1x128xf32>
    %3 = vector.broadcast %2 : vector<1x128xf32> to vector<32x128xf32>
    %4 = arith.mulf %1, %3 : vector<32x128xf32>
    %c0_3 = arith.constant 0 : index
    %c0_4 = arith.constant 0 : index
    %5 = vector.load %arg3[%c0_3, %c0_4] : memref<1x128xf32, #tpu.memory_space<vmem>>, vector<1x128xf32>
    %6 = vector.broadcast %5 : vector<1x128xf32> to vector<32x128xf32>
    %7 = arith.addf %4, %6 : vector<32x128xf32>
    %cst = arith.constant 0.000000e+00 : f32
    %8 = vector.broadcast %cst : f32 to vector<32x128xf32>
    %9 = arith.maximumf %7, %8 : vector<32x128xf32>
    %10 = arith.truncf %9 : vector<32x128xf32> to vector<32x128xbf16>
    %c0_5 = arith.constant 0 : index
    %c0_6 = arith.constant 0 : index
    %11 = vector.load %arg4[%c0_5, %c0_6] : memref<128x128xbf16, #tpu.memory_space<vmem>>, vector<128x128xbf16>
    %cst_7 = arith.constant dense<0.000000e+00> : vector<32x128xf32>
    %12 = tpu.matmul %10, %11, %cst_7 {dimension_numbers = #tpu.dot_dimension_numbers<[1], [0], [0], [1], [0, 0, 1, 1], [], []>} : vector<32x128xbf16>, vector<128x128xbf16>, vector<32x128xf32> -> vector<32x128xf32>
    %13 = arith.truncf %12 : vector<32x128xf32> to vector<32x128xbf16>
    %c0_8 = arith.constant 0 : index
    %c0_9 = arith.constant 0 : index
    %14 = vector.load %arg5[%c0_8, %c0_9] : memref<32x128xbf16, #tpu.memory_space<vmem>>, vector<32x128xbf16>
    tpu.vector_store %arg5[%c0_8, %c0_9], %13 {strides = array<i32>} : memref<32x128xbf16, #tpu.memory_space<vmem>>, vector<32x128xbf16>,
    %cst_10 = arith.constant dense<0.000000e+00> : vector<128xf32>
    %15 = vector.multi_reduction <add>, %12, %cst_10 [0] : vector<32x128xf32> to vector<128xf32>
    %16 = vector.shape_cast %15 : vector<128xf32> to vector<1x128xf32>
    %17 = arith.mulf %12, %12 : vector<32x128xf32>
    %cst_11 = arith.constant dense<0.000000e+00> : vector<128xf32>
    %18 = vector.multi_reduction <add>, %17, %cst_11 [0] : vector<32x128xf32> to vector<128xf32>
    %19 = vector.shape_cast %18 : vector<128xf32> to vector<1x128xf32>
    %20 = tpu.concatenate %16, %19 in 0 : vector<1x128xf32>, vector<1x128xf32> -> vector<2x128xf32>
    %21 = vector.shape_cast %20 : vector<2x128xf32> to vector<1x2x128xf32>
    %c0_12 = arith.constant 0 : index
    %c0_13 = arith.constant 0 : index
    %c0_14 = arith.constant 0 : index
    %22 = vector.load %arg6[%c0_12, %c0_13, %c0_14] : memref<1x2x128xf32, #tpu.memory_space<vmem>>, vector<1x2x128xf32>
    tpu.vector_store %arg6[%c0_12, %c0_13, %c0_14], %21 {strides = array<i32>} : memref<1x2x128xf32, #tpu.memory_space<vmem>>, vector<1x2x128xf32>,
    return
  }
  func.func @transform_0(%arg0: i32) -> (i32, i32) {
    %c0_i32 = arith.constant 0 : i32
    %c0_i32_0 = arith.constant 0 : i32
    return %arg0, %c0_i32 : i32, i32
  }
  func.func @transform_1(%arg0: i32) -> (i32, i32) {
    %c0_i32 = arith.constant 0 : i32
    %c0_i32_0 = arith.constant 0 : i32
    %c0_i32_1 = arith.constant 0 : i32
    return %c0_i32, %c0_i32_0 : i32, i32
  }
  func.func @transform_2(%arg0: i32) -> (i32, i32) {
    %c0_i32 = arith.constant 0 : i32
    %c0_i32_0 = arith.constant 0 : i32
    %c0_i32_1 = arith.constant 0 : i32
    return %c0_i32, %c0_i32_0 : i32, i32
  }
  func.func @transform_3(%arg0: i32) -> (i32, i32) {
    %c0_i32 = arith.constant 0 : i32
    %c0_i32_0 = arith.constant 0 : i32
    %c0_i32_1 = arith.constant 0 : i32
    return %c0_i32, %c0_i32_0 : i32, i32
  }
  func.func @transform_4(%arg0: i32) -> (i32, i32) {
    %c0_i32 = arith.constant 0 : i32
    %c0_i32_0 = arith.constant 0 : i32
    return %arg0, %c0_i32 : i32, i32
  }
  func.func @transform_5(%arg0: i32) -> (i32, i32, i32) {
    %c0_i32 = arith.constant 0 : i32
    %c0_i32_0 = arith.constant 0 : i32
    %c0_i32_1 = arith.constant 0 : i32
    return %arg0, %c0_i32, %c0_i32_0 : i32, i32, i32
  }
}

module attributes {stable_mosaic.version = 11 : i64} {
  func.func @bn_act_2d_kernel(%arg0: i32, %arg1: memref<32x128xbf16, #tpu.memory_space<vmem>>, %arg2: memref<1x128xf32, #tpu.memory_space<vmem>>, %arg3: memref<1x128xf32, #tpu.memory_space<vmem>>, %arg4: memref<32x128xf32, #tpu.memory_space<vmem>>) attributes {dimension_semantics = [#tpu.dimension_semantics<parallel>], iteration_bounds = array<i64: 1>, scalar_prefetch = 0 : i64, scratch_operands = 0 : i64, tpu.core_type = #tpu.core_type<tc>, window_params = [{transform_indices = @transform_0, window_bounds = array<i64: 32, 128>}, {pipeline_mode = #tpu.pipeline_mode<synchronous>, transform_indices = @transform_1, window_bounds = array<i64: 1, 128>}, {pipeline_mode = #tpu.pipeline_mode<synchronous>, transform_indices = @transform_2, window_bounds = array<i64: 1, 128>}, {transform_indices = @transform_3, window_bounds = array<i64: 32, 128>}]} {
    %c0 = arith.constant 0 : index
    %c0_0 = arith.constant 0 : index
    %0 = vector.load %arg1[%c0, %c0_0] : memref<32x128xbf16, #tpu.memory_space<vmem>>, vector<32x128xbf16>
    %1 = arith.extf %0 : vector<32x128xbf16> to vector<32x128xf32>
    %c0_1 = arith.constant 0 : index
    %c0_2 = arith.constant 0 : index
    %2 = vector.load %arg2[%c0_1, %c0_2] : memref<1x128xf32, #tpu.memory_space<vmem>>, vector<1x128xf32>
    %3 = vector.broadcast %2 : vector<1x128xf32> to vector<32x128xf32>
    %4 = arith.mulf %1, %3 : vector<32x128xf32>
    %c0_3 = arith.constant 0 : index
    %c0_4 = arith.constant 0 : index
    %5 = vector.load %arg3[%c0_3, %c0_4] : memref<1x128xf32, #tpu.memory_space<vmem>>, vector<1x128xf32>
    %6 = vector.broadcast %5 : vector<1x128xf32> to vector<32x128xf32>
    %7 = arith.addf %4, %6 : vector<32x128xf32>
    %8 = arith.negf %7 : vector<32x128xf32>
    %9 = math.exp %8 : vector<32x128xf32>
    %cst = arith.constant 1.000000e+00 : f32
    %10 = vector.broadcast %cst : f32 to vector<32x128xf32>
    %11 = arith.addf %10, %9 : vector<32x128xf32>
    %12 = arith.divf %10, %11 : vector<32x128xf32>
    %13 = arith.mulf %7, %12 : vector<32x128xf32>
    %c0_5 = arith.constant 0 : index
    %c0_6 = arith.constant 0 : index
    %14 = vector.load %arg4[%c0_5, %c0_6] : memref<32x128xf32, #tpu.memory_space<vmem>>, vector<32x128xf32>
    tpu.vector_store %arg4[%c0_5, %c0_6], %13 {strides = array<i32>} : memref<32x128xf32, #tpu.memory_space<vmem>>, vector<32x128xf32>,
    return
  }
  func.func @transform_0(%arg0: i32) -> (i32, i32) {
    %c0_i32 = arith.constant 0 : i32
    %c0_i32_0 = arith.constant 0 : i32
    return %arg0, %c0_i32 : i32, i32
  }
  func.func @transform_1(%arg0: i32) -> (i32, i32) {
    %c0_i32 = arith.constant 0 : i32
    %c0_i32_0 = arith.constant 0 : i32
    %c0_i32_1 = arith.constant 0 : i32
    return %c0_i32, %c0_i32_0 : i32, i32
  }
  func.func @transform_2(%arg0: i32) -> (i32, i32) {
    %c0_i32 = arith.constant 0 : i32
    %c0_i32_0 = arith.constant 0 : i32
    %c0_i32_1 = arith.constant 0 : i32
    return %c0_i32, %c0_i32_0 : i32, i32
  }
  func.func @transform_3(%arg0: i32) -> (i32, i32) {
    %c0_i32 = arith.constant 0 : i32
    %c0_i32_0 = arith.constant 0 : i32
    return %arg0, %c0_i32 : i32, i32
  }
}

</mosaic_0001>

<llo_original>
// kernel: refine_block_forward.13
$region0: #{refine_block_forward.13}
  #allocation0 [shape = 'u32[]', space=smem, size = 0x4, offset = 0x4, fixed_abs, tag = 'smem constant byte address 0x4 - core index']
  #allocation1 [shape = 'u32[144,128]{1,0:T(1,128)}', space=vmem, size = 0x12000, scoped, tag = 'internal scratch']
  %s0 = inlined_call_operand.vmem [shape: f32[192,11], index: 0, kind: input, shape index: {}]
  %s1 = inlined_call_operand.vmem [shape: bf16[11,128], index: 1, kind: input, shape index: {}]
  %s2 = inlined_call_operand.vmem [shape: bf16[192,128], index: 2, kind: output, shape index: {0}]
  %s3 = inlined_call_operand.vmem [shape: f32[1,2,128], index: 3, kind: output, shape index: {1}]
  %4 = xla_tuple %s2, %s3
  %s5 = sld [smem:[#allocation0]]
  $region26: #{refine_block_forward.13} parent=0
    _
  %s7 = ssub.s32 1, %s5
  %s8 = scalar_select 0, %s7, %s5
  // Predicated region
  $region2: #{refine_block_forward.13} parent=0 // pred_check
    _
  $region3: #{refine_block_forward.13} parent=0 // pred_check_branch
    %10 = sbr.rel (0) target = $region5
  $region4: #{refine_block_forward.13} parent=0 // pred_region
    _
  $region5: #{refine_block_forward.13} parent=0 // pred_fallthru
    _
  // Predicated region
  $region6: #{refine_block_forward.13} parent=0 // pred_check
    _
  $region7: #{refine_block_forward.13} parent=0 // pred_check_branch
    %12 = sbr.rel (0) target = $region9
  $region8: #{refine_block_forward.13} parent=0 // pred_region
    _
  $region9: #{refine_block_forward.13} parent=0 // pred_fallthru
    _
  %v14 = vld [vmem:[%s0] sm:$0xff]
  %v15 = vld [vmem:[%s0 + $0x8] sm:$0xff]
  %v16 = vld [vmem:[%s0 + $0x10] sm:$0xff]
  %v17 = vld [vmem:[%s0 + $0x18] sm:$0xff]
  %v18 = vld [vmem:[%s0 + $0x20] sm:$0xff]
  %v19 = vld [vmem:[%s0 + $0x28] sm:$0xff]
  %v20 = vld [vmem:[%s0 + $0x30] sm:$0xff]
  %v21 = vld [vmem:[%s0 + $0x38] sm:$0xff]
  %v22 = vld [vmem:[%s0 + $0x40] sm:$0xff]
  %v23 = vld [vmem:[%s0 + $0x48] sm:$0xff]
  %v24 = vld [vmem:[%s0 + $0x50] sm:$0xff]
  %v25 = vld [vmem:[%s0 + $0x58] sm:$0xff]
  %v26 = vld [vmem:[%s0 + $0x60] sm:$0xff]
  %v27 = vld [vmem:[%s0 + $0x68] sm:$0xff]
  %v28 = vld [vmem:[%s0 + $0x70] sm:$0xff]
  %v29 = vld [vmem:[%s0 + $0x78] sm:$0xff]
  %v30 = vld [vmem:[%s0 + $0x80] sm:$0xff]
  %v31 = vld [vmem:[%s0 + $0x88] sm:$0xff]
  %v32 = vld [vmem:[%s0 + $0x90] sm:$0xff]
  %v33 = vld [vmem:[%s0 + $0x98] sm:$0xff]
  %v34 = vld [vmem:[%s0 + $0xa0] sm:$0xff]
  %v35 = vld [vmem:[%s0 + $0xa8] sm:$0xff]
  %v36 = vld [vmem:[%s0 + $0xb0] sm:$0xff]
  %v37 = vld [vmem:[%s0 + $0xb8] sm:$0xff]
  %v38 = vpack.c.bf16 %v15, %v14
  %v39 = vpack.c.bf16 %v17, %v16
  %v40 = vpack.c.bf16 %v19, %v18
  %v41 = vpack.c.bf16 %v21, %v20
  %v42 = vpack.c.bf16 %v23, %v22
  %v43 = vpack.c.bf16 %v25, %v24
  %v44 = vpack.c.bf16 %v27, %v26
  %v45 = vpack.c.bf16 %v29, %v28
  %v46 = vpack.c.bf16 %v31, %v30
  %v47 = vpack.c.bf16 %v33, %v32
  %v48 = vpack.c.bf16 %v35, %v34
  %v49 = vpack.c.bf16 %v37, %v36
  %v50 = vld [vmem:[%s1] sm:$0xf]
  %v51 = vld [vmem:[%s1 + $0x4] sm:$0x3]
  %v54 = vunpack.c.l.b16 %v50
  %v55 = vunpack.c.l.b16 %v51
  %v56 = vpack.c.b16 %v55, %v54
  %vm57 = vcmask 89088
  %v59 = vsel %vm57, %v38, 0
  %v62 = vsel %vm57, %v39, 0
  %v65 = vsel %vm57, %v40, 0
  %v68 = vsel %vm57, %v41, 0
  %v71 = vsel %vm57, %v42, 0
  %v74 = vsel %vm57, %v43, 0
  %v77 = vsel %vm57, %v44, 0
  %v80 = vsel %vm57, %v45, 0
  %v83 = vsel %vm57, %v46, 0
  %v86 = vsel %vm57, %v47, 0
  %v89 = vsel %vm57, %v48, 0
  %v92 = vsel %vm57, %v49, 0
  %vm94 = vcmask 1044480
  %vm95 = vcmask 1045504
  %v96 = vsel %vm94, 4294967295, 65535
  %v97 = vsel %vm95, %v96, 0
  %v99 = vand.u32 %v56, %v97
  %101 = vmatprep.subr.bf16.mxu0 0
  %102 = vmatpush1.bf16.msra.mxu0 %v99
  %103 = vmatprep.subr.bf16.mxu0 0
  %104 = vmatpush1.bf16.msra.mxu0 0
  %105 = vmatprep.subr.bf16.mxu0 0
  %106 = vmatpush1.bf16.msra.mxu0 0
  %107 = vmatprep.subr.bf16.mxu0 0
  %108 = vmatpush1.bf16.msra.mxu0 0
  %109 = vmatprep.subr.bf16.mxu0 0
  %110 = vmatpush1.bf16.msra.mxu0 0
  %111 = vmatprep.subr.bf16.mxu0 0
  %112 = vmatpush1.bf16.msra.mxu0 0
  %113 = vmatprep.subr.bf16.mxu0 0
  %114 = vmatpush1.bf16.msra.mxu0 0
  %115 = vmatprep.subr.bf16.mxu0 0
  %116 = vmatpush1.bf16.msra.mxu0 0
  %117 = vmatprep.subr.bf16.mxu0 0
  %118 = vmatpush1.bf16.msra.mxu0 0
  %119 = vmatprep.subr.bf16.mxu0 0
  %120 = vmatpush1.bf16.msra.mxu0 0
  %121 = vmatprep.subr.bf16.mxu0 0
  %122 = vmatpush1.bf16.msra.mxu0 0
  %123 = vmatprep.subr.bf16.mxu0 0
  %124 = vmatpush1.bf16.msra.mxu0 0
  %125 = vmatprep.subr.bf16.mxu0 0
  %126 = vmatpush1.bf16.msra.mxu0 0
  %127 = vmatprep.subr.bf16.mxu0 0
  %128 = vmatpush1.bf16.msra.mxu0 0
  %129 = vmatprep.subr.bf16.mxu0 0
  %130 = vmatpush1.bf16.msra.mxu0 0
  %131 = vmatprep.subr.bf16.mxu0 0
  %132 = vmatpush1.bf16.msra.mxu0 0
  %133 = vmatprep.mubr.bf16.mxu0 0
  %134 = vmatmul.mubr.bf16.gmra.mrb[0].mxu0 %v59
  %v135 = vpop.f32.mrb[0].mxu0
  %v136 = vadd.f32 0.0, %v135
  %v137 = vpop.f32.mrb[0].mxu0
  %v138 = vpop.f32.mrb[0].mxu0
  %v139 = vadd.f32 0.0, %v138
  %v140 = vpop.f32.mrb[0].mxu0
  %141 = vmatprep.mubr.bf16.mxu0 0
  %142 = vmatmul.mubr.bf16.gmra.mrb[0].mxu0 %v62
  %v143 = vpop.f32.mrb[0].mxu0
  %v144 = vadd.f32 0.0, %v143
  %v145 = vpop.f32.mrb[0].mxu0
  %v146 = vpop.f32.mrb[0].mxu0
  %v147 = vadd.f32 0.0, %v146
  %v148 = vpop.f32.mrb[0].mxu0
  %149 = vmatprep.mubr.bf16.mxu0 0
  %150 = vmatmul.mubr.bf16.gmra.mrb[0].mxu0 %v65
  %v151 = vpop.f32.mrb[0].mxu0
  %v152 = vadd.f32 0.0, %v151
  %v153 = vpop.f32.mrb[0].mxu0
  %v154 = vpop.f32.mrb[0].mxu0
  %v155 = vadd.f32 0.0, %v154
  %v156 = vpop.f32.mrb[0].mxu0
  %157 = vmatprep.mubr.bf16.mxu0 0
  %158 = vmatmul.mubr.bf16.gmra.mrb[0].mxu0 %v68
  %v159 = vpop.f32.mrb[0].mxu0
  %v160 = vadd.f32 0.0, %v159
  %v161 = vpop.f32.mrb[0].mxu0
  %v162 = vpop.f32.mrb[0].mxu0
  %v163 = vadd.f32 0.0, %v162
  %v164 = vpop.f32.mrb[0].mxu0
  %165 = vmatprep.mubr.bf16.mxu0 0
  %166 = vmatmul.mubr.bf16.gmra.mrb[0].mxu0 %v71
  %v167 = vpop.f32.mrb[0].mxu0
  %v168 = vadd.f32 0.0, %v167
  %v169 = vpop.f32.mrb[0].mxu0
  %v170 = vpop.f32.mrb[0].mxu0
  %v171 = vadd.f32 0.0, %v170
  %v172 = vpop.f32.mrb[0].mxu0
  %173 = vmatprep.mubr.bf16.mxu0 0
  %174 = vmatmul.mubr.bf16.gmra.mrb[0].mxu0 %v74
  %v175 = vpop.f32.mrb[0].mxu0
  %v176 = vadd.f32 0.0, %v175
  %v177 = vpop.f32.mrb[0].mxu0
  %v178 = vpop.f32.mrb[0].mxu0
  %v179 = vadd.f32 0.0, %v178
  %v180 = vpop.f32.mrb[0].mxu0
  %181 = vmatprep.mubr.bf16.mxu0 0
  %182 = vmatmul.mubr.bf16.gmra.mrb[0].mxu0 %v77
  %v183 = vpop.f32.mrb[0].mxu0
  %v184 = vadd.f32 0.0, %v183
  %v185 = vpop.f32.mrb[0].mxu0
  %v186 = vpop.f32.mrb[0].mxu0
  %v187 = vadd.f32 0.0, %v186
  %v188 = vpop.f32.mrb[0].mxu0
  %189 = vmatprep.mubr.bf16.mxu0 0
  %190 = vmatmul.mubr.bf16.gmra.mrb[0].mxu0 %v80
  %v191 = vpop.f32.mrb[0].mxu0
  %v192 = vadd.f32 0.0, %v191
  %v193 = vpop.f32.mrb[0].mxu0
  %v194 = vpop.f32.mrb[0].mxu0
  %v195 = vadd.f32 0.0, %v194
  %v196 = vpop.f32.mrb[0].mxu0
  %197 = vmatprep.mubr.bf16.mxu0 0
  %198 = vmatmul.mubr.bf16.gmra.mrb[0].mxu0 %v83
  %v199 = vpop.f32.mrb[0].mxu0
  %v200 = vadd.f32 0.0, %v199
  %v201 = vpop.f32.mrb[0].mxu0
  %v202 = vpop.f32.mrb[0].mxu0
  %v203 = vadd.f32 0.0, %v202
  %v204 = vpop.f32.mrb[0].mxu0
  %205 = vmatprep.mubr.bf16.mxu0 0
  %206 = vmatmul.mubr.bf16.gmra.mrb[0].mxu0 %v86
  %v207 = vpop.f32.mrb[0].mxu0
  %v208 = vadd.f32 0.0, %v207
  %v209 = vpop.f32.mrb[0].mxu0
  %v210 = vpop.f32.mrb[0].mxu0
  %v211 = vadd.f32 0.0, %v210
  %v212 = vpop.f32.mrb[0].mxu0
  %213 = vmatprep.mubr.bf16.mxu0 0
  %214 = vmatmul.mubr.bf16.gmra.mrb[0].mxu0 %v89
  %v215 = vpop.f32.mrb[0].mxu0
  %v216 = vadd.f32 0.0, %v215
  %v217 = vpop.f32.mrb[0].mxu0
  %v218 = vpop.f32.mrb[0].mxu0
  %v219 = vadd.f32 0.0, %v218
  %v220 = vpop.f32.mrb[0].mxu0
  %221 = vmatprep.mubr.bf16.mxu0 0
  %222 = vmatmul.mubr.bf16.gmra.mrb[0].mxu0 %v92
  %v223 = vpop.f32.mrb[0].mxu0
  %v224 = vadd.f32 0.0, %v223
  %v225 = vpop.f32.mrb[0].mxu0
  %v226 = vpop.f32.mrb[0].mxu0
  %v227 = vadd.f32 0.0, %v226
  %v228 = vpop.f32.mrb[0].mxu0
  %229 = vdwg.mxu0
  %v230 = vpack.c.bf16 %v139, %v136
  %v231 = vpack.c.bf16 %v147, %v144
  %v232 = vpack.c.bf16 %v155, %v152
  %v233 = vpack.c.bf16 %v163, %v160
  %v234 = vpack.c.bf16 %v171, %v168
  %v235 = vpack.c.bf16 %v179, %v176
  %v236 = vpack.c.bf16 %v187, %v184
  %v237 = vpack.c.bf16 %v195, %v192
  %v238 = vpack.c.bf16 %v203, %v200
  %v239 = vpack.c.bf16 %v211, %v208
  %v240 = vpack.c.bf16 %v219, %v216
  %v241 = vpack.c.bf16 %v227, %v224
  %v254 = vunpack.c.l.b16 %v230
  %v255 = vunpack.c.h.b16 %v230
  %v256 = vunpack.c.l.b16 %v231
  %v257 = vunpack.c.h.b16 %v231
  %v258 = vunpack.c.l.b16 %v232
  %v259 = vunpack.c.h.b16 %v232
  %v260 = vunpack.c.l.b16 %v233
  %v261 = vunpack.c.h.b16 %v233
  %v262 = vunpack.c.l.b16 %v234
  %v263 = vunpack.c.h.b16 %v234
  %v264 = vunpack.c.l.b16 %v235
  %v265 = vunpack.c.h.b16 %v235
  %v266 = vunpack.c.l.b16 %v236
  %v267 = vunpack.c.h.b16 %v236
  %v268 = vunpack.c.l.b16 %v237
  %v269 = vunpack.c.h.b16 %v237
  %v270 = vunpack.c.l.b16 %v238
  %v271 = vunpack.c.h.b16 %v238
  %v272 = vunpack.c.l.b16 %v239
  %v273 = vunpack.c.h.b16 %v239
  %v274 = vunpack.c.l.b16 %v240
  %v275 = vunpack.c.h.b16 %v240
  %v276 = vunpack.c.l.b16 %v241
  %v277 = vunpack.c.h.b16 %v241
  %v278 = vpack.c.b16 %v254, %v254
  %v279 = vpack.c.b16 %v255, %v255
  %v280 = vpack.c.b16 %v256, %v256
  %v281 = vpack.c.b16 %v257, %v257
  %v282 = vpack.c.b16 %v258, %v258
  %v283 = vpack.c.b16 %v259, %v259
  %v284 = vpack.c.b16 %v260, %v260
  %v285 = vpack.c.b16 %v261, %v261
  %v286 = vpack.c.b16 %v262, %v262
  %v287 = vpack.c.b16 %v263, %v263
  %v288 = vpack.c.b16 %v264, %v264
  %v289 = vpack.c.b16 %v265, %v265
  %v290 = vpack.c.b16 %v266, %v266
  %v291 = vpack.c.b16 %v267, %v267
  %v292 = vpack.c.b16 %v268, %v268
  %v293 = vpack.c.b16 %v269, %v269
  %v294 = vpack.c.b16 %v270, %v270
  %v295 = vpack.c.b16 %v271, %v271
  %v296 = vpack.c.b16 %v272, %v272
  %v297 = vpack.c.b16 %v273, %v273
  %v298 = vpack.c.b16 %v274, %v274
  %v299 = vpack.c.b16 %v275, %v275
  %v300 = vpack.c.b16 %v276, %v276
  %v301 = vpack.c.b16 %v277, %v277
  %326 = vst [vmem:[%s2] sm:$0xf] %v278
  %327 = vst [vmem:[%s2 + $0x4] sm:$0xf] %v279
  %328 = vst [vmem:[%s2 + $0x8] sm:$0xf] %v280
  %329 = vst [vmem:[%s2 + $0xc] sm:$0xf] %v281
  %330 = vst [vmem:[%s2 + $0x10] sm:$0xf] %v282
  %331 = vst [vmem:[%s2 + $0x14] sm:$0xf] %v283
  %332 = vst [vmem:[%s2 + $0x18] sm:$0xf] %v284
  %333 = vst [vmem:[%s2 + $0x1c] sm:$0xf] %v285
  %334 = vst [vmem:[%s2 + $0x20] sm:$0xf] %v286
  %335 = vst [vmem:[%s2 + $0x24] sm:$0xf] %v287
  %336 = vst [vmem:[%s2 + $0x28] sm:$0xf] %v288
  %337 = vst [vmem:[%s2 + $0x2c] sm:$0xf] %v289
  %338 = vst [vmem:[%s2 + $0x30] sm:$0xf] %v290
  %339 = vst [vmem:[%s2 + $0x34] sm:$0xf] %v291
  %340 = vst [vmem:[%s2 + $0x38] sm:$0xf] %v292
  %341 = vst [vmem:[%s2 + $0x3c] sm:$0xf] %v293
  %342 = vst [vmem:[%s2 + $0x40] sm:$0xf] %v294
  %343 = vst [vmem:[%s2 + $0x44] sm:$0xf] %v295
  %344 = vst [vmem:[%s2 + $0x48] sm:$0xf] %v296
  %345 = vst [vmem:[%s2 + $0x4c] sm:$0xf] %v297
  %346 = vst [vmem:[%s2 + $0x50] sm:$0xf] %v298
  %347 = vst [vmem:[%s2 + $0x54] sm:$0xf] %v299
  %348 = vst [vmem:[%s2 + $0x58] sm:$0xf] %v300
  %349 = vst [vmem:[%s2 + $0x5c] sm:$0xf] %v301
  %v350 = vadd.f32 %v136, %v139
  %v351 = vadd.f32 %v350, %v144
  %v352 = vadd.f32 %v351, %v147
  %v353 = vadd.f32 %v352, %v152
  %v354 = vadd.f32 %v353, %v155
  %v355 = vadd.f32 %v354, %v160
  %v356 = vadd.f32 %v355, %v163
  %v357 = vadd.f32 %v356, %v168
  %v358 = vadd.f32 %v357, %v171
  %v359 = vadd.f32 %v358, %v176
  %v360 = vadd.f32 %v359, %v179
  %v361 = vadd.f32 %v360, %v184
  %v362 = vadd.f32 %v361, %v187
  %v363 = vadd.f32 %v362, %v192
  %v364 = vadd.f32 %v363, %v195
  %v365 = vadd.f32 %v364, %v200
  %v366 = vadd.f32 %v365, %v203
  %v367 = vadd.f32 %v366, %v208
  %v368 = vadd.f32 %v367, %v211
  %v369 = vadd.f32 %v368, %v216
  %v370 = vadd.f32 %v369, %v219
  %v371 = vadd.f32 %v370, %v224
  %v372 = vadd.f32 %v371, %v227
  %v373 = vrot.slane %v372, 4
  %v374 = vadd.f32 %v372, %v373
  %v375 = vrot.slane %v374, 2
  %v376 = vadd.f32 %v374, %v375
  %v377 = vrot.slane %v376, 1
  %v378 = vadd.f32 %v376, %v377
  %v379 = vmul.f32 %v136, %v136
  %v380 = vmul.f32 %v139, %v139
  %v381 = vmul.f32 %v144, %v144
  %v382 = vmul.f32 %v147, %v147
  %v383 = vmul.f32 %v152, %v152
  %v384 = vmul.f32 %v155, %v155
  %v385 = vmul.f32 %v160, %v160
  %v386 = vmul.f32 %v163, %v163
  %v387 = vmul.f32 %v168, %v168
  %v388 = vmul.f32 %v171, %v171
  %v389 = vmul.f32 %v176, %v176
  %v390 = vmul.f32 %v179, %v179
  %v391 = vmul.f32 %v184, %v184
  %v392 = vmul.f32 %v187, %v187
  %v393 = vmul.f32 %v192, %v192
  %v394 = vmul.f32 %v195, %v195
  %v395 = vmul.f32 %v200, %v200
  %v396 = vmul.f32 %v203, %v203
  %v397 = vmul.f32 %v208, %v208
  %v398 = vmul.f32 %v211, %v211
  %v399 = vmul.f32 %v216, %v216
  %v400 = vmul.f32 %v219, %v219
  %v401 = vmul.f32 %v224, %v224
  %v402 = vmul.f32 %v227, %v227
  %v403 = vadd.f32 %v379, %v380
  %v404 = vadd.f32 %v403, %v381
  %v405 = vadd.f32 %v404, %v382
  %v406 = vadd.f32 %v405, %v383
  %v407 = vadd.f32 %v406, %v384
  %v408 = vadd.f32 %v407, %v385
  %v409 = vadd.f32 %v408, %v386
  %v410 = vadd.f32 %v409, %v387
  %v411 = vadd.f32 %v410, %v388
  %v412 = vadd.f32 %v411, %v389
  %v413 = vadd.f32 %v412, %v390
  %v414 = vadd.f32 %v413, %v391
  %v415 = vadd.f32 %v414, %v392
  %v416 = vadd.f32 %v415, %v393
  %v417 = vadd.f32 %v416, %v394
  %v418 = vadd.f32 %v417, %v395
  %v419 = vadd.f32 %v418, %v396
  %v420 = vadd.f32 %v419, %v397
  %v421 = vadd.f32 %v420, %v398
  %v422 = vadd.f32 %v421, %v399
  %v423 = vadd.f32 %v422, %v400
  %v424 = vadd.f32 %v423, %v401
  %v425 = vadd.f32 %v424, %v402
  %v426 = vrot.slane %v425, 4
  %v427 = vadd.f32 %v425, %v426
  %v428 = vrot.slane %v427, 2
  %v429 = vadd.f32 %v427, %v428
  %v430 = vrot.slane %v429, 1
  %v431 = vadd.f32 %v429, %v430
  %vm432 = vcmask 1040384
  %v433 = vsel %vm432, %v378, %v431
  %434 = vst [vmem:[%s3] sm:$0x3] %v433
  // Predicated region
  $region10: #{refine_block_forward.13} parent=0 // pred_check
    _
  $region11: #{refine_block_forward.13} parent=0 // pred_check_branch
    %436 = sbr.rel (0) target = $region13
  $region12: #{refine_block_forward.13} parent=0 // pred_region
    _
  $region13: #{refine_block_forward.13} parent=0 // pred_fallthru
    _
  // Predicated region
  $region14: #{refine_block_forward.13} parent=0 // pred_check
    _
  $region15: #{refine_block_forward.13} parent=0 // pred_check_branch
    %438 = sbr.rel (0) target = $region17
  $region16: #{refine_block_forward.13} parent=0 // pred_region
    _
  $region17: #{refine_block_forward.13} parent=0 // pred_fallthru
    _
  // Predicated region
  $region18: #{refine_block_forward.13} parent=0 // pred_check
    _
  $region19: #{refine_block_forward.13} parent=0 // pred_check_branch
    %440 = sbr.rel (0) target = $region21
  $region20: #{refine_block_forward.13} parent=0 // pred_region
    _
  $region21: #{refine_block_forward.13} parent=0 // pred_fallthru
    _
  // Predicated region
  $region22: #{refine_block_forward.13} parent=0 // pred_check
    _
  $region23: #{refine_block_forward.13} parent=0 // pred_check_branch
    %442 = sbr.rel (0) target = $region25
  $region24: #{refine_block_forward.13} parent=0 // pred_region
    _
  $region25: #{refine_block_forward.13} parent=0 // pred_fallthru
    _

// kernel: refine_block_forward.14
$region0: #{refine_block_forward.14}
  #allocation0 [shape = 'u32[]', space=smem, size = 0x4, offset = 0x4, fixed_abs, tag = 'smem constant byte address 0x4 - core index']
  #allocation1 [shape = 'u32[144,128]{1,0:T(1,128)}', space=vmem, size = 0x12000, scoped, tag = 'internal scratch']
  %s0 = inlined_call_operand.vmem [shape: bf16[192,128], index: 0, kind: input, shape index: {}]
  %s1 = inlined_call_operand.vmem [shape: f32[1,128], index: 1, kind: input, shape index: {}]
  %s2 = inlined_call_operand.vmem [shape: f32[1,128], index: 2, kind: input, shape index: {}]
  %s3 = inlined_call_operand.vmem [shape: bf16[128,128], index: 3, kind: input, shape index: {}]
  %s4 = inlined_call_operand.vmem [shape: bf16[192,128], index: 4, kind: output, shape index: {0}]
  %s5 = inlined_call_operand.vmem [shape: f32[1,2,128], index: 5, kind: output, shape index: {1}]
  %6 = xla_tuple %s4, %s5
  %s7 = sld [smem:[#allocation0]]
  $region34: #{refine_block_forward.14} parent=0
    _
  %s9 = ssub.s32 1, %s7
  %s10 = scalar_select 0, %s9, %s7
  // Predicated region
  $region2: #{refine_block_forward.14} parent=0 // pred_check
    _
  $region3: #{refine_block_forward.14} parent=0 // pred_check_branch
    %12 = sbr.rel (0) target = $region5
  $region4: #{refine_block_forward.14} parent=0 // pred_region
    _
  $region5: #{refine_block_forward.14} parent=0 // pred_fallthru
    _
  // Predicated region
  $region6: #{refine_block_forward.14} parent=0 // pred_check
    _
  $region7: #{refine_block_forward.14} parent=0 // pred_check_branch
    %14 = sbr.rel (0) target = $region9
  $region8: #{refine_block_forward.14} parent=0 // pred_region
    _
  $region9: #{refine_block_forward.14} parent=0 // pred_fallthru
    _
  // Predicated region
  $region10: #{refine_block_forward.14} parent=0 // pred_check
    _
  $region11: #{refine_block_forward.14} parent=0 // pred_check_branch
    %16 = sbr.rel (0) target = $region13
  $region12: #{refine_block_forward.14} parent=0 // pred_region
    _
  $region13: #{refine_block_forward.14} parent=0 // pred_fallthru
    _
  // Predicated region
  $region14: #{refine_block_forward.14} parent=0 // pred_check
    _
  $region15: #{refine_block_forward.14} parent=0 // pred_check_branch
    %18 = sbr.rel (0) target = $region17
  $region16: #{refine_block_forward.14} parent=0 // pred_region
    _
  $region17: #{refine_block_forward.14} parent=0 // pred_fallthru
    _
  %v20 = vld [vmem:[%s0] sm:$0xf]
  %v21 = vld [vmem:[%s0 + $0x4] sm:$0xf]
  %v22 = vld [vmem:[%s0 + $0x8] sm:$0xf]
  %v23 = vld [vmem:[%s0 + $0xc] sm:$0xf]
  %v24 = vld [vmem:[%s0 + $0x10] sm:$0xf]
  %v25 = vld [vmem:[%s0 + $0x14] sm:$0xf]
  %v26 = vld [vmem:[%s0 + $0x18] sm:$0xf]
  %v27 = vld [vmem:[%s0 + $0x1c] sm:$0xf]
  %v28 = vld [vmem:[%s0 + $0x20] sm:$0xf]
  %v29 = vld [vmem:[%s0 + $0x24] sm:$0xf]
  %v30 = vld [vmem:[%s0 + $0x28] sm:$0xf]
  %v31 = vld [vmem:[%s0 + $0x2c] sm:$0xf]
  %v32 = vld [vmem:[%s0 + $0x30] sm:$0xf]
  %v33 = vld [vmem:[%s0 + $0x34] sm:$0xf]
  %v34 = vld [vmem:[%s0 + $0x38] sm:$0xf]
  %v35 = vld [vmem:[%s0 + $0x3c] sm:$0xf]
  %v36 = vld [vmem:[%s0 + $0x40] sm:$0xf]
  %v37 = vld [vmem:[%s0 + $0x44] sm:$0xf]
  %v38 = vld [vmem:[%s0 + $0x48] sm:$0xf]
  %v39 = vld [vmem:[%s0 + $0x4c] sm:$0xf]
  %v40 = vld [vmem:[%s0 + $0x50] sm:$0xf]
  %v41 = vld [vmem:[%s0 + $0x54] sm:$0xf]
  %v42 = vld [vmem:[%s0 + $0x58] sm:$0xf]
  %v43 = vld [vmem:[%s0 + $0x5c] sm:$0xf]
  %v44 = vunpack.c.l.bf16 %v20
  %v45 = vunpack.c.l.bf16 %v21
  %v46 = vunpack.c.l.bf16 %v22
  %v47 = vunpack.c.l.bf16 %v23
  %v48 = vunpack.c.l.bf16 %v24
  %v49 = vunpack.c.l.bf16 %v25
  %v50 = vunpack.c.l.bf16 %v26
  %v51 = vunpack.c.l.bf16 %v27
  %v52 = vunpack.c.l.bf16 %v28
  %v53 = vunpack.c.l.bf16 %v29
  %v54 = vunpack.c.l.bf16 %v30
  %v55 = vunpack.c.l.bf16 %v31
  %v56 = vunpack.c.l.bf16 %v32
  %v57 = vunpack.c.l.bf16 %v33
  %v58 = vunpack.c.l.bf16 %v34
  %v59 = vunpack.c.l.bf16 %v35
  %v60 = vunpack.c.l.bf16 %v36
  %v61 = vunpack.c.l.bf16 %v37
  %v62 = vunpack.c.l.bf16 %v38
  %v63 = vunpack.c.l.bf16 %v39
  %v64 = vunpack.c.l.bf16 %v40
  %v65 = vunpack.c.l.bf16 %v41
  %v66 = vunpack.c.l.bf16 %v42
  %v67 = vunpack.c.l.bf16 %v43
  %v68 = vld [vmem:[%s1] sm:$0x1]
  %v70 = vlaneseq
  %v71 = vshrl.u32 %v70, 7
  %v72 = vsub.s32 0, %v71
  %v73 = vrot.slane %v68, %v72
  %v75 = vmul.f32 %v44, %v73
  %v76 = vmul.f32 %v45, %v73
  %v77 = vmul.f32 %v46, %v73
  %v78 = vmul.f32 %v47, %v73
  %v79 = vmul.f32 %v48, %v73
  %v80 = vmul.f32 %v49, %v73
  %v81 = vmul.f32 %v50, %v73
  %v82 = vmul.f32 %v51, %v73
  %v83 = vmul.f32 %v52, %v73
  %v84 = vmul.f32 %v53, %v73
  %v85 = vmul.f32 %v54, %v73
  %v86 = vmul.f32 %v55, %v73
  %v87 = vmul.f32 %v56, %v73
  %v88 = vmul.f32 %v57, %v73
  %v89 = vmul.f32 %v58, %v73
  %v90 = vmul.f32 %v59, %v73
  %v91 = vmul.f32 %v60, %v73
  %v92 = vmul.f32 %v61, %v73
  %v93 = vmul.f32 %v62, %v73
  %v94 = vmul.f32 %v63, %v73
  %v95 = vmul.f32 %v64, %v73
  %v96 = vmul.f32 %v65, %v73
  %v97 = vmul.f32 %v66, %v73
  %v98 = vmul.f32 %v67, %v73
  %v99 = vld [vmem:[%s2] sm:$0x1]
  %v101 = vlaneseq
  %v102 = vshrl.u32 %v101, 7
  %v103 = vsub.s32 0, %v102
  %v104 = vrot.slane %v99, %v103
  %v106 = vadd.f32 %v75, %v104
  %v107 = vadd.f32 %v76, %v104
  %v108 = vadd.f32 %v77, %v104
  %v109 = vadd.f32 %v78, %v104
  %v110 = vadd.f32 %v79, %v104
  %v111 = vadd.f32 %v80, %v104
  %v112 = vadd.f32 %v81, %v104
  %v113 = vadd.f32 %v82, %v104
  %v114 = vadd.f32 %v83, %v104
  %v115 = vadd.f32 %v84, %v104
  %v116 = vadd.f32 %v85, %v104
  %v117 = vadd.f32 %v86, %v104
  %v118 = vadd.f32 %v87, %v104
  %v119 = vadd.f32 %v88, %v104
  %v120 = vadd.f32 %v89, %v104
  %v121 = vadd.f32 %v90, %v104
  %v122 = vadd.f32 %v91, %v104
  %v123 = vadd.f32 %v92, %v104
  %v124 = vadd.f32 %v93, %v104
  %v125 = vadd.f32 %v94, %v104
  %v126 = vadd.f32 %v95, %v104
  %v127 = vadd.f32 %v96, %v104
  %v128 = vadd.f32 %v97, %v104
  %v129 = vadd.f32 %v98, %v104
  %v130 = vmax.f32 %v106, 0.0
  %v131 = vmax.f32 %v107, 0.0
  %v132 = vmax.f32 %v108, 0.0
  %v133 = vmax.f32 %v109, 0.0
  %v134 = vmax.f32 %v110, 0.0
  %v135 = vmax.f32 %v111, 0.0
  %v136 = vmax.f32 %v112, 0.0
  %v137 = vmax.f32 %v113, 0.0
  %v138 = vmax.f32 %v114, 0.0
  %v139 = vmax.f32 %v115, 0.0
  %v140 = vmax.f32 %v116, 0.0
  %v141 = vmax.f32 %v117, 0.0
  %v142 = vmax.f32 %v118, 0.0
  %v143 = vmax.f32 %v119, 0.0
  %v144 = vmax.f32 %v120, 0.0
  %v145 = vmax.f32 %v121, 0.0
  %v146 = vmax.f32 %v122, 0.0
  %v147 = vmax.f32 %v123, 0.0
  %v148 = vmax.f32 %v124, 0.0
  %v149 = vmax.f32 %v125, 0.0
  %v150 = vmax.f32 %v126, 0.0
  %v151 = vmax.f32 %v127, 0.0
  %v152 = vmax.f32 %v128, 0.0
  %v153 = vmax.f32 %v129, 0.0
  %v154 = vpack.c.bf16 %v131, %v130
  %v155 = vpack.c.bf16 %v133, %v132
  %v156 = vpack.c.bf16 %v135, %v134
  %v157 = vpack.c.bf16 %v137, %v136
  %v158 = vpack.c.bf16 %v139, %v138
  %v159 = vpack.c.bf16 %v141, %v140
  %v160 = vpack.c.bf16 %v143, %v142
  %v161 = vpack.c.bf16 %v145, %v144
  %v162 = vpack.c.bf16 %v147, %v146
  %v163 = vpack.c.bf16 %v149, %v148
  %v164 = vpack.c.bf16 %v151, %v150
  %v165 = vpack.c.bf16 %v153, %v152
  %v166 = vld [vmem:[%s3] sm:$0xf]
  %v167 = vld [vmem:[%s3 + $0x4] sm:$0xf]
  %v168 = vld [vmem:[%s3 + $0x8] sm:$0xf]
  %v169 = vld [vmem:[%s3 + $0xc] sm:$0xf]
  %v170 = vld [vmem:[%s3 + $0x10] sm:$0xf]
  %v171 = vld [vmem:[%s3 + $0x14] sm:$0xf]
  %v172 = vld [vmem:[%s3 + $0x18] sm:$0xf]
  %v173 = vld [vmem:[%s3 + $0x1c] sm:$0xf]
  %v174 = vld [vmem:[%s3 + $0x20] sm:$0xf]
  %v175 = vld [vmem:[%s3 + $0x24] sm:$0xf]
  %v176 = vld [vmem:[%s3 + $0x28] sm:$0xf]
  %v177 = vld [vmem:[%s3 + $0x2c] sm:$0xf]
  %v178 = vld [vmem:[%s3 + $0x30] sm:$0xf]
  %v179 = vld [vmem:[%s3 + $0x34] sm:$0xf]
  %v180 = vld [vmem:[%s3 + $0x38] sm:$0xf]
  %v181 = vld [vmem:[%s3 + $0x3c] sm:$0xf]
  %v198 = vunpack.c.l.b16 %v166
  %v199 = vunpack.c.l.b16 %v167
  %v200 = vunpack.c.l.b16 %v168
  %v201 = vunpack.c.l.b16 %v169
  %v202 = vunpack.c.l.b16 %v170
  %v203 = vunpack.c.l.b16 %v171
  %v204 = vunpack.c.l.b16 %v172
  %v205 = vunpack.c.l.b16 %v173
  %v206 = vunpack.c.l.b16 %v174
  %v207 = vunpack.c.l.b16 %v175
  %v208 = vunpack.c.l.b16 %v176
  %v209 = vunpack.c.l.b16 %v177
  %v210 = vunpack.c.l.b16 %v178
  %v211 = vunpack.c.l.b16 %v179
  %v212 = vunpack.c.l.b16 %v180
  %v213 = vunpack.c.l.b16 %v181
  %v214 = vpack.c.b16 %v199, %v198
  %v215 = vpack.c.b16 %v201, %v200
  %v216 = vpack.c.b16 %v203, %v202
  %v217 = vpack.c.b16 %v205, %v204
  %v218 = vpack.c.b16 %v207, %v206
  %v219 = vpack.c.b16 %v209, %v208
  %v220 = vpack.c.b16 %v211, %v210
  %v221 = vpack.c.b16 %v213, %v212
  %230 = vmatprep.subr.bf16.mxu0 0
  %231 = vmatpush1.bf16.msra.mxu0 %v214
  %232 = vmatprep.subr.bf16.mxu0 0
  %233 = vmatpush1.bf16.msra.mxu0 %v215
  %234 = vmatprep.subr.bf16.mxu0 0
  %235 = vmatpush1.bf16.msra.mxu0 %v216
  %236 = vmatprep.subr.bf16.mxu0 0
  %237 = vmatpush1.bf16.msra.mxu0 %v217
  %238 = vmatprep.subr.bf16.mxu0 0
  %239 = vmatpush1.bf16.msra.mxu0 %v218
  %240 = vmatprep.subr.bf16.mxu0 0
  %241 = vmatpush1.bf16.msra.mxu0 %v219
  %242 = vmatprep.subr.bf16.mxu0 0
  %243 = vmatpush1.bf16.msra.mxu0 %v220
  %244 = vmatprep.subr.bf16.mxu0 0
  %245 = vmatpush1.bf16.msra.mxu0 %v221
  %246 = vmatprep.subr.bf16.mxu0 0
  %247 = vmatpush1.bf16.msra.mxu0 0
  %248 = vmatprep.subr.bf16.mxu0 0
  %249 = vmatpush1.bf16.msra.mxu0 0
  %250 = vmatprep.subr.bf16.mxu0 0
  %251 = vmatpush1.bf16.msra.mxu0 0
  %252 = vmatprep.subr.bf16.mxu0 0
  %253 = vmatpush1.bf16.msra.mxu0 0
  %254 = vmatprep.subr.bf16.mxu0 0
  %255 = vmatpush1.bf16.msra.mxu0 0
  %256 = vmatprep.subr.bf16.mxu0 0
  %257 = vmatpush1.bf16.msra.mxu0 0
  %258 = vmatprep.subr.bf16.mxu0 0
  %259 = vmatpush1.bf16.msra.mxu0 0
  %260 = vmatprep.subr.bf16.mxu0 0
  %261 = vmatpush1.bf16.msra.mxu0 0
  %262 = vmatprep.mubr.bf16.mxu0 0
  %263 = vmatmul.mubr.bf16.gmra.mrb[0].mxu0 %v154
  %v264 = vpop.f32.mrb[0].mxu0
  %v265 = vadd.f32 0.0, %v264
  %v266 = vpop.f32.mrb[0].mxu0
  %v267 = vpop.f32.mrb[0].mxu0
  %v268 = vadd.f32 0.0, %v267
  %v269 = vpop.f32.mrb[0].mxu0
  %270 = vmatprep.mubr.bf16.mxu0 0
  %271 = vmatmul.mubr.bf16.gmra.mrb[0].mxu0 %v155
  %v272 = vpop.f32.mrb[0].mxu0
  %v273 = vadd.f32 0.0, %v272
  %v274 = vpop.f32.mrb[0].mxu0
  %v275 = vpop.f32.mrb[0].mxu0
  %v276 = vadd.f32 0.0, %v275
  %v277 = vpop.f32.mrb[0].mxu0
  %278 = vmatprep.mubr.bf16.mxu0 0
  %279 = vmatmul.mubr.bf16.gmra.mrb[0].mxu0 %v156
  %v280 = vpop.f32.mrb[0].mxu0
  %v281 = vadd.f32 0.0, %v280
  %v282 = vpop.f32.mrb[0].mxu0
  %v283 = vpop.f32.mrb[0].mxu0
  %v284 = vadd.f32 0.0, %v283
  %v285 = vpop.f32.mrb[0].mxu0
  %286 = vmatprep.mubr.bf16.mxu0 0
  %287 = vmatmul.mubr.bf16.gmra.mrb[0].mxu0 %v157
  %v288 = vpop.f32.mrb[0].mxu0
  %v289 = vadd.f32 0.0, %v288
  %v290 = vpop.f32.mrb[0].mxu0
  %v291 = vpop.f32.mrb[0].mxu0
  %v292 = vadd.f32 0.0, %v291
  %v293 = vpop.f32.mrb[0].mxu0
  %294 = vmatprep.mubr.bf16.mxu0 0
  %295 = vmatmul.mubr.bf16.gmra.mrb[0].mxu0 %v158
  %v296 = vpop.f32.mrb[0].mxu0
  %v297 = vadd.f32 0.0, %v296
  %v298 = vpop.f32.mrb[0].mxu0
  %v299 = vpop.f32.mrb[0].mxu0
  %v300 = vadd.f32 0.0, %v299
  %v301 = vpop.f32.mrb[0].mxu0
  %302 = vmatprep.mubr.bf16.mxu0 0
  %303 = vmatmul.mubr.bf16.gmra.mrb[0].mxu0 %v159
  %v304 = vpop.f32.mrb[0].mxu0
  %v305 = vadd.f32 0.0, %v304
  %v306 = vpop.f32.mrb[0].mxu0
  %v307 = vpop.f32.mrb[0].mxu0
  %v308 = vadd.f32 0.0, %v307
  %v309 = vpop.f32.mrb[0].mxu0
  %310 = vmatprep.mubr.bf16.mxu0 0
  %311 = vmatmul.mubr.bf16.gmra.mrb[0].mxu0 %v160
  %v312 = vpop.f32.mrb[0].mxu0
  %v313 = vadd.f32 0.0, %v312
  %v314 = vpop.f32.mrb[0].mxu0
  %v315 = vpop.f32.mrb[0].mxu0
  %v316 = vadd.f32 0.0, %v315
  %v317 = vpop.f32.mrb[0].mxu0
  %318 = vmatprep.mubr.bf16.mxu0 0
  %319 = vmatmul.mubr.bf16.gmra.mrb[0].mxu0 %v161
  %v320 = vpop.f32.mrb[0].mxu0
  %v321 = vadd.f32 0.0, %v320
  %v322 = vpop.f32.mrb[0].mxu0
  %v323 = vpop.f32.mrb[0].mxu0
  %v324 = vadd.f32 0.0, %v323
  %v325 = vpop.f32.mrb[0].mxu0
  %326 = vmatprep.mubr.bf16.mxu0 0
  %327 = vmatmul.mubr.bf16.gmra.mrb[0].mxu0 %v162
  %v328 = vpop.f32.mrb[0].mxu0
  %v329 = vadd.f32 0.0, %v328
  %v330 = vpop.f32.mrb[0].mxu0
  %v331 = vpop.f32.mrb[0].mxu0
  %v332 = vadd.f32 0.0, %v331
  %v333 = vpop.f32.mrb[0].mxu0
  %334 = vmatprep.mubr.bf16.mxu0 0
  %335 = vmatmul.mubr.bf16.gmra.mrb[0].mxu0 %v163
  %v336 = vpop.f32.mrb[0].mxu0
  %v337 = vadd.f32 0.0, %v336
  %v338 = vpop.f32.mrb[0].mxu0
  %v339 = vpop.f32.mrb[0].mxu0
  %v340 = vadd.f32 0.0, %v339
  %v341 = vpop.f32.mrb[0].mxu0
  %342 = vmatprep.mubr.bf16.mxu0 0
  %343 = vmatmul.mubr.bf16.gmra.mrb[0].mxu0 %v164
  %v344 = vpop.f32.mrb[0].mxu0
  %v345 = vadd.f32 0.0, %v344
  %v346 = vpop.f32.mrb[0].mxu0
  %v347 = vpop.f32.mrb[0].mxu0
  %v348 = vadd.f32 0.0, %v347
  %v349 = vpop.f32.mrb[0].mxu0
  %350 = vmatprep.mubr.bf16.mxu0 0
  %351 = vmatmul.mubr.bf16.gmra.mrb[0].mxu0 %v165
  %v352 = vpop.f32.mrb[0].mxu0
  %v353 = vadd.f32 0.0, %v352
  %v354 = vpop.f32.mrb[0].mxu0
  %v355 = vpop.f32.mrb[0].mxu0
  %v356 = vadd.f32 0.0, %v355
  %v357 = vpop.f32.mrb[0].mxu0
  %358 = vdwg.mxu0
  %v359 = vpack.c.bf16 %v268, %v265
  %v360 = vpack.c.bf16 %v276, %v273
  %v361 = vpack.c.bf16 %v284, %v281
  %v362 = vpack.c.bf16 %v292, %v289
  %v363 = vpack.c.bf16 %v300, %v297
  %v364 = vpack.c.bf16 %v308, %v305
  %v365 = vpack.c.bf16 %v316, %v313
  %v366 = vpack.c.bf16 %v324, %v321
  %v367 = vpack.c.bf16 %v332, %v329
  %v368 = vpack.c.bf16 %v340, %v337
  %v369 = vpack.c.bf16 %v348, %v345
  %v370 = vpack.c.bf16 %v356, %v353
  %v383 = vunpack.c.l.b16 %v359
  %v384 = vunpack.c.h.b16 %v359
  %v385 = vunpack.c.l.b16 %v360
  %v386 = vunpack.c.h.b16 %v360
  %v387 = vunpack.c.l.b16 %v361
  %v388 = vunpack.c.h.b16 %v361
  %v389 = vunpack.c.l.b16 %v362
  %v390 = vunpack.c.h.b16 %v362
  %v391 = vunpack.c.l.b16 %v363
  %v392 = vunpack.c.h.b16 %v363
  %v393 = vunpack.c.l.b16 %v364
  %v394 = vunpack.c.h.b16 %v364
  %v395 = vunpack.c.l.b16 %v365
  %v396 = vunpack.c.h.b16 %v365
  %v397 = vunpack.c.l.b16 %v366
  %v398 = vunpack.c.h.b16 %v366
  %v399 = vunpack.c.l.b16 %v367
  %v400 = vunpack.c.h.b16 %v367
  %v401 = vunpack.c.l.b16 %v368
  %v402 = vunpack.c.h.b16 %v368
  %v403 = vunpack.c.l.b16 %v369
  %v404 = vunpack.c.h.b16 %v369
  %v405 = vunpack.c.l.b16 %v370
  %v406 = vunpack.c.h.b16 %v370
  %v407 = vpack.c.b16 %v383, %v383
  %v408 = vpack.c.b16 %v384, %v384
  %v409 = vpack.c.b16 %v385, %v385
  %v410 = vpack.c.b16 %v386, %v386
  %v411 = vpack.c.b16 %v387, %v387
  %v412 = vpack.c.b16 %v388, %v388
  %v413 = vpack.c.b16 %v389, %v389
  %v414 = vpack.c.b16 %v390, %v390
  %v415 = vpack.c.b16 %v391, %v391
  %v416 = vpack.c.b16 %v392, %v392
  %v417 = vpack.c.b16 %v393, %v393
  %v418 = vpack.c.b16 %v394, %v394
  %v419 = vpack.c.b16 %v395, %v395
  %v420 = vpack.c.b16 %v396, %v396
  %v421 = vpack.c.b16 %v397, %v397
  %v422 = vpack.c.b16 %v398, %v398
  %v423 = vpack.c.b16 %v399, %v399
  %v424 = vpack.c.b16 %v400, %v400
  %v425 = vpack.c.b16 %v401, %v401
  %v426 = vpack.c.b16 %v402, %v402
  %v427 = vpack.c.b16 %v403, %v403
  %v428 = vpack.c.b16 %v404, %v404
  %v429 = vpack.c.b16 %v405, %v405
  %v430 = vpack.c.b16 %v406, %v406
  %455 = vst [vmem:[%s4] sm:$0xf] %v407
  %456 = vst [vmem:[%s4 + $0x4] sm:$0xf] %v408
  %457 = vst [vmem:[%s4 + $0x8] sm:$0xf] %v409
  %458 = vst [vmem:[%s4 + $0xc] sm:$0xf] %v410
  %459 = vst [vmem:[%s4 + $0x10] sm:$0xf] %v411
  %460 = vst [vmem:[%s4 + $0x14] sm:$0xf] %v412
  %461 = vst [vmem:[%s4 + $0x18] sm:$0xf] %v413
  %462 = vst [vmem:[%s4 + $0x1c] sm:$0xf] %v414
  %463 = vst [vmem:[%s4 + $0x20] sm:$0xf] %v415
  %464 = vst [vmem:[%s4 + $0x24] sm:$0xf] %v416
  %465 = vst [vmem:[%s4 + $0x28] sm:$0xf] %v417
  %466 = vst [vmem:[%s4 + $0x2c] sm:$0xf] %v418
  %467 = vst [vmem:[%s4 + $0x30] sm:$0xf] %v419
  %468 = vst [vmem:[%s4 + $0x34] sm:$0xf] %v420
  %469 = vst [vmem:[%s4 + $0x38] sm:$0xf] %v421
  %470 = vst [vmem:[%s4 + $0x3c] sm:$0xf] %v422
  %471 = vst [vmem:[%s4 + $0x40] sm:$0xf] %v423
  %472 = vst [vmem:[%s4 + $0x44] sm:$0xf] %v424
  %473 = vst [vmem:[%s4 + $0x48] sm:$0xf] %v425
  %474 = vst [vmem:[%s4 + $0x4c] sm:$0xf] %v426
  %475 = vst [vmem:[%s4 + $0x50] sm:$0xf] %v427
  %476 = vst [vmem:[%s4 + $0x54] sm:$0xf] %v428
  %477 = vst [vmem:[%s4 + $0x58] sm:$0xf] %v429
  %478 = vst [vmem:[%s4 + $0x5c] sm:$0xf] %v430
  %v479 = vadd.f32 %v265, %v268
  %v480 = vadd.f32 %v479, %v273
  %v481 = vadd.f32 %v480, %v276
  %v482 = vadd.f32 %v481, %v281
  %v483 = vadd.f32 %v482, %v284
  %v484 = vadd.f32 %v483, %v289
  %v485 = vadd.f32 %v484, %v292
  %v486 = vadd.f32 %v485, %v297
  %v487 = vadd.f32 %v486, %v300
  %v488 = vadd.f32 %v487, %v305
  %v489 = vadd.f32 %v488, %v308
  %v490 = vadd.f32 %v489, %v313
  %v491 = vadd.f32 %v490, %v316
  %v492 = vadd.f32 %v491, %v321
  %v493 = vadd.f32 %v492, %v324
  %v494 = vadd.f32 %v493, %v329
  %v495 = vadd.f32 %v494, %v332
  %v496 = vadd.f32 %v495, %v337
  %v497 = vadd.f32 %v496, %v340
  %v498 = vadd.f32 %v497, %v345
  %v499 = vadd.f32 %v498, %v348
  %v500 = vadd.f32 %v499, %v353
  %v501 = vadd.f32 %v500, %v356
  %v502 = vrot.slane %v501, 4
  %v503 = vadd.f32 %v501, %v502
  %v504 = vrot.slane %v503, 2
  %v505 = vadd.f32 %v503, %v504
  %v506 = vrot.slane %v505, 1
  %v507 = vadd.f32 %v505, %v506
  %v508 = vmul.f32 %v265, %v265
  %v509 = vmul.f32 %v268, %v268
  %v510 = vmul.f32 %v273, %v273
  %v511 = vmul.f32 %v276, %v276
  %v512 = vmul.f32 %v281, %v281
  %v513 = vmul.f32 %v284, %v284
  %v514 = vmul.f32 %v289, %v289
  %v515 = vmul.f32 %v292, %v292
  %v516 = vmul.f32 %v297, %v297
  %v517 = vmul.f32 %v300, %v300
  %v518 = vmul.f32 %v305, %v305
  %v519 = vmul.f32 %v308, %v308
  %v520 = vmul.f32 %v313, %v313
  %v521 = vmul.f32 %v316, %v316
  %v522 = vmul.f32 %v321, %v321
  %v523 = vmul.f32 %v324, %v324
  %v524 = vmul.f32 %v329, %v329
  %v525 = vmul.f32 %v332, %v332
  %v526 = vmul.f32 %v337, %v337
  %v527 = vmul.f32 %v340, %v340
  %v528 = vmul.f32 %v345, %v345
  %v529 = vmul.f32 %v348, %v348
  %v530 = vmul.f32 %v353, %v353
  %v531 = vmul.f32 %v356, %v356
  %v532 = vadd.f32 %v508, %v509
  %v533 = vadd.f32 %v532, %v510
  %v534 = vadd.f32 %v533, %v511
  %v535 = vadd.f32 %v534, %v512
  %v536 = vadd.f32 %v535, %v513
  %v537 = vadd.f32 %v536, %v514
  %v538 = vadd.f32 %v537, %v515
  %v539 = vadd.f32 %v538, %v516
  %v540 = vadd.f32 %v539, %v517
  %v541 = vadd.f32 %v540, %v518
  %v542 = vadd.f32 %v541, %v519
  %v543 = vadd.f32 %v542, %v520
  %v544 = vadd.f32 %v543, %v521
  %v545 = vadd.f32 %v544, %v522
  %v546 = vadd.f32 %v545, %v523
  %v547 = vadd.f32 %v546, %v524
  %v548 = vadd.f32 %v547, %v525
  %v549 = vadd.f32 %v548, %v526
  %v550 = vadd.f32 %v549, %v527
  %v551 = vadd.f32 %v550, %v528
  %v552 = vadd.f32 %v551, %v529
  %v553 = vadd.f32 %v552, %v530
  %v554 = vadd.f32 %v553, %v531
  %v555 = vrot.slane %v554, 4
  %v556 = vadd.f32 %v554, %v555
  %v557 = vrot.slane %v556, 2
  %v558 = vadd.f32 %v556, %v557
  %v559 = vrot.slane %v558, 1
  %v560 = vadd.f32 %v558, %v559
  %vm561 = vcmask 1040384
  %v562 = vsel %vm561, %v507, %v560
  %563 = vst [vmem:[%s5] sm:$0x3] %v562
  // Predicated region
  $region18: #{refine_block_forward.14} parent=0 // pred_check
    _
  $region19: #{refine_block_forward.14} parent=0 // pred_check_branch
    %565 = sbr.rel (0) target = $region21
  $region20: #{refine_block_forward.14} parent=0 // pred_region
    _
  $region21: #{refine_block_forward.14} parent=0 // pred_fallthru
    _
  // Predicated region
  $region22: #{refine_block_forward.14} parent=0 // pred_check
    _
  $region23: #{refine_block_forward.14} parent=0 // pred_check_branch
    %567 = sbr.rel (0) target = $region25
  $region24: #{refine_block_forward.14} parent=0 // pred_region
    _
  $region25: #{refine_block_forward.14} parent=0 // pred_fallthru
    _
  // Predicated region
  $region26: #{refine_block_forward.14} parent=0 // pred_check
    _
  $region27: #{refine_block_forward.14} parent=0 // pred_check_branch
    %569 = sbr.rel (0) target = $region29
  $region28: #{refine_block_forward.14} parent=0 // pred_region
    _
  $region29: #{refine_block_forward.14} parent=0 // pred_fallthru
    _
  // Predicated region
  $region30: #{refine_block_forward.14} parent=0 // pred_check
    _
  $region31: #{refine_block_forward.14} parent=0 // pred_check_branch
    %571 = sbr.rel (0) target = $region33
  $region32: #{refine_block_forward.14} parent=0 // pred_region
    _
  $region33: #{refine_block_forward.14} parent=0 // pred_fallthru
    _

// kernel: refine_block_forward.16
$region0: #{refine_block_forward.16}
  #allocation0 [shape = 'u32[]', space=smem, size = 0x4, offset = 0x4, fixed_abs, tag = 'smem constant byte address 0x4 - core index']
  #allocation1 [shape = 'u32[144,128]{1,0:T(1,128)}', space=vmem, size = 0x12000, scoped, tag = 'internal scratch']
  %s0 = inlined_call_operand.vmem [shape: bf16[32,6,128], index: 0, kind: input, shape index: {}]
  %s1 = inlined_call_operand.vmem [shape: f32[1,128], index: 1, kind: input, shape index: {}]
  %s2 = inlined_call_operand.vmem [shape: f32[1,128], index: 2, kind: input, shape index: {}]
  %s3 = inlined_call_operand.vmem [shape: f32[32,128], index: 3, kind: output, shape index: {}]
  %s4 = sld [smem:[#allocation0]]
  $region22: #{refine_block_forward.16} parent=0
    _
  %s6 = ssub.s32 1, %s4
  %s7 = scalar_select 0, %s6, %s4
  // Predicated region
  $region2: #{refine_block_forward.16} parent=0 // pred_check
    _
  $region3: #{refine_block_forward.16} parent=0 // pred_check_branch
    %9 = sbr.rel (0) target = $region5
  $region4: #{refine_block_forward.16} parent=0 // pred_region
    _
  $region5: #{refine_block_forward.16} parent=0 // pred_fallthru
    _
  // Predicated region
  $region6: #{refine_block_forward.16} parent=0 // pred_check
    _
  $region7: #{refine_block_forward.16} parent=0 // pred_check_branch
    %11 = sbr.rel (0) target = $region9
  $region8: #{refine_block_forward.16} parent=0 // pred_region
    _
  $region9: #{refine_block_forward.16} parent=0 // pred_fallthru
    _
  // Predicated region
  $region10: #{refine_block_forward.16} parent=0 // pred_check
    _
  $region11: #{refine_block_forward.16} parent=0 // pred_check_branch
    %13 = sbr.rel (0) target = $region13
  $region12: #{refine_block_forward.16} parent=0 // pred_region
    _
  $region13: #{refine_block_forward.16} parent=0 // pred_fallthru
    _
  %v14 = vld [vmem:[%s0] sm:$0x7]
  %v15 = vld [vmem:[%s0 + $0x4] sm:$0x7]
  %v16 = vld [vmem:[%s0 + $0x8] sm:$0x7]
  %v17 = vld [vmem:[%s0 + $0xc] sm:$0x7]
  %v18 = vld [vmem:[%s0 + $0x10] sm:$0x7]
  %v19 = vld [vmem:[%s0 + $0x14] sm:$0x7]
  %v20 = vld [vmem:[%s0 + $0x18] sm:$0x7]
  %v21 = vld [vmem:[%s0 + $0x1c] sm:$0x7]
  %v22 = vld [vmem:[%s0 + $0x20] sm:$0x7]
  %v23 = vld [vmem:[%s0 + $0x24] sm:$0x7]
  %v24 = vld [vmem:[%s0 + $0x28] sm:$0x7]
  %v25 = vld [vmem:[%s0 + $0x2c] sm:$0x7]
  %v26 = vld [vmem:[%s0 + $0x30] sm:$0x7]
  %v27 = vld [vmem:[%s0 + $0x34] sm:$0x7]
  %v28 = vld [vmem:[%s0 + $0x38] sm:$0x7]
  %v29 = vld [vmem:[%s0 + $0x3c] sm:$0x7]
  %v30 = vld [vmem:[%s0 + $0x40] sm:$0x7]
  %v31 = vld [vmem:[%s0 + $0x44] sm:$0x7]
  %v32 = vld [vmem:[%s0 + $0x48] sm:$0x7]
  %v33 = vld [vmem:[%s0 + $0x4c] sm:$0x7]
  %v34 = vld [vmem:[%s0 + $0x50] sm:$0x7]
  %v35 = vld [vmem:[%s0 + $0x54] sm:$0x7]
  %v36 = vld [vmem:[%s0 + $0x58] sm:$0x7]
  %v37 = vld [vmem:[%s0 + $0x5c] sm:$0x7]
  %v38 = vld [vmem:[%s0 + $0x60] sm:$0x7]
  %v39 = vld [vmem:[%s0 + $0x64] sm:$0x7]
  %v40 = vld [vmem:[%s0 + $0x68] sm:$0x7]
  %v41 = vld [vmem:[%s0 + $0x6c] sm:$0x7]
  %v42 = vld [vmem:[%s0 + $0x70] sm:$0x7]
  %v43 = vld [vmem:[%s0 + $0x74] sm:$0x7]
  %v44 = vld [vmem:[%s0 + $0x78] sm:$0x7]
  %v45 = vld [vmem:[%s0 + $0x7c] sm:$0x7]
  %v46 = vunpack.c.l.bf16 %v14
  %v47 = vunpack.c.l.bf16 %v15
  %v48 = vunpack.c.l.bf16 %v16
  %v49 = vunpack.c.l.bf16 %v17
  %v50 = vunpack.c.l.bf16 %v18
  %v51 = vunpack.c.l.bf16 %v19
  %v52 = vunpack.c.l.bf16 %v20
  %v53 = vunpack.c.l.bf16 %v21
  %v54 = vunpack.c.l.bf16 %v22
  %v55 = vunpack.c.l.bf16 %v23
  %v56 = vunpack.c.l.bf16 %v24
  %v57 = vunpack.c.l.bf16 %v25
  %v58 = vunpack.c.l.bf16 %v26
  %v59 = vunpack.c.l.bf16 %v27
  %v60 = vunpack.c.l.bf16 %v28
  %v61 = vunpack.c.l.bf16 %v29
  %v62 = vunpack.c.l.bf16 %v30
  %v63 = vunpack.c.l.bf16 %v31
  %v64 = vunpack.c.l.bf16 %v32
  %v65 = vunpack.c.l.bf16 %v33
  %v66 = vunpack.c.l.bf16 %v34
  %v67 = vunpack.c.l.bf16 %v35
  %v68 = vunpack.c.l.bf16 %v36
  %v69 = vunpack.c.l.bf16 %v37
  %v70 = vunpack.c.l.bf16 %v38
  %v71 = vunpack.c.l.bf16 %v39
  %v72 = vunpack.c.l.bf16 %v40
  %v73 = vunpack.c.l.bf16 %v41
  %v74 = vunpack.c.l.bf16 %v42
  %v75 = vunpack.c.l.bf16 %v43
  %v76 = vunpack.c.l.bf16 %v44
  %v77 = vunpack.c.l.bf16 %v45
  %v78 = vld [vmem:[%s1] sm:$0x1]
  %v80 = vlaneseq
  %v81 = vshrl.u32 %v80, 7
  %v82 = vsub.s32 0, %v81
  %v83 = vrot.slane %v78, %v82
  %v85 = vmul.f32 %v46, %v83
  %v86 = vmul.f32 %v47, %v83
  %v87 = vmul.f32 %v48, %v83
  %v88 = vmul.f32 %v49, %v83
  %v89 = vmul.f32 %v50, %v83
  %v90 = vmul.f32 %v51, %v83
  %v91 = vmul.f32 %v52, %v83
  %v92 = vmul.f32 %v53, %v83
  %v93 = vmul.f32 %v54, %v83
  %v94 = vmul.f32 %v55, %v83
  %v95 = vmul.f32 %v56, %v83
  %v96 = vmul.f32 %v57, %v83
  %v97 = vmul.f32 %v58, %v83
  %v98 = vmul.f32 %v59, %v83
  %v99 = vmul.f32 %v60, %v83
  %v100 = vmul.f32 %v61, %v83
  %v101 = vmul.f32 %v62, %v83
  %v102 = vmul.f32 %v63, %v83
  %v103 = vmul.f32 %v64, %v83
  %v104 = vmul.f32 %v65, %v83
  %v105 = vmul.f32 %v66, %v83
  %v106 = vmul.f32 %v67, %v83
  %v107 = vmul.f32 %v68, %v83
  %v108 = vmul.f32 %v69, %v83
  %v109 = vmul.f32 %v70, %v83
  %v110 = vmul.f32 %v71, %v83
  %v111 = vmul.f32 %v72, %v83
  %v112 = vmul.f32 %v73, %v83
  %v113 = vmul.f32 %v74, %v83
  %v114 = vmul.f32 %v75, %v83
  %v115 = vmul.f32 %v76, %v83
  %v116 = vmul.f32 %v77, %v83
  %v117 = vld [vmem:[%s2] sm:$0x1]
  %v119 = vlaneseq
  %v120 = vshrl.u32 %v119, 7
  %v121 = vsub.s32 0, %v120
  %v122 = vrot.slane %v117, %v121
  %v124 = vadd.f32 %v85, %v122
  %v125 = vadd.f32 %v86, %v122
  %v126 = vadd.f32 %v87, %v122
  %v127 = vadd.f32 %v88, %v122
  %v128 = vadd.f32 %v89, %v122
  %v129 = vadd.f32 %v90, %v122
  %v130 = vadd.f32 %v91, %v122
  %v131 = vadd.f32 %v92, %v122
  %v132 = vadd.f32 %v93, %v122
  %v133 = vadd.f32 %v94, %v122
  %v134 = vadd.f32 %v95, %v122
  %v135 = vadd.f32 %v96, %v122
  %v136 = vadd.f32 %v97, %v122
  %v137 = vadd.f32 %v98, %v122
  %v138 = vadd.f32 %v99, %v122
  %v139 = vadd.f32 %v100, %v122
  %v140 = vadd.f32 %v101, %v122
  %v141 = vadd.f32 %v102, %v122
  %v142 = vadd.f32 %v103, %v122
  %v143 = vadd.f32 %v104, %v122
  %v144 = vadd.f32 %v105, %v122
  %v145 = vadd.f32 %v106, %v122
  %v146 = vadd.f32 %v107, %v122
  %v147 = vadd.f32 %v108, %v122
  %v148 = vadd.f32 %v109, %v122
  %v149 = vadd.f32 %v110, %v122
  %v150 = vadd.f32 %v111, %v122
  %v151 = vadd.f32 %v112, %v122
  %v152 = vadd.f32 %v113, %v122
  %v153 = vadd.f32 %v114, %v122
  %v154 = vadd.f32 %v115, %v122
  %v155 = vadd.f32 %v116, %v122
  %v156 = vmax.f32 %v124, 0.0
  %v157 = vmax.f32 %v125, 0.0
  %v158 = vmax.f32 %v126, 0.0
  %v159 = vmax.f32 %v127, 0.0
  %v160 = vmax.f32 %v128, 0.0
  %v161 = vmax.f32 %v129, 0.0
  %v162 = vmax.f32 %v130, 0.0
  %v163 = vmax.f32 %v131, 0.0
  %v164 = vmax.f32 %v132, 0.0
  %v165 = vmax.f32 %v133, 0.0
  %v166 = vmax.f32 %v134, 0.0
  %v167 = vmax.f32 %v135, 0.0
  %v168 = vmax.f32 %v136, 0.0
  %v169 = vmax.f32 %v137, 0.0
  %v170 = vmax.f32 %v138, 0.0
  %v171 = vmax.f32 %v139, 0.0
  %v172 = vmax.f32 %v140, 0.0
  %v173 = vmax.f32 %v141, 0.0
  %v174 = vmax.f32 %v142, 0.0
  %v175 = vmax.f32 %v143, 0.0
  %v176 = vmax.f32 %v144, 0.0
  %v177 = vmax.f32 %v145, 0.0
  %v178 = vmax.f32 %v146, 0.0
  %v179 = vmax.f32 %v147, 0.0
  %v180 = vmax.f32 %v148, 0.0
  %v181 = vmax.f32 %v149, 0.0
  %v182 = vmax.f32 %v150, 0.0
  %v183 = vmax.f32 %v151, 0.0
  %v184 = vmax.f32 %v152, 0.0
  %v185 = vmax.f32 %v153, 0.0
  %v186 = vmax.f32 %v154, 0.0
  %v187 = vmax.f32 %v155, 0.0
  %vm188 = vcmask 1045504
  %v189 = vsel %vm188, %v156, 0.0
  %v190 = vrot.slane %v189, 4
  %v191 = vadd.f32 %v189, %v190
  %v192 = vrot.slane %v191, 2
  %v193 = vadd.f32 %v191, %v192
  %v194 = vrot.slane %v193, 1
  %v195 = vadd.f32 %v193, %v194
  %v196 = vsel %vm188, %v157, 0.0
  %v197 = vrot.slane %v196, 4
  %v198 = vadd.f32 %v196, %v197
  %v199 = vrot.slane %v198, 2
  %v200 = vadd.f32 %v198, %v199
  %v201 = vrot.slane %v200, 1
  %v202 = vadd.f32 %v200, %v201
  %v203 = vsel %vm188, %v158, 0.0
  %v204 = vrot.slane %v203, 4
  %v205 = vadd.f32 %v203, %v204
  %v206 = vrot.slane %v205, 2
  %v207 = vadd.f32 %v205, %v206
  %v208 = vrot.slane %v207, 1
  %v209 = vadd.f32 %v207, %v208
  %v210 = vsel %vm188, %v159, 0.0
  %v211 = vrot.slane %v210, 4
  %v212 = vadd.f32 %v210, %v211
  %v213 = vrot.slane %v212, 2
  %v214 = vadd.f32 %v212, %v213
  %v215 = vrot.slane %v214, 1
  %v216 = vadd.f32 %v214, %v215
  %v217 = vsel %vm188, %v160, 0.0
  %v218 = vrot.slane %v217, 4
  %v219 = vadd.f32 %v217, %v218
  %v220 = vrot.slane %v219, 2
  %v221 = vadd.f32 %v219, %v220
  %v222 = vrot.slane %v221, 1
  %v223 = vadd.f32 %v221, %v222
  %v224 = vsel %vm188, %v161, 0.0
  %v225 = vrot.slane %v224, 4
  %v226 = vadd.f32 %v224, %v225
  %v227 = vrot.slane %v226, 2
  %v228 = vadd.f32 %v226, %v227
  %v229 = vrot.slane %v228, 1
  %v230 = vadd.f32 %v228, %v229
  %v231 = vsel %vm188, %v162, 0.0
  %v232 = vrot.slane %v231, 4
  %v233 = vadd.f32 %v231, %v232
  %v234 = vrot.slane %v233, 2
  %v235 = vadd.f32 %v233, %v234
  %v236 = vrot.slane %v235, 1
  %v237 = vadd.f32 %v235, %v236
  %v238 = vsel %vm188, %v163, 0.0
  %v239 = vrot.slane %v238, 4
  %v240 = vadd.f32 %v238, %v239
  %v241 = vrot.slane %v240, 2
  %v242 = vadd.f32 %v240, %v241
  %v243 = vrot.slane %v242, 1
  %v244 = vadd.f32 %v242, %v243
  %v245 = vsel %vm188, %v164, 0.0
  %v246 = vrot.slane %v245, 4
  %v247 = vadd.f32 %v245, %v246
  %v248 = vrot.slane %v247, 2
  %v249 = vadd.f32 %v247, %v248
  %v250 = vrot.slane %v249, 1
  %v251 = vadd.f32 %v249, %v250
  %v252 = vsel %vm188, %v165, 0.0
  %v253 = vrot.slane %v252, 4
  %v254 = vadd.f32 %v252, %v253
  %v255 = vrot.slane %v254, 2
  %v256 = vadd.f32 %v254, %v255
  %v257 = vrot.slane %v256, 1
  %v258 = vadd.f32 %v256, %v257
  %v259 = vsel %vm188, %v166, 0.0
  %v260 = vrot.slane %v259, 4
  %v261 = vadd.f32 %v259, %v260
  %v262 = vrot.slane %v261, 2
  %v263 = vadd.f32 %v261, %v262
  %v264 = vrot.slane %v263, 1
  %v265 = vadd.f32 %v263, %v264
  %v266 = vsel %vm188, %v167, 0.0
  %v267 = vrot.slane %v266, 4
  %v268 = vadd.f32 %v266, %v267
  %v269 = vrot.slane %v268, 2
  %v270 = vadd.f32 %v268, %v269
  %v271 = vrot.slane %v270, 1
  %v272 = vadd.f32 %v270, %v271
  %v273 = vsel %vm188, %v168, 0.0
  %v274 = vrot.slane %v273, 4
  %v275 = vadd.f32 %v273, %v274
  %v276 = vrot.slane %v275, 2
  %v277 = vadd.f32 %v275, %v276
  %v278 = vrot.slane %v277, 1
  %v279 = vadd.f32 %v277, %v278
  %v280 = vsel %vm188, %v169, 0.0
  %v281 = vrot.slane %v280, 4
  %v282 = vadd.f32 %v280, %v281
  %v283 = vrot.slane %v282, 2
  %v284 = vadd.f32 %v282, %v283
  %v285 = vrot.slane %v284, 1
  %v286 = vadd.f32 %v284, %v285
  %v287 = vsel %vm188, %v170, 0.0
  %v288 = vrot.slane %v287, 4
  %v289 = vadd.f32 %v287, %v288
  %v290 = vrot.slane %v289, 2
  %v291 = vadd.f32 %v289, %v290
  %v292 = vrot.slane %v291, 1
  %v293 = vadd.f32 %v291, %v292
  %v294 = vsel %vm188, %v171, 0.0
  %v295 = vrot.slane %v294, 4
  %v296 = vadd.f32 %v294, %v295
  %v297 = vrot.slane %v296, 2
  %v298 = vadd.f32 %v296, %v297
  %v299 = vrot.slane %v298, 1
  %v300 = vadd.f32 %v298, %v299
  %v301 = vsel %vm188, %v172, 0.0
  %v302 = vrot.slane %v301, 4
  %v303 = vadd.f32 %v301, %v302
  %v304 = vrot.slane %v303, 2
  %v305 = vadd.f32 %v303, %v304
  %v306 = vrot.slane %v305, 1
  %v307 = vadd.f32 %v305, %v306
  %v308 = vsel %vm188, %v173, 0.0
  %v309 = vrot.slane %v308, 4
  %v310 = vadd.f32 %v308, %v309
  %v311 = vrot.slane %v310, 2
  %v312 = vadd.f32 %v310, %v311
  %v313 = vrot.slane %v312, 1
  %v314 = vadd.f32 %v312, %v313
  %v315 = vsel %vm188, %v174, 0.0
  %v316 = vrot.slane %v315, 4
  %v317 = vadd.f32 %v315, %v316
  %v318 = vrot.slane %v317, 2
  %v319 = vadd.f32 %v317, %v318
  %v320 = vrot.slane %v319, 1
  %v321 = vadd.f32 %v319, %v320
  %v322 = vsel %vm188, %v175, 0.0
  %v323 = vrot.slane %v322, 4
  %v324 = vadd.f32 %v322, %v323
  %v325 = vrot.slane %v324, 2
  %v326 = vadd.f32 %v324, %v325
  %v327 = vrot.slane %v326, 1
  %v328 = vadd.f32 %v326, %v327
  %v329 = vsel %vm188, %v176, 0.0
  %v330 = vrot.slane %v329, 4
  %v331 = vadd.f32 %v329, %v330
  %v332 = vrot.slane %v331, 2
  %v333 = vadd.f32 %v331, %v332
  %v334 = vrot.slane %v333, 1
  %v335 = vadd.f32 %v333, %v334
  %v336 = vsel %vm188, %v177, 0.0
  %v337 = vrot.slane %v336, 4
  %v338 = vadd.f32 %v336, %v337
  %v339 = vrot.slane %v338, 2
  %v340 = vadd.f32 %v338, %v339
  %v341 = vrot.slane %v340, 1
  %v342 = vadd.f32 %v340, %v341
  %v343 = vsel %vm188, %v178, 0.0
  %v344 = vrot.slane %v343, 4
  %v345 = vadd.f32 %v343, %v344
  %v346 = vrot.slane %v345, 2
  %v347 = vadd.f32 %v345, %v346
  %v348 = vrot.slane %v347, 1
  %v349 = vadd.f32 %v347, %v348
  %v350 = vsel %vm188, %v179, 0.0
  %v351 = vrot.slane %v350, 4
  %v352 = vadd.f32 %v350, %v351
  %v353 = vrot.slane %v352, 2
  %v354 = vadd.f32 %v352, %v353
  %v355 = vrot.slane %v354, 1
  %v356 = vadd.f32 %v354, %v355
  %v357 = vsel %vm188, %v180, 0.0
  %v358 = vrot.slane %v357, 4
  %v359 = vadd.f32 %v357, %v358
  %v360 = vrot.slane %v359, 2
  %v361 = vadd.f32 %v359, %v360
  %v362 = vrot.slane %v361, 1
  %v363 = vadd.f32 %v361, %v362
  %v364 = vsel %vm188, %v181, 0.0
  %v365 = vrot.slane %v364, 4
  %v366 = vadd.f32 %v364, %v365
  %v367 = vrot.slane %v366, 2
  %v368 = vadd.f32 %v366, %v367
  %v369 = vrot.slane %v368, 1
  %v370 = vadd.f32 %v368, %v369
  %v371 = vsel %vm188, %v182, 0.0
  %v372 = vrot.slane %v371, 4
  %v373 = vadd.f32 %v371, %v372
  %v374 = vrot.slane %v373, 2
  %v375 = vadd.f32 %v373, %v374
  %v376 = vrot.slane %v375, 1
  %v377 = vadd.f32 %v375, %v376
  %v378 = vsel %vm188, %v183, 0.0
  %v379 = vrot.slane %v378, 4
  %v380 = vadd.f32 %v378, %v379
  %v381 = vrot.slane %v380, 2
  %v382 = vadd.f32 %v380, %v381
  %v383 = vrot.slane %v382, 1
  %v384 = vadd.f32 %v382, %v383
  %v385 = vsel %vm188, %v184, 0.0
  %v386 = vrot.slane %v385, 4
  %v387 = vadd.f32 %v385, %v386
  %v388 = vrot.slane %v387, 2
  %v389 = vadd.f32 %v387, %v388
  %v390 = vrot.slane %v389, 1
  %v391 = vadd.f32 %v389, %v390
  %v392 = vsel %vm188, %v185, 0.0
  %v393 = vrot.slane %v392, 4
  %v394 = vadd.f32 %v392, %v393
  %v395 = vrot.slane %v394, 2
  %v396 = vadd.f32 %v394, %v395
  %v397 = vrot.slane %v396, 1
  %v398 = vadd.f32 %v396, %v397
  %v399 = vsel %vm188, %v186, 0.0
  %v400 = vrot.slane %v399, 4
  %v401 = vadd.f32 %v399, %v400
  %v402 = vrot.slane %v401, 2
  %v403 = vadd.f32 %v401, %v402
  %v404 = vrot.slane %v403, 1
  %v405 = vadd.f32 %v403, %v404
  %v406 = vsel %vm188, %v187, 0.0
  %v407 = vrot.slane %v406, 4
  %v408 = vadd.f32 %v406, %v407
  %v409 = vrot.slane %v408, 2
  %v410 = vadd.f32 %v408, %v409
  %v411 = vrot.slane %v410, 1
  %v412 = vadd.f32 %v410, %v411
  %vm445 = vcmask 1041409
  %v446 = vsel %vm445, %v202, %v195
  %vm447 = vcmask 1042434
  %v448 = vsel %vm447, %v209, %v446
  %vm449 = vcmask 1043459
  %v450 = vsel %vm449, %v216, %v448
  %vm451 = vcmask 1044484
  %v452 = vsel %vm451, %v223, %v450
  %vm453 = vcmask 1045509
  %v454 = vsel %vm453, %v230, %v452
  %vm455 = vcmask 1046534
  %v456 = vsel %vm455, %v237, %v454
  %vm457 = vcmask 1047559
  %v458 = vsel %vm457, %v244, %v456
  %v459 = vsel %vm445, %v258, %v251
  %v460 = vsel %vm447, %v265, %v459
  %v461 = vsel %vm449, %v272, %v460
  %v462 = vsel %vm451, %v279, %v461
  %v463 = vsel %vm453, %v286, %v462
  %v464 = vsel %vm455, %v293, %v463
  %v465 = vsel %vm457, %v300, %v464
  %v466 = vsel %vm445, %v314, %v307
  %v467 = vsel %vm447, %v321, %v466
  %v468 = vsel %vm449, %v328, %v467
  %v469 = vsel %vm451, %v335, %v468
  %v470 = vsel %vm453, %v342, %v469
  %v471 = vsel %vm455, %v349, %v470
  %v472 = vsel %vm457, %v356, %v471
  %v473 = vsel %vm445, %v370, %v363
  %v474 = vsel %vm447, %v377, %v473
  %v475 = vsel %vm449, %v384, %v474
  %v476 = vsel %vm451, %v391, %v475
  %v477 = vsel %vm453, %v398, %v476
  %v478 = vsel %vm455, %v405, %v477
  %v479 = vsel %vm457, %v412, %v478
  %484 = vst [vmem:[%s3] sm:$0xff] %v458
  %485 = vst [vmem:[%s3 + $0x8] sm:$0xff] %v465
  %486 = vst [vmem:[%s3 + $0x10] sm:$0xff] %v472
  %487 = vst [vmem:[%s3 + $0x18] sm:$0xff] %v479
  // Predicated region
  $region14: #{refine_block_forward.16} parent=0 // pred_check
    _
  $region15: #{refine_block_forward.16} parent=0 // pred_check_branch
    %489 = sbr.rel (0) target = $region17
  $region16: #{refine_block_forward.16} parent=0 // pred_region
    _
  $region17: #{refine_block_forward.16} parent=0 // pred_fallthru
    _
  // Predicated region
  $region18: #{refine_block_forward.16} parent=0 // pred_check
    _
  $region19: #{refine_block_forward.16} parent=0 // pred_check_branch
    %491 = sbr.rel (0) target = $region21
  $region20: #{refine_block_forward.16} parent=0 // pred_region
    _
  $region21: #{refine_block_forward.16} parent=0 // pred_fallthru
    _

// kernel: refine_block_forward.17
$region0: #{refine_block_forward.17}
  #allocation0 [shape = 'u32[]', space=smem, size = 0x4, offset = 0x4, fixed_abs, tag = 'smem constant byte address 0x4 - core index']
  #allocation1 [shape = 'u32[144,128]{1,0:T(1,128)}', space=vmem, size = 0x12000, scoped, tag = 'internal scratch']
  %s0 = inlined_call_operand.vmem [shape: f32[128,71], index: 0, kind: input, shape index: {}]
  %s1 = inlined_call_operand.vmem [shape: bf16[71,128], index: 1, kind: input, shape index: {}]
  %s2 = inlined_call_operand.vmem [shape: bf16[128,128], index: 2, kind: output, shape index: {0}]
  %s3 = inlined_call_operand.vmem [shape: f32[1,2,128], index: 3, kind: output, shape index: {1}]
  %4 = xla_tuple %s2, %s3
  %s5 = sld [smem:[#allocation0]]
  $region26: #{refine_block_forward.17} parent=0
    _
  %s7 = ssub.s32 1, %s5
  %s8 = scalar_select 0, %s7, %s5
  // Predicated region
  $region2: #{refine_block_forward.17} parent=0 // pred_check
    _
  $region3: #{refine_block_forward.17} parent=0 // pred_check_branch
    %10 = sbr.rel (0) target = $region5
  $region4: #{refine_block_forward.17} parent=0 // pred_region
    _
  $region5: #{refine_block_forward.17} parent=0 // pred_fallthru
    _
  // Predicated region
  $region6: #{refine_block_forward.17} parent=0 // pred_check
    _
  $region7: #{refine_block_forward.17} parent=0 // pred_check_branch
    %12 = sbr.rel (0) target = $region9
  $region8: #{refine_block_forward.17} parent=0 // pred_region
    _
  $region9: #{refine_block_forward.17} parent=0 // pred_fallthru
    _
  %v14 = vld [vmem:[%s0] sm:$0xff]
  %v15 = vld [vmem:[%s0 + $0x8] sm:$0xff]
  %v16 = vld [vmem:[%s0 + $0x10] sm:$0xff]
  %v17 = vld [vmem:[%s0 + $0x18] sm:$0xff]
  %v18 = vld [vmem:[%s0 + $0x20] sm:$0xff]
  %v19 = vld [vmem:[%s0 + $0x28] sm:$0xff]
  %v20 = vld [vmem:[%s0 + $0x30] sm:$0xff]
  %v21 = vld [vmem:[%s0 + $0x38] sm:$0xff]
  %v22 = vld [vmem:[%s0 + $0x40] sm:$0xff]
  %v23 = vld [vmem:[%s0 + $0x48] sm:$0xff]
  %v24 = vld [vmem:[%s0 + $0x50] sm:$0xff]
  %v25 = vld [vmem:[%s0 + $0x58] sm:$0xff]
  %v26 = vld [vmem:[%s0 + $0x60] sm:$0xff]
  %v27 = vld [vmem:[%s0 + $0x68] sm:$0xff]
  %v28 = vld [vmem:[%s0 + $0x70] sm:$0xff]
  %v29 = vld [vmem:[%s0 + $0x78] sm:$0xff]
  %v30 = vpack.c.bf16 %v15, %v14
  %v31 = vpack.c.bf16 %v17, %v16
  %v32 = vpack.c.bf16 %v19, %v18
  %v33 = vpack.c.bf16 %v21, %v20
  %v34 = vpack.c.bf16 %v23, %v22
  %v35 = vpack.c.bf16 %v25, %v24
  %v36 = vpack.c.bf16 %v27, %v26
  %v37 = vpack.c.bf16 %v29, %v28
  %v38 = vld [vmem:[%s1] sm:$0xf]
  %v39 = vld [vmem:[%s1 + $0x4] sm:$0xf]
  %v40 = vld [vmem:[%s1 + $0x8] sm:$0xf]
  %v41 = vld [vmem:[%s1 + $0xc] sm:$0xf]
  %v42 = vld [vmem:[%s1 + $0x10] sm:$0xf]
  %v43 = vld [vmem:[%s1 + $0x14] sm:$0xf]
  %v44 = vld [vmem:[%s1 + $0x18] sm:$0xf]
  %v45 = vld [vmem:[%s1 + $0x1c] sm:$0xf]
  %v46 = vld [vmem:[%s1 + $0x20] sm:$0xf]
  %v56 = vunpack.c.l.b16 %v38
  %v57 = vunpack.c.l.b16 %v39
  %v58 = vunpack.c.l.b16 %v40
  %v59 = vunpack.c.l.b16 %v41
  %v60 = vunpack.c.l.b16 %v42
  %v61 = vunpack.c.l.b16 %v43
  %v62 = vunpack.c.l.b16 %v44
  %v63 = vunpack.c.l.b16 %v45
  %v64 = vunpack.c.l.b16 %v46
  %v65 = vpack.c.b16 %v57, %v56
  %v66 = vpack.c.b16 %v59, %v58
  %v67 = vpack.c.b16 %v61, %v60
  %v68 = vpack.c.b16 %v63, %v62
  %v69 = vpack.c.b16 %v64, %v64
  %vm74 = vcmask 580608
  %v76 = vsel %vm74, %v30, 0
  %v79 = vsel %vm74, %v31, 0
  %v82 = vsel %vm74, %v32, 0
  %v85 = vsel %vm74, %v33, 0
  %v88 = vsel %vm74, %v34, 0
  %v91 = vsel %vm74, %v35, 0
  %v94 = vsel %vm74, %v36, 0
  %v97 = vsel %vm74, %v37, 0
  %vm99 = vcmask 1042432
  %vm100 = vcmask 1043456
  %v101 = vsel %vm99, 4294967295, 65535
  %v102 = vsel %vm100, %v101, 0
  %v104 = vand.u32 %v69, %v102
  %106 = vmatprep.subr.bf16.mxu0 0
  %107 = vmatpush1.bf16.msra.mxu0 %v65
  %108 = vmatprep.subr.bf16.mxu0 0
  %109 = vmatpush1.bf16.msra.mxu0 %v66
  %110 = vmatprep.subr.bf16.mxu0 0
  %111 = vmatpush1.bf16.msra.mxu0 %v67
  %112 = vmatprep.subr.bf16.mxu0 0
  %113 = vmatpush1.bf16.msra.mxu0 %v68
  %114 = vmatprep.subr.bf16.mxu0 0
  %115 = vmatpush1.bf16.msra.mxu0 %v104
  %116 = vmatprep.subr.bf16.mxu0 0
  %117 = vmatpush1.bf16.msra.mxu0 0
  %118 = vmatprep.subr.bf16.mxu0 0
  %119 = vmatpush1.bf16.msra.mxu0 0
  %120 = vmatprep.subr.bf16.mxu0 0
  %121 = vmatpush1.bf16.msra.mxu0 0
  %122 = vmatprep.subr.bf16.mxu0 0
  %123 = vmatpush1.bf16.msra.mxu0 0
  %124 = vmatprep.subr.bf16.mxu0 0
  %125 = vmatpush1.bf16.msra.mxu0 0
  %126 = vmatprep.subr.bf16.mxu0 0
  %127 = vmatpush1.bf16.msra.mxu0 0
  %128 = vmatprep.subr.bf16.mxu0 0
  %129 = vmatpush1.bf16.msra.mxu0 0
  %130 = vmatprep.subr.bf16.mxu0 0
  %131 = vmatpush1.bf16.msra.mxu0 0
  %132 = vmatprep.subr.bf16.mxu0 0
  %133 = vmatpush1.bf16.msra.mxu0 0
  %134 = vmatprep.subr.bf16.mxu0 0
  %135 = vmatpush1.bf16.msra.mxu0 0
  %136 = vmatprep.subr.bf16.mxu0 0
  %137 = vmatpush1.bf16.msra.mxu0 0
  %138 = vmatprep.mubr.bf16.mxu0 0
  %139 = vmatmul.mubr.bf16.gmra.mrb[0].mxu0 %v76
  %v140 = vpop.f32.mrb[0].mxu0
  %v141 = vadd.f32 0.0, %v140
  %v142 = vpop.f32.mrb[0].mxu0
  %v143 = vpop.f32.mrb[0].mxu0
  %v144 = vadd.f32 0.0, %v143
  %v145 = vpop.f32.mrb[0].mxu0
  %146 = vmatprep.mubr.bf16.mxu0 0
  %147 = vmatmul.mubr.bf16.gmra.mrb[0].mxu0 %v79
  %v148 = vpop.f32.mrb[0].mxu0
  %v149 = vadd.f32 0.0, %v148
  %v150 = vpop.f32.mrb[0].mxu0
  %v151 = vpop.f32.mrb[0].mxu0
  %v152 = vadd.f32 0.0, %v151
  %v153 = vpop.f32.mrb[0].mxu0
  %154 = vmatprep.mubr.bf16.mxu0 0
  %155 = vmatmul.mubr.bf16.gmra.mrb[0].mxu0 %v82
  %v156 = vpop.f32.mrb[0].mxu0
  %v157 = vadd.f32 0.0, %v156
  %v158 = vpop.f32.mrb[0].mxu0
  %v159 = vpop.f32.mrb[0].mxu0
  %v160 = vadd.f32 0.0, %v159
  %v161 = vpop.f32.mrb[0].mxu0
  %162 = vmatprep.mubr.bf16.mxu0 0
  %163 = vmatmul.mubr.bf16.gmra.mrb[0].mxu0 %v85
  %v164 = vpop.f32.mrb[0].mxu0
  %v165 = vadd.f32 0.0, %v164
  %v166 = vpop.f32.mrb[0].mxu0
  %v167 = vpop.f32.mrb[0].mxu0
  %v168 = vadd.f32 0.0, %v167
  %v169 = vpop.f32.mrb[0].mxu0
  %170 = vmatprep.mubr.bf16.mxu0 0
  %171 = vmatmul.mubr.bf16.gmra.mrb[0].mxu0 %v88
  %v172 = vpop.f32.mrb[0].mxu0
  %v173 = vadd.f32 0.0, %v172
  %v174 = vpop.f32.mrb[0].mxu0
  %v175 = vpop.f32.mrb[0].mxu0
  %v176 = vadd.f32 0.0, %v175
  %v177 = vpop.f32.mrb[0].mxu0
  %178 = vmatprep.mubr.bf16.mxu0 0
  %179 = vmatmul.mubr.bf16.gmra.mrb[0].mxu0 %v91
  %v180 = vpop.f32.mrb[0].mxu0
  %v181 = vadd.f32 0.0, %v180
  %v182 = vpop.f32.mrb[0].mxu0
  %v183 = vpop.f32.mrb[0].mxu0
  %v184 = vadd.f32 0.0, %v183
  %v185 = vpop.f32.mrb[0].mxu0
  %186 = vmatprep.mubr.bf16.mxu0 0
  %187 = vmatmul.mubr.bf16.gmra.mrb[0].mxu0 %v94
  %v188 = vpop.f32.mrb[0].mxu0
  %v189 = vadd.f32 0.0, %v188
  %v190 = vpop.f32.mrb[0].mxu0
  %v191 = vpop.f32.mrb[0].mxu0
  %v192 = vadd.f32 0.0, %v191
  %v193 = vpop.f32.mrb[0].mxu0
  %194 = vmatprep.mubr.bf16.mxu0 0
  %195 = vmatmul.mubr.bf16.gmra.mrb[0].mxu0 %v97
  %v196 = vpop.f32.mrb[0].mxu0
  %v197 = vadd.f32 0.0, %v196
  %v198 = vpop.f32.mrb[0].mxu0
  %v199 = vpop.f32.mrb[0].mxu0
  %v200 = vadd.f32 0.0, %v199
  %v201 = vpop.f32.mrb[0].mxu0
  %202 = vdwg.mxu0
  %v203 = vpack.c.bf16 %v144, %v141
  %v204 = vpack.c.bf16 %v152, %v149
  %v205 = vpack.c.bf16 %v160, %v157
  %v206 = vpack.c.bf16 %v168, %v165
  %v207 = vpack.c.bf16 %v176, %v173
  %v208 = vpack.c.bf16 %v184, %v181
  %v209 = vpack.c.bf16 %v192, %v189
  %v210 = vpack.c.bf16 %v200, %v197
  %v219 = vunpack.c.l.b16 %v203
  %v220 = vunpack.c.h.b16 %v203
  %v221 = vunpack.c.l.b16 %v204
  %v222 = vunpack.c.h.b16 %v204
  %v223 = vunpack.c.l.b16 %v205
  %v224 = vunpack.c.h.b16 %v205
  %v225 = vunpack.c.l.b16 %v206
  %v226 = vunpack.c.h.b16 %v206
  %v227 = vunpack.c.l.b16 %v207
  %v228 = vunpack.c.h.b16 %v207
  %v229 = vunpack.c.l.b16 %v208
  %v230 = vunpack.c.h.b16 %v208
  %v231 = vunpack.c.l.b16 %v209
  %v232 = vunpack.c.h.b16 %v209
  %v233 = vunpack.c.l.b16 %v210
  %v234 = vunpack.c.h.b16 %v210
  %v235 = vpack.c.b16 %v219, %v219
  %v236 = vpack.c.b16 %v220, %v220
  %v237 = vpack.c.b16 %v221, %v221
  %v238 = vpack.c.b16 %v222, %v222
  %v239 = vpack.c.b16 %v223, %v223
  %v240 = vpack.c.b16 %v224, %v224
  %v241 = vpack.c.b16 %v225, %v225
  %v242 = vpack.c.b16 %v226, %v226
  %v243 = vpack.c.b16 %v227, %v227
  %v244 = vpack.c.b16 %v228, %v228
  %v245 = vpack.c.b16 %v229, %v229
  %v246 = vpack.c.b16 %v230, %v230
  %v247 = vpack.c.b16 %v231, %v231
  %v248 = vpack.c.b16 %v232, %v232
  %v249 = vpack.c.b16 %v233, %v233
  %v250 = vpack.c.b16 %v234, %v234
  %267 = vst [vmem:[%s2] sm:$0xf] %v235
  %268 = vst [vmem:[%s2 + $0x4] sm:$0xf] %v236
  %269 = vst [vmem:[%s2 + $0x8] sm:$0xf] %v237
  %270 = vst [vmem:[%s2 + $0xc] sm:$0xf] %v238
  %271 = vst [vmem:[%s2 + $0x10] sm:$0xf] %v239
  %272 = vst [vmem:[%s2 + $0x14] sm:$0xf] %v240
  %273 = vst [vmem:[%s2 + $0x18] sm:$0xf] %v241
  %274 = vst [vmem:[%s2 + $0x1c] sm:$0xf] %v242
  %275 = vst [vmem:[%s2 + $0x20] sm:$0xf] %v243
  %276 = vst [vmem:[%s2 + $0x24] sm:$0xf] %v244
  %277 = vst [vmem:[%s2 + $0x28] sm:$0xf] %v245
  %278 = vst [vmem:[%s2 + $0x2c] sm:$0xf] %v246
  %279 = vst [vmem:[%s2 + $0x30] sm:$0xf] %v247
  %280 = vst [vmem:[%s2 + $0x34] sm:$0xf] %v248
  %281 = vst [vmem:[%s2 + $0x38] sm:$0xf] %v249
  %282 = vst [vmem:[%s2 + $0x3c] sm:$0xf] %v250
  %v283 = vadd.f32 %v141, %v144
  %v284 = vadd.f32 %v283, %v149
  %v285 = vadd.f32 %v284, %v152
  %v286 = vadd.f32 %v285, %v157
  %v287 = vadd.f32 %v286, %v160
  %v288 = vadd.f32 %v287, %v165
  %v289 = vadd.f32 %v288, %v168
  %v290 = vadd.f32 %v289, %v173
  %v291 = vadd.f32 %v290, %v176
  %v292 = vadd.f32 %v291, %v181
  %v293 = vadd.f32 %v292, %v184
  %v294 = vadd.f32 %v293, %v189
  %v295 = vadd.f32 %v294, %v192
  %v296 = vadd.f32 %v295, %v197
  %v297 = vadd.f32 %v296, %v200
  %v298 = vrot.slane %v297, 4
  %v299 = vadd.f32 %v297, %v298
  %v300 = vrot.slane %v299, 2
  %v301 = vadd.f32 %v299, %v300
  %v302 = vrot.slane %v301, 1
  %v303 = vadd.f32 %v301, %v302
  %v304 = vmul.f32 %v141, %v141
  %v305 = vmul.f32 %v144, %v144
  %v306 = vmul.f32 %v149, %v149
  %v307 = vmul.f32 %v152, %v152
  %v308 = vmul.f32 %v157, %v157
  %v309 = vmul.f32 %v160, %v160
  %v310 = vmul.f32 %v165, %v165
  %v311 = vmul.f32 %v168, %v168
  %v312 = vmul.f32 %v173, %v173
  %v313 = vmul.f32 %v176, %v176
  %v314 = vmul.f32 %v181, %v181
  %v315 = vmul.f32 %v184, %v184
  %v316 = vmul.f32 %v189, %v189
  %v317 = vmul.f32 %v192, %v192
  %v318 = vmul.f32 %v197, %v197
  %v319 = vmul.f32 %v200, %v200
  %v320 = vadd.f32 %v304, %v305
  %v321 = vadd.f32 %v320, %v306
  %v322 = vadd.f32 %v321, %v307
  %v323 = vadd.f32 %v322, %v308
  %v324 = vadd.f32 %v323, %v309
  %v325 = vadd.f32 %v324, %v310
  %v326 = vadd.f32 %v325, %v311
  %v327 = vadd.f32 %v326, %v312
  %v328 = vadd.f32 %v327, %v313
  %v329 = vadd.f32 %v328, %v314
  %v330 = vadd.f32 %v329, %v315
  %v331 = vadd.f32 %v330, %v316
  %v332 = vadd.f32 %v331, %v317
  %v333 = vadd.f32 %v332, %v318
  %v334 = vadd.f32 %v333, %v319
  %v335 = vrot.slane %v334, 4
  %v336 = vadd.f32 %v334, %v335
  %v337 = vrot.slane %v336, 2
  %v338 = vadd.f32 %v336, %v337
  %v339 = vrot.slane %v338, 1
  %v340 = vadd.f32 %v338, %v339
  %vm341 = vcmask 1040384
  %v342 = vsel %vm341, %v303, %v340
  %343 = vst [vmem:[%s3] sm:$0x3] %v342
  // Predicated region
  $region10: #{refine_block_forward.17} parent=0 // pred_check
    _
  $region11: #{refine_block_forward.17} parent=0 // pred_check_branch
    %345 = sbr.rel (0) target = $region13
  $region12: #{refine_block_forward.17} parent=0 // pred_region
    _
  $region13: #{refine_block_forward.17} parent=0 // pred_fallthru
    _
  // Predicated region
  $region14: #{refine_block_forward.17} parent=0 // pred_check
    _
  $region15: #{refine_block_forward.17} parent=0 // pred_check_branch
    %347 = sbr.rel (0) target = $region17
  $region16: #{refine_block_forward.17} parent=0 // pred_region
    _
  $region17: #{refine_block_forward.17} parent=0 // pred_fallthru
    _
  // Predicated region
  $region18: #{refine_block_forward.17} parent=0 // pred_check
    _
  $region19: #{refine_block_forward.17} parent=0 // pred_check_branch
    %349 = sbr.rel (0) target = $region21
  $region20: #{refine_block_forward.17} parent=0 // pred_region
    _
  $region21: #{refine_block_forward.17} parent=0 // pred_fallthru
    _
  // Predicated region
  $region22: #{refine_block_forward.17} parent=0 // pred_check
    _
  $region23: #{refine_block_forward.17} parent=0 // pred_check_branch
    %351 = sbr.rel (0) target = $region25
  $region24: #{refine_block_forward.17} parent=0 // pred_region
    _
  $region25: #{refine_block_forward.17} parent=0 // pred_fallthru
    _

// kernel: refine_block_forward.19
$region0: #{refine_block_forward.19}
  #allocation0 [shape = 'u32[]', space=smem, size = 0x4, offset = 0x4, fixed_abs, tag = 'smem constant byte address 0x4 - core index']
  #allocation1 [shape = 'u32[144,128]{1,0:T(1,128)}', space=vmem, size = 0x12000, scoped, tag = 'internal scratch']
  %s0 = inlined_call_operand.vmem [shape: bf16[32,4,128], index: 0, kind: input, shape index: {}]
  %s1 = inlined_call_operand.vmem [shape: f32[1,128], index: 1, kind: input, shape index: {}]
  %s2 = inlined_call_operand.vmem [shape: f32[1,128], index: 2, kind: input, shape index: {}]
  %s3 = inlined_call_operand.vmem [shape: f32[32,128], index: 3, kind: output, shape index: {}]
  %s4 = sld [smem:[#allocation0]]
  $region22: #{refine_block_forward.19} parent=0
    _
  %s6 = ssub.s32 1, %s4
  %s7 = scalar_select 0, %s6, %s4
  // Predicated region
  $region2: #{refine_block_forward.19} parent=0 // pred_check
    _
  $region3: #{refine_block_forward.19} parent=0 // pred_check_branch
    %9 = sbr.rel (0) target = $region5
  $region4: #{refine_block_forward.19} parent=0 // pred_region
    _
  $region5: #{refine_block_forward.19} parent=0 // pred_fallthru
    _
  // Predicated region
  $region6: #{refine_block_forward.19} parent=0 // pred_check
    _
  $region7: #{refine_block_forward.19} parent=0 // pred_check_branch
    %11 = sbr.rel (0) target = $region9
  $region8: #{refine_block_forward.19} parent=0 // pred_region
    _
  $region9: #{refine_block_forward.19} parent=0 // pred_fallthru
    _
  // Predicated region
  $region10: #{refine_block_forward.19} parent=0 // pred_check
    _
  $region11: #{refine_block_forward.19} parent=0 // pred_check_branch
    %13 = sbr.rel (0) target = $region13
  $region12: #{refine_block_forward.19} parent=0 // pred_region
    _
  $region13: #{refine_block_forward.19} parent=0 // pred_fallthru
    _
  %v14 = vld [vmem:[%s0] sm:$0x3]
  %v15 = vld [vmem:[%s0 + $0x2] sm:$0x3]
  %v16 = vld [vmem:[%s0 + $0x4] sm:$0x3]
  %v17 = vld [vmem:[%s0 + $0x6] sm:$0x3]
  %v18 = vld [vmem:[%s0 + $0x8] sm:$0x3]
  %v19 = vld [vmem:[%s0 + $0xa] sm:$0x3]
  %v20 = vld [vmem:[%s0 + $0xc] sm:$0x3]
  %v21 = vld [vmem:[%s0 + $0xe] sm:$0x3]
  %v22 = vld [vmem:[%s0 + $0x10] sm:$0x3]
  %v23 = vld [vmem:[%s0 + $0x12] sm:$0x3]
  %v24 = vld [vmem:[%s0 + $0x14] sm:$0x3]
  %v25 = vld [vmem:[%s0 + $0x16] sm:$0x3]
  %v26 = vld [vmem:[%s0 + $0x18] sm:$0x3]
  %v27 = vld [vmem:[%s0 + $0x1a] sm:$0x3]
  %v28 = vld [vmem:[%s0 + $0x1c] sm:$0x3]
  %v29 = vld [vmem:[%s0 + $0x1e] sm:$0x3]
  %v30 = vld [vmem:[%s0 + $0x20] sm:$0x3]
  %v31 = vld [vmem:[%s0 + $0x22] sm:$0x3]
  %v32 = vld [vmem:[%s0 + $0x24] sm:$0x3]
  %v33 = vld [vmem:[%s0 + $0x26] sm:$0x3]
  %v34 = vld [vmem:[%s0 + $0x28] sm:$0x3]
  %v35 = vld [vmem:[%s0 + $0x2a] sm:$0x3]
  %v36 = vld [vmem:[%s0 + $0x2c] sm:$0x3]
  %v37 = vld [vmem:[%s0 + $0x2e] sm:$0x3]
  %v38 = vld [vmem:[%s0 + $0x30] sm:$0x3]
  %v39 = vld [vmem:[%s0 + $0x32] sm:$0x3]
  %v40 = vld [vmem:[%s0 + $0x34] sm:$0x3]
  %v41 = vld [vmem:[%s0 + $0x36] sm:$0x3]
  %v42 = vld [vmem:[%s0 + $0x38] sm:$0x3]
  %v43 = vld [vmem:[%s0 + $0x3a] sm:$0x3]
  %v44 = vld [vmem:[%s0 + $0x3c] sm:$0x3]
  %v45 = vld [vmem:[%s0 + $0x3e] sm:$0x3]
  %v46 = vunpack.c.l.bf16 %v14
  %v47 = vunpack.c.l.bf16 %v15
  %v48 = vunpack.c.l.bf16 %v16
  %v49 = vunpack.c.l.bf16 %v17
  %v50 = vunpack.c.l.bf16 %v18
  %v51 = vunpack.c.l.bf16 %v19
  %v52 = vunpack.c.l.bf16 %v20
  %v53 = vunpack.c.l.bf16 %v21
  %v54 = vunpack.c.l.bf16 %v22
  %v55 = vunpack.c.l.bf16 %v23
  %v56 = vunpack.c.l.bf16 %v24
  %v57 = vunpack.c.l.bf16 %v25
  %v58 = vunpack.c.l.bf16 %v26
  %v59 = vunpack.c.l.bf16 %v27
  %v60 = vunpack.c.l.bf16 %v28
  %v61 = vunpack.c.l.bf16 %v29
  %v62 = vunpack.c.l.bf16 %v30
  %v63 = vunpack.c.l.bf16 %v31
  %v64 = vunpack.c.l.bf16 %v32
  %v65 = vunpack.c.l.bf16 %v33
  %v66 = vunpack.c.l.bf16 %v34
  %v67 = vunpack.c.l.bf16 %v35
  %v68 = vunpack.c.l.bf16 %v36
  %v69 = vunpack.c.l.bf16 %v37
  %v70 = vunpack.c.l.bf16 %v38
  %v71 = vunpack.c.l.bf16 %v39
  %v72 = vunpack.c.l.bf16 %v40
  %v73 = vunpack.c.l.bf16 %v41
  %v74 = vunpack.c.l.bf16 %v42
  %v75 = vunpack.c.l.bf16 %v43
  %v76 = vunpack.c.l.bf16 %v44
  %v77 = vunpack.c.l.bf16 %v45
  %v78 = vld [vmem:[%s1] sm:$0x1]
  %v80 = vlaneseq
  %v81 = vshrl.u32 %v80, 7
  %v82 = vsub.s32 0, %v81
  %v83 = vrot.slane %v78, %v82
  %v85 = vmul.f32 %v46, %v83
  %v86 = vmul.f32 %v47, %v83
  %v87 = vmul.f32 %v48, %v83
  %v88 = vmul.f32 %v49, %v83
  %v89 = vmul.f32 %v50, %v83
  %v90 = vmul.f32 %v51, %v83
  %v91 = vmul.f32 %v52, %v83
  %v92 = vmul.f32 %v53, %v83
  %v93 = vmul.f32 %v54, %v83
  %v94 = vmul.f32 %v55, %v83
  %v95 = vmul.f32 %v56, %v83
  %v96 = vmul.f32 %v57, %v83
  %v97 = vmul.f32 %v58, %v83
  %v98 = vmul.f32 %v59, %v83
  %v99 = vmul.f32 %v60, %v83
  %v100 = vmul.f32 %v61, %v83
  %v101 = vmul.f32 %v62, %v83
  %v102 = vmul.f32 %v63, %v83
  %v103 = vmul.f32 %v64, %v83
  %v104 = vmul.f32 %v65, %v83
  %v105 = vmul.f32 %v66, %v83
  %v106 = vmul.f32 %v67, %v83
  %v107 = vmul.f32 %v68, %v83
  %v108 = vmul.f32 %v69, %v83
  %v109 = vmul.f32 %v70, %v83
  %v110 = vmul.f32 %v71, %v83
  %v111 = vmul.f32 %v72, %v83
  %v112 = vmul.f32 %v73, %v83
  %v113 = vmul.f32 %v74, %v83
  %v114 = vmul.f32 %v75, %v83
  %v115 = vmul.f32 %v76, %v83
  %v116 = vmul.f32 %v77, %v83
  %v117 = vld [vmem:[%s2] sm:$0x1]
  %v119 = vlaneseq
  %v120 = vshrl.u32 %v119, 7
  %v121 = vsub.s32 0, %v120
  %v122 = vrot.slane %v117, %v121
  %v124 = vadd.f32 %v85, %v122
  %v125 = vadd.f32 %v86, %v122
  %v126 = vadd.f32 %v87, %v122
  %v127 = vadd.f32 %v88, %v122
  %v128 = vadd.f32 %v89, %v122
  %v129 = vadd.f32 %v90, %v122
  %v130 = vadd.f32 %v91, %v122
  %v131 = vadd.f32 %v92, %v122
  %v132 = vadd.f32 %v93, %v122
  %v133 = vadd.f32 %v94, %v122
  %v134 = vadd.f32 %v95, %v122
  %v135 = vadd.f32 %v96, %v122
  %v136 = vadd.f32 %v97, %v122
  %v137 = vadd.f32 %v98, %v122
  %v138 = vadd.f32 %v99, %v122
  %v139 = vadd.f32 %v100, %v122
  %v140 = vadd.f32 %v101, %v122
  %v141 = vadd.f32 %v102, %v122
  %v142 = vadd.f32 %v103, %v122
  %v143 = vadd.f32 %v104, %v122
  %v144 = vadd.f32 %v105, %v122
  %v145 = vadd.f32 %v106, %v122
  %v146 = vadd.f32 %v107, %v122
  %v147 = vadd.f32 %v108, %v122
  %v148 = vadd.f32 %v109, %v122
  %v149 = vadd.f32 %v110, %v122
  %v150 = vadd.f32 %v111, %v122
  %v151 = vadd.f32 %v112, %v122
  %v152 = vadd.f32 %v113, %v122
  %v153 = vadd.f32 %v114, %v122
  %v154 = vadd.f32 %v115, %v122
  %v155 = vadd.f32 %v116, %v122
  %v156 = vmax.f32 %v124, 0.0
  %v157 = vmax.f32 %v125, 0.0
  %v158 = vmax.f32 %v126, 0.0
  %v159 = vmax.f32 %v127, 0.0
  %v160 = vmax.f32 %v128, 0.0
  %v161 = vmax.f32 %v129, 0.0
  %v162 = vmax.f32 %v130, 0.0
  %v163 = vmax.f32 %v131, 0.0
  %v164 = vmax.f32 %v132, 0.0
  %v165 = vmax.f32 %v133, 0.0
  %v166 = vmax.f32 %v134, 0.0
  %v167 = vmax.f32 %v135, 0.0
  %v168 = vmax.f32 %v136, 0.0
  %v169 = vmax.f32 %v137, 0.0
  %v170 = vmax.f32 %v138, 0.0
  %v171 = vmax.f32 %v139, 0.0
  %v172 = vmax.f32 %v140, 0.0
  %v173 = vmax.f32 %v141, 0.0
  %v174 = vmax.f32 %v142, 0.0
  %v175 = vmax.f32 %v143, 0.0
  %v176 = vmax.f32 %v144, 0.0
  %v177 = vmax.f32 %v145, 0.0
  %v178 = vmax.f32 %v146, 0.0
  %v179 = vmax.f32 %v147, 0.0
  %v180 = vmax.f32 %v148, 0.0
  %v181 = vmax.f32 %v149, 0.0
  %v182 = vmax.f32 %v150, 0.0
  %v183 = vmax.f32 %v151, 0.0
  %v184 = vmax.f32 %v152, 0.0
  %v185 = vmax.f32 %v153, 0.0
  %v186 = vmax.f32 %v154, 0.0
  %v187 = vmax.f32 %v155, 0.0
  %vm188 = vcmask 1043456
  %v189 = vsel %vm188, %v156, 0.0
  %v190 = vrot.slane %v189, 4
  %v191 = vadd.f32 %v189, %v190
  %v192 = vrot.slane %v191, 2
  %v193 = vadd.f32 %v191, %v192
  %v194 = vrot.slane %v193, 1
  %v195 = vadd.f32 %v193, %v194
  %v196 = vsel %vm188, %v157, 0.0
  %v197 = vrot.slane %v196, 4
  %v198 = vadd.f32 %v196, %v197
  %v199 = vrot.slane %v198, 2
  %v200 = vadd.f32 %v198, %v199
  %v201 = vrot.slane %v200, 1
  %v202 = vadd.f32 %v200, %v201
  %v203 = vsel %vm188, %v158, 0.0
  %v204 = vrot.slane %v203, 4
  %v205 = vadd.f32 %v203, %v204
  %v206 = vrot.slane %v205, 2
  %v207 = vadd.f32 %v205, %v206
  %v208 = vrot.slane %v207, 1
  %v209 = vadd.f32 %v207, %v208
  %v210 = vsel %vm188, %v159, 0.0
  %v211 = vrot.slane %v210, 4
  %v212 = vadd.f32 %v210, %v211
  %v213 = vrot.slane %v212, 2
  %v214 = vadd.f32 %v212, %v213
  %v215 = vrot.slane %v214, 1
  %v216 = vadd.f32 %v214, %v215
  %v217 = vsel %vm188, %v160, 0.0
  %v218 = vrot.slane %v217, 4
  %v219 = vadd.f32 %v217, %v218
  %v220 = vrot.slane %v219, 2
  %v221 = vadd.f32 %v219, %v220
  %v222 = vrot.slane %v221, 1
  %v223 = vadd.f32 %v221, %v222
  %v224 = vsel %vm188, %v161, 0.0
  %v225 = vrot.slane %v224, 4
  %v226 = vadd.f32 %v224, %v225
  %v227 = vrot.slane %v226, 2
  %v228 = vadd.f32 %v226, %v227
  %v229 = vrot.slane %v228, 1
  %v230 = vadd.f32 %v228, %v229
  %v231 = vsel %vm188, %v162, 0.0
  %v232 = vrot.slane %v231, 4
  %v233 = vadd.f32 %v231, %v232
  %v234 = vrot.slane %v233, 2
  %v235 = vadd.f32 %v233, %v234
  %v236 = vrot.slane %v235, 1
  %v237 = vadd.f32 %v235, %v236
  %v238 = vsel %vm188, %v163, 0.0
  %v239 = vrot.slane %v238, 4
  %v240 = vadd.f32 %v238, %v239
  %v241 = vrot.slane %v240, 2
  %v242 = vadd.f32 %v240, %v241
  %v243 = vrot.slane %v242, 1
  %v244 = vadd.f32 %v242, %v243
  %v245 = vsel %vm188, %v164, 0.0
  %v246 = vrot.slane %v245, 4
  %v247 = vadd.f32 %v245, %v246
  %v248 = vrot.slane %v247, 2
  %v249 = vadd.f32 %v247, %v248
  %v250 = vrot.slane %v249, 1
  %v251 = vadd.f32 %v249, %v250
  %v252 = vsel %vm188, %v165, 0.0
  %v253 = vrot.slane %v252, 4
  %v254 = vadd.f32 %v252, %v253
  %v255 = vrot.slane %v254, 2
  %v256 = vadd.f32 %v254, %v255
  %v257 = vrot.slane %v256, 1
  %v258 = vadd.f32 %v256, %v257
  %v259 = vsel %vm188, %v166, 0.0
  %v260 = vrot.slane %v259, 4
  %v261 = vadd.f32 %v259, %v260
  %v262 = vrot.slane %v261, 2
  %v263 = vadd.f32 %v261, %v262
  %v264 = vrot.slane %v263, 1
  %v265 = vadd.f32 %v263, %v264
  %v266 = vsel %vm188, %v167, 0.0
  %v267 = vrot.slane %v266, 4
  %v268 = vadd.f32 %v266, %v267
  %v269 = vrot.slane %v268, 2
  %v270 = vadd.f32 %v268, %v269
  %v271 = vrot.slane %v270, 1
  %v272 = vadd.f32 %v270, %v271
  %v273 = vsel %vm188, %v168, 0.0
  %v274 = vrot.slane %v273, 4
  %v275 = vadd.f32 %v273, %v274
  %v276 = vrot.slane %v275, 2
  %v277 = vadd.f32 %v275, %v276
  %v278 = vrot.slane %v277, 1
  %v279 = vadd.f32 %v277, %v278
  %v280 = vsel %vm188, %v169, 0.0
  %v281 = vrot.slane %v280, 4
  %v282 = vadd.f32 %v280, %v281
  %v283 = vrot.slane %v282, 2
  %v284 = vadd.f32 %v282, %v283
  %v285 = vrot.slane %v284, 1
  %v286 = vadd.f32 %v284, %v285
  %v287 = vsel %vm188, %v170, 0.0
  %v288 = vrot.slane %v287, 4
  %v289 = vadd.f32 %v287, %v288
  %v290 = vrot.slane %v289, 2
  %v291 = vadd.f32 %v289, %v290
  %v292 = vrot.slane %v291, 1
  %v293 = vadd.f32 %v291, %v292
  %v294 = vsel %vm188, %v171, 0.0
  %v295 = vrot.slane %v294, 4
  %v296 = vadd.f32 %v294, %v295
  %v297 = vrot.slane %v296, 2
  %v298 = vadd.f32 %v296, %v297
  %v299 = vrot.slane %v298, 1
  %v300 = vadd.f32 %v298, %v299
  %v301 = vsel %vm188, %v172, 0.0
  %v302 = vrot.slane %v301, 4
  %v303 = vadd.f32 %v301, %v302
  %v304 = vrot.slane %v303, 2
  %v305 = vadd.f32 %v303, %v304
  %v306 = vrot.slane %v305, 1
  %v307 = vadd.f32 %v305, %v306
  %v308 = vsel %vm188, %v173, 0.0
  %v309 = vrot.slane %v308, 4
  %v310 = vadd.f32 %v308, %v309
  %v311 = vrot.slane %v310, 2
  %v312 = vadd.f32 %v310, %v311
  %v313 = vrot.slane %v312, 1
  %v314 = vadd.f32 %v312, %v313
  %v315 = vsel %vm188, %v174, 0.0
  %v316 = vrot.slane %v315, 4
  %v317 = vadd.f32 %v315, %v316
  %v318 = vrot.slane %v317, 2
  %v319 = vadd.f32 %v317, %v318
  %v320 = vrot.slane %v319, 1
  %v321 = vadd.f32 %v319, %v320
  %v322 = vsel %vm188, %v175, 0.0
  %v323 = vrot.slane %v322, 4
  %v324 = vadd.f32 %v322, %v323
  %v325 = vrot.slane %v324, 2
  %v326 = vadd.f32 %v324, %v325
  %v327 = vrot.slane %v326, 1
  %v328 = vadd.f32 %v326, %v327
  %v329 = vsel %vm188, %v176, 0.0
  %v330 = vrot.slane %v329, 4
  %v331 = vadd.f32 %v329, %v330
  %v332 = vrot.slane %v331, 2
  %v333 = vadd.f32 %v331, %v332
  %v334 = vrot.slane %v333, 1
  %v335 = vadd.f32 %v333, %v334
  %v336 = vsel %vm188, %v177, 0.0
  %v337 = vrot.slane %v336, 4
  %v338 = vadd.f32 %v336, %v337
  %v339 = vrot.slane %v338, 2
  %v340 = vadd.f32 %v338, %v339
  %v341 = vrot.slane %v340, 1
  %v342 = vadd.f32 %v340, %v341
  %v343 = vsel %vm188, %v178, 0.0
  %v344 = vrot.slane %v343, 4
  %v345 = vadd.f32 %v343, %v344
  %v346 = vrot.slane %v345, 2
  %v347 = vadd.f32 %v345, %v346
  %v348 = vrot.slane %v347, 1
  %v349 = vadd.f32 %v347, %v348
  %v350 = vsel %vm188, %v179, 0.0
  %v351 = vrot.slane %v350, 4
  %v352 = vadd.f32 %v350, %v351
  %v353 = vrot.slane %v352, 2
  %v354 = vadd.f32 %v352, %v353
  %v355 = vrot.slane %v354, 1
  %v356 = vadd.f32 %v354, %v355
  %v357 = vsel %vm188, %v180, 0.0
  %v358 = vrot.slane %v357, 4
  %v359 = vadd.f32 %v357, %v358
  %v360 = vrot.slane %v359, 2
  %v361 = vadd.f32 %v359, %v360
  %v362 = vrot.slane %v361, 1
  %v363 = vadd.f32 %v361, %v362
  %v364 = vsel %vm188, %v181, 0.0
  %v365 = vrot.slane %v364, 4
  %v366 = vadd.f32 %v364, %v365
  %v367 = vrot.slane %v366, 2
  %v368 = vadd.f32 %v366, %v367
  %v369 = vrot.slane %v368, 1
  %v370 = vadd.f32 %v368, %v369
  %v371 = vsel %vm188, %v182, 0.0
  %v372 = vrot.slane %v371, 4
  %v373 = vadd.f32 %v371, %v372
  %v374 = vrot.slane %v373, 2
  %v375 = vadd.f32 %v373, %v374
  %v376 = vrot.slane %v375, 1
  %v377 = vadd.f32 %v375, %v376
  %v378 = vsel %vm188, %v183, 0.0
  %v379 = vrot.slane %v378, 4
  %v380 = vadd.f32 %v378, %v379
  %v381 = vrot.slane %v380, 2
  %v382 = vadd.f32 %v380, %v381
  %v383 = vrot.slane %v382, 1
  %v384 = vadd.f32 %v382, %v383
  %v385 = vsel %vm188, %v184, 0.0
  %v386 = vrot.slane %v385, 4
  %v387 = vadd.f32 %v385, %v386
  %v388 = vrot.slane %v387, 2
  %v389 = vadd.f32 %v387, %v388
  %v390 = vrot.slane %v389, 1
  %v391 = vadd.f32 %v389, %v390
  %v392 = vsel %vm188, %v185, 0.0
  %v393 = vrot.slane %v392, 4
  %v394 = vadd.f32 %v392, %v393
  %v395 = vrot.slane %v394, 2
  %v396 = vadd.f32 %v394, %v395
  %v397 = vrot.slane %v396, 1
  %v398 = vadd.f32 %v396, %v397
  %v399 = vsel %vm188, %v186, 0.0
  %v400 = vrot.slane %v399, 4
  %v401 = vadd.f32 %v399, %v400
  %v402 = vrot.slane %v401, 2
  %v403 = vadd.f32 %v401, %v402
  %v404 = vrot.slane %v403, 1
  %v405 = vadd.f32 %v403, %v404
  %v406 = vsel %vm188, %v187, 0.0
  %v407 = vrot.slane %v406, 4
  %v408 = vadd.f32 %v406, %v407
  %v409 = vrot.slane %v408, 2
  %v410 = vadd.f32 %v408, %v409
  %v411 = vrot.slane %v410, 1
  %v412 = vadd.f32 %v410, %v411
  %vm445 = vcmask 1041409
  %v446 = vsel %vm445, %v202, %v195
  %vm447 = vcmask 1042434
  %v448 = vsel %vm447, %v209, %v446
  %vm449 = vcmask 1043459
  %v450 = vsel %vm449, %v216, %v448
  %vm451 = vcmask 1044484
  %v452 = vsel %vm451, %v223, %v450
  %vm453 = vcmask 1045509
  %v454 = vsel %vm453, %v230, %v452
  %vm455 = vcmask 1046534
  %v456 = vsel %vm455, %v237, %v454
  %vm457 = vcmask 1047559
  %v458 = vsel %vm457, %v244, %v456
  %v459 = vsel %vm445, %v258, %v251
  %v460 = vsel %vm447, %v265, %v459
  %v461 = vsel %vm449, %v272, %v460
  %v462 = vsel %vm451, %v279, %v461
  %v463 = vsel %vm453, %v286, %v462
  %v464 = vsel %vm455, %v293, %v463
  %v465 = vsel %vm457, %v300, %v464
  %v466 = vsel %vm445, %v314, %v307
  %v467 = vsel %vm447, %v321, %v466
  %v468 = vsel %vm449, %v328, %v467
  %v469 = vsel %vm451, %v335, %v468
  %v470 = vsel %vm453, %v342, %v469
  %v471 = vsel %vm455, %v349, %v470
  %v472 = vsel %vm457, %v356, %v471
  %v473 = vsel %vm445, %v370, %v363
  %v474 = vsel %vm447, %v377, %v473
  %v475 = vsel %vm449, %v384, %v474
  %v476 = vsel %vm451, %v391, %v475
  %v477 = vsel %vm453, %v398, %v476
  %v478 = vsel %vm455, %v405, %v477
  %v479 = vsel %vm457, %v412, %v478
  %484 = vst [vmem:[%s3] sm:$0xff] %v458
  %485 = vst [vmem:[%s3 + $0x8] sm:$0xff] %v465
  %486 = vst [vmem:[%s3 + $0x10] sm:$0xff] %v472
  %487 = vst [vmem:[%s3 + $0x18] sm:$0xff] %v479
  // Predicated region
  $region14: #{refine_block_forward.19} parent=0 // pred_check
    _
  $region15: #{refine_block_forward.19} parent=0 // pred_check_branch
    %489 = sbr.rel (0) target = $region17
  $region16: #{refine_block_forward.19} parent=0 // pred_region
    _
  $region17: #{refine_block_forward.19} parent=0 // pred_fallthru
    _
  // Predicated region
  $region18: #{refine_block_forward.19} parent=0 // pred_check
    _
  $region19: #{refine_block_forward.19} parent=0 // pred_check_branch
    %491 = sbr.rel (0) target = $region21
  $region20: #{refine_block_forward.19} parent=0 // pred_region
    _
  $region21: #{refine_block_forward.19} parent=0 // pred_fallthru
    _

// kernel: refine_block_forward.18
$region0: #{refine_block_forward.18}
  #allocation0 [shape = 'u32[]', space=smem, size = 0x4, offset = 0x4, fixed_abs, tag = 'smem constant byte address 0x4 - core index']
  #allocation1 [shape = 'u32[144,128]{1,0:T(1,128)}', space=vmem, size = 0x12000, scoped, tag = 'internal scratch']
  %s0 = inlined_call_operand.vmem [shape: bf16[128,128], index: 0, kind: input, shape index: {}]
  %s1 = inlined_call_operand.vmem [shape: f32[1,128], index: 1, kind: input, shape index: {}]
  %s2 = inlined_call_operand.vmem [shape: f32[1,128], index: 2, kind: input, shape index: {}]
  %s3 = inlined_call_operand.vmem [shape: bf16[128,128], index: 3, kind: input, shape index: {}]
  %s4 = inlined_call_operand.vmem [shape: bf16[128,128], index: 4, kind: output, shape index: {0}]
  %s5 = inlined_call_operand.vmem [shape: f32[1,2,128], index: 5, kind: output, shape index: {1}]
  %6 = xla_tuple %s4, %s5
  %s7 = sld [smem:[#allocation0]]
  $region34: #{refine_block_forward.18} parent=0
    _
  %s9 = ssub.s32 1, %s7
  %s10 = scalar_select 0, %s9, %s7
  // Predicated region
  $region2: #{refine_block_forward.18} parent=0 // pred_check
    _
  $region3: #{refine_block_forward.18} parent=0 // pred_check_branch
    %12 = sbr.rel (0) target = $region5
  $region4: #{refine_block_forward.18} parent=0 // pred_region
    _
  $region5: #{refine_block_forward.18} parent=0 // pred_fallthru
    _
  // Predicated region
  $region6: #{refine_block_forward.18} parent=0 // pred_check
    _
  $region7: #{refine_block_forward.18} parent=0 // pred_check_branch
    %14 = sbr.rel (0) target = $region9
  $region8: #{refine_block_forward.18} parent=0 // pred_region
    _
  $region9: #{refine_block_forward.18} parent=0 // pred_fallthru
    _
  // Predicated region
  $region10: #{refine_block_forward.18} parent=0 // pred_check
    _
  $region11: #{refine_block_forward.18} parent=0 // pred_check_branch
    %16 = sbr.rel (0) target = $region13
  $region12: #{refine_block_forward.18} parent=0 // pred_region
    _
  $region13: #{refine_block_forward.18} parent=0 // pred_fallthru
    _
  // Predicated region
  $region14: #{refine_block_forward.18} parent=0 // pred_check
    _
  $region15: #{refine_block_forward.18} parent=0 // pred_check_branch
    %18 = sbr.rel (0) target = $region17
  $region16: #{refine_block_forward.18} parent=0 // pred_region
    _
  $region17: #{refine_block_forward.18} parent=0 // pred_fallthru
    _
  %v20 = vld [vmem:[%s0] sm:$0xf]
  %v21 = vld [vmem:[%s0 + $0x4] sm:$0xf]
  %v22 = vld [vmem:[%s0 + $0x8] sm:$0xf]
  %v23 = vld [vmem:[%s0 + $0xc] sm:$0xf]
  %v24 = vld [vmem:[%s0 + $0x10] sm:$0xf]
  %v25 = vld [vmem:[%s0 + $0x14] sm:$0xf]
  %v26 = vld [vmem:[%s0 + $0x18] sm:$0xf]
  %v27 = vld [vmem:[%s0 + $0x1c] sm:$0xf]
  %v28 = vld [vmem:[%s0 + $0x20] sm:$0xf]
  %v29 = vld [vmem:[%s0 + $0x24] sm:$0xf]
  %v30 = vld [vmem:[%s0 + $0x28] sm:$0xf]
  %v31 = vld [vmem:[%s0 + $0x2c] sm:$0xf]
  %v32 = vld [vmem:[%s0 + $0x30] sm:$0xf]
  %v33 = vld [vmem:[%s0 + $0x34] sm:$0xf]
  %v34 = vld [vmem:[%s0 + $0x38] sm:$0xf]
  %v35 = vld [vmem:[%s0 + $0x3c] sm:$0xf]
  %v36 = vunpack.c.l.bf16 %v20
  %v37 = vunpack.c.l.bf16 %v21
  %v38 = vunpack.c.l.bf16 %v22
  %v39 = vunpack.c.l.bf16 %v23
  %v40 = vunpack.c.l.bf16 %v24
  %v41 = vunpack.c.l.bf16 %v25
  %v42 = vunpack.c.l.bf16 %v26
  %v43 = vunpack.c.l.bf16 %v27
  %v44 = vunpack.c.l.bf16 %v28
  %v45 = vunpack.c.l.bf16 %v29
  %v46 = vunpack.c.l.bf16 %v30
  %v47 = vunpack.c.l.bf16 %v31
  %v48 = vunpack.c.l.bf16 %v32
  %v49 = vunpack.c.l.bf16 %v33
  %v50 = vunpack.c.l.bf16 %v34
  %v51 = vunpack.c.l.bf16 %v35
  %v52 = vld [vmem:[%s1] sm:$0x1]
  %v54 = vlaneseq
  %v55 = vshrl.u32 %v54, 7
  %v56 = vsub.s32 0, %v55
  %v57 = vrot.slane %v52, %v56
  %v59 = vmul.f32 %v36, %v57
  %v60 = vmul.f32 %v37, %v57
  %v61 = vmul.f32 %v38, %v57
  %v62 = vmul.f32 %v39, %v57
  %v63 = vmul.f32 %v40, %v57
  %v64 = vmul.f32 %v41, %v57
  %v65 = vmul.f32 %v42, %v57
  %v66 = vmul.f32 %v43, %v57
  %v67 = vmul.f32 %v44, %v57
  %v68 = vmul.f32 %v45, %v57
  %v69 = vmul.f32 %v46, %v57
  %v70 = vmul.f32 %v47, %v57
  %v71 = vmul.f32 %v48, %v57
  %v72 = vmul.f32 %v49, %v57
  %v73 = vmul.f32 %v50, %v57
  %v74 = vmul.f32 %v51, %v57
  %v75 = vld [vmem:[%s2] sm:$0x1]
  %v77 = vlaneseq
  %v78 = vshrl.u32 %v77, 7
  %v79 = vsub.s32 0, %v78
  %v80 = vrot.slane %v75, %v79
  %v82 = vadd.f32 %v59, %v80
  %v83 = vadd.f32 %v60, %v80
  %v84 = vadd.f32 %v61, %v80
  %v85 = vadd.f32 %v62, %v80
  %v86 = vadd.f32 %v63, %v80
  %v87 = vadd.f32 %v64, %v80
  %v88 = vadd.f32 %v65, %v80
  %v89 = vadd.f32 %v66, %v80
  %v90 = vadd.f32 %v67, %v80
  %v91 = vadd.f32 %v68, %v80
  %v92 = vadd.f32 %v69, %v80
  %v93 = vadd.f32 %v70, %v80
  %v94 = vadd.f32 %v71, %v80
  %v95 = vadd.f32 %v72, %v80
  %v96 = vadd.f32 %v73, %v80
  %v97 = vadd.f32 %v74, %v80
  %v98 = vmax.f32 %v82, 0.0
  %v99 = vmax.f32 %v83, 0.0
  %v100 = vmax.f32 %v84, 0.0
  %v101 = vmax.f32 %v85, 0.0
  %v102 = vmax.f32 %v86, 0.0
  %v103 = vmax.f32 %v87, 0.0
  %v104 = vmax.f32 %v88, 0.0
  %v105 = vmax.f32 %v89, 0.0
  %v106 = vmax.f32 %v90, 0.0
  %v107 = vmax.f32 %v91, 0.0
  %v108 = vmax.f32 %v92, 0.0
  %v109 = vmax.f32 %v93, 0.0
  %v110 = vmax.f32 %v94, 0.0
  %v111 = vmax.f32 %v95, 0.0
  %v112 = vmax.f32 %v96, 0.0
  %v113 = vmax.f32 %v97, 0.0
  %v114 = vpack.c.bf16 %v99, %v98
  %v115 = vpack.c.bf16 %v101, %v100
  %v116 = vpack.c.bf16 %v103, %v102
  %v117 = vpack.c.bf16 %v105, %v104
  %v118 = vpack.c.bf16 %v107, %v106
  %v119 = vpack.c.bf16 %v109, %v108
  %v120 = vpack.c.bf16 %v111, %v110
  %v121 = vpack.c.bf16 %v113, %v112
  %v122 = vld [vmem:[%s3] sm:$0xf]
  %v123 = vld [vmem:[%s3 + $0x4] sm:$0xf]
  %v124 = vld [vmem:[%s3 + $0x8] sm:$0xf]
  %v125 = vld [vmem:[%s3 + $0xc] sm:$0xf]
  %v126 = vld [vmem:[%s3 + $0x10] sm:$0xf]
  %v127 = vld [vmem:[%s3 + $0x14] sm:$0xf]
  %v128 = vld [vmem:[%s3 + $0x18] sm:$0xf]
  %v129 = vld [vmem:[%s3 + $0x1c] sm:$0xf]
  %v130 = vld [vmem:[%s3 + $0x20] sm:$0xf]
  %v131 = vld [vmem:[%s3 + $0x24] sm:$0xf]
  %v132 = vld [vmem:[%s3 + $0x28] sm:$0xf]
  %v133 = vld [vmem:[%s3 + $0x2c] sm:$0xf]
  %v134 = vld [vmem:[%s3 + $0x30] sm:$0xf]
  %v135 = vld [vmem:[%s3 + $0x34] sm:$0xf]
  %v136 = vld [vmem:[%s3 + $0x38] sm:$0xf]
  %v137 = vld [vmem:[%s3 + $0x3c] sm:$0xf]
  %v154 = vunpack.c.l.b16 %v122
  %v155 = vunpack.c.l.b16 %v123
  %v156 = vunpack.c.l.b16 %v124
  %v157 = vunpack.c.l.b16 %v125
  %v158 = vunpack.c.l.b16 %v126
  %v159 = vunpack.c.l.b16 %v127
  %v160 = vunpack.c.l.b16 %v128
  %v161 = vunpack.c.l.b16 %v129
  %v162 = vunpack.c.l.b16 %v130
  %v163 = vunpack.c.l.b16 %v131
  %v164 = vunpack.c.l.b16 %v132
  %v165 = vunpack.c.l.b16 %v133
  %v166 = vunpack.c.l.b16 %v134
  %v167 = vunpack.c.l.b16 %v135
  %v168 = vunpack.c.l.b16 %v136
  %v169 = vunpack.c.l.b16 %v137
  %v170 = vpack.c.b16 %v155, %v154
  %v171 = vpack.c.b16 %v157, %v156
  %v172 = vpack.c.b16 %v159, %v158
  %v173 = vpack.c.b16 %v161, %v160
  %v174 = vpack.c.b16 %v163, %v162
  %v175 = vpack.c.b16 %v165, %v164
  %v176 = vpack.c.b16 %v167, %v166
  %v177 = vpack.c.b16 %v169, %v168
  %186 = vmatprep.subr.bf16.mxu0 0
  %187 = vmatpush1.bf16.msra.mxu0 %v170
  %188 = vmatprep.subr.bf16.mxu0 0
  %189 = vmatpush1.bf16.msra.mxu0 %v171
  %190 = vmatprep.subr.bf16.mxu0 0
  %191 = vmatpush1.bf16.msra.mxu0 %v172
  %192 = vmatprep.subr.bf16.mxu0 0
  %193 = vmatpush1.bf16.msra.mxu0 %v173
  %194 = vmatprep.subr.bf16.mxu0 0
  %195 = vmatpush1.bf16.msra.mxu0 %v174
  %196 = vmatprep.subr.bf16.mxu0 0
  %197 = vmatpush1.bf16.msra.mxu0 %v175
  %198 = vmatprep.subr.bf16.mxu0 0
  %199 = vmatpush1.bf16.msra.mxu0 %v176
  %200 = vmatprep.subr.bf16.mxu0 0
  %201 = vmatpush1.bf16.msra.mxu0 %v177
  %202 = vmatprep.subr.bf16.mxu0 0
  %203 = vmatpush1.bf16.msra.mxu0 0
  %204 = vmatprep.subr.bf16.mxu0 0
  %205 = vmatpush1.bf16.msra.mxu0 0
  %206 = vmatprep.subr.bf16.mxu0 0
  %207 = vmatpush1.bf16.msra.mxu0 0
  %208 = vmatprep.subr.bf16.mxu0 0
  %209 = vmatpush1.bf16.msra.mxu0 0
  %210 = vmatprep.subr.bf16.mxu0 0
  %211 = vmatpush1.bf16.msra.mxu0 0
  %212 = vmatprep.subr.bf16.mxu0 0
  %213 = vmatpush1.bf16.msra.mxu0 0
  %214 = vmatprep.subr.bf16.mxu0 0
  %215 = vmatpush1.bf16.msra.mxu0 0
  %216 = vmatprep.subr.bf16.mxu0 0
  %217 = vmatpush1.bf16.msra.mxu0 0
  %218 = vmatprep.mubr.bf16.mxu0 0
  %219 = vmatmul.mubr.bf16.gmra.mrb[0].mxu0 %v114
  %v220 = vpop.f32.mrb[0].mxu0
  %v221 = vadd.f32 0.0, %v220
  %v222 = vpop.f32.mrb[0].mxu0
  %v223 = vpop.f32.mrb[0].mxu0
  %v224 = vadd.f32 0.0, %v223
  %v225 = vpop.f32.mrb[0].mxu0
  %226 = vmatprep.mubr.bf16.mxu0 0
  %227 = vmatmul.mubr.bf16.gmra.mrb[0].mxu0 %v115
  %v228 = vpop.f32.mrb[0].mxu0
  %v229 = vadd.f32 0.0, %v228
  %v230 = vpop.f32.mrb[0].mxu0
  %v231 = vpop.f32.mrb[0].mxu0
  %v232 = vadd.f32 0.0, %v231
  %v233 = vpop.f32.mrb[0].mxu0
  %234 = vmatprep.mubr.bf16.mxu0 0
  %235 = vmatmul.mubr.bf16.gmra.mrb[0].mxu0 %v116
  %v236 = vpop.f32.mrb[0].mxu0
  %v237 = vadd.f32 0.0, %v236
  %v238 = vpop.f32.mrb[0].mxu0
  %v239 = vpop.f32.mrb[0].mxu0
  %v240 = vadd.f32 0.0, %v239
  %v241 = vpop.f32.mrb[0].mxu0
  %242 = vmatprep.mubr.bf16.mxu0 0
  %243 = vmatmul.mubr.bf16.gmra.mrb[0].mxu0 %v117
  %v244 = vpop.f32.mrb[0].mxu0
  %v245 = vadd.f32 0.0, %v244
  %v246 = vpop.f32.mrb[0].mxu0
  %v247 = vpop.f32.mrb[0].mxu0
  %v248 = vadd.f32 0.0, %v247
  %v249 = vpop.f32.mrb[0].mxu0
  %250 = vmatprep.mubr.bf16.mxu0 0
  %251 = vmatmul.mubr.bf16.gmra.mrb[0].mxu0 %v118
  %v252 = vpop.f32.mrb[0].mxu0
  %v253 = vadd.f32 0.0, %v252
  %v254 = vpop.f32.mrb[0].mxu0
  %v255 = vpop.f32.mrb[0].mxu0
  %v256 = vadd.f32 0.0, %v255
  %v257 = vpop.f32.mrb[0].mxu0
  %258 = vmatprep.mubr.bf16.mxu0 0
  %259 = vmatmul.mubr.bf16.gmra.mrb[0].mxu0 %v119
  %v260 = vpop.f32.mrb[0].mxu0
  %v261 = vadd.f32 0.0, %v260
  %v262 = vpop.f32.mrb[0].mxu0
  %v263 = vpop.f32.mrb[0].mxu0
  %v264 = vadd.f32 0.0, %v263
  %v265 = vpop.f32.mrb[0].mxu0
  %266 = vmatprep.mubr.bf16.mxu0 0
  %267 = vmatmul.mubr.bf16.gmra.mrb[0].mxu0 %v120
  %v268 = vpop.f32.mrb[0].mxu0
  %v269 = vadd.f32 0.0, %v268
  %v270 = vpop.f32.mrb[0].mxu0
  %v271 = vpop.f32.mrb[0].mxu0
  %v272 = vadd.f32 0.0, %v271
  %v273 = vpop.f32.mrb[0].mxu0
  %274 = vmatprep.mubr.bf16.mxu0 0
  %275 = vmatmul.mubr.bf16.gmra.mrb[0].mxu0 %v121
  %v276 = vpop.f32.mrb[0].mxu0
  %v277 = vadd.f32 0.0, %v276
  %v278 = vpop.f32.mrb[0].mxu0
  %v279 = vpop.f32.mrb[0].mxu0
  %v280 = vadd.f32 0.0, %v279
  %v281 = vpop.f32.mrb[0].mxu0
  %282 = vdwg.mxu0
  %v283 = vpack.c.bf16 %v224, %v221
  %v284 = vpack.c.bf16 %v232, %v229
  %v285 = vpack.c.bf16 %v240, %v237
  %v286 = vpack.c.bf16 %v248, %v245
  %v287 = vpack.c.bf16 %v256, %v253
  %v288 = vpack.c.bf16 %v264, %v261
  %v289 = vpack.c.bf16 %v272, %v269
  %v290 = vpack.c.bf16 %v280, %v277
  %v299 = vunpack.c.l.b16 %v283
  %v300 = vunpack.c.h.b16 %v283
  %v301 = vunpack.c.l.b16 %v284
  %v302 = vunpack.c.h.b16 %v284
  %v303 = vunpack.c.l.b16 %v285
  %v304 = vunpack.c.h.b16 %v285
  %v305 = vunpack.c.l.b16 %v286
  %v306 = vunpack.c.h.b16 %v286
  %v307 = vunpack.c.l.b16 %v287
  %v308 = vunpack.c.h.b16 %v287
  %v309 = vunpack.c.l.b16 %v288
  %v310 = vunpack.c.h.b16 %v288
  %v311 = vunpack.c.l.b16 %v289
  %v312 = vunpack.c.h.b16 %v289
  %v313 = vunpack.c.l.b16 %v290
  %v314 = vunpack.c.h.b16 %v290
  %v315 = vpack.c.b16 %v299, %v299
  %v316 = vpack.c.b16 %v300, %v300
  %v317 = vpack.c.b16 %v301, %v301
  %v318 = vpack.c.b16 %v302, %v302
  %v319 = vpack.c.b16 %v303, %v303
  %v320 = vpack.c.b16 %v304, %v304
  %v321 = vpack.c.b16 %v305, %v305
  %v322 = vpack.c.b16 %v306, %v306
  %v323 = vpack.c.b16 %v307, %v307
  %v324 = vpack.c.b16 %v308, %v308
  %v325 = vpack.c.b16 %v309, %v309
  %v326 = vpack.c.b16 %v310, %v310
  %v327 = vpack.c.b16 %v311, %v311
  %v328 = vpack.c.b16 %v312, %v312
  %v329 = vpack.c.b16 %v313, %v313
  %v330 = vpack.c.b16 %v314, %v314
  %347 = vst [vmem:[%s4] sm:$0xf] %v315
  %348 = vst [vmem:[%s4 + $0x4] sm:$0xf] %v316
  %349 = vst [vmem:[%s4 + $0x8] sm:$0xf] %v317
  %350 = vst [vmem:[%s4 + $0xc] sm:$0xf] %v318
  %351 = vst [vmem:[%s4 + $0x10] sm:$0xf] %v319
  %352 = vst [vmem:[%s4 + $0x14] sm:$0xf] %v320
  %353 = vst [vmem:[%s4 + $0x18] sm:$0xf] %v321
  %354 = vst [vmem:[%s4 + $0x1c] sm:$0xf] %v322
  %355 = vst [vmem:[%s4 + $0x20] sm:$0xf] %v323
  %356 = vst [vmem:[%s4 + $0x24] sm:$0xf] %v324
  %357 = vst [vmem:[%s4 + $0x28] sm:$0xf] %v325
  %358 = vst [vmem:[%s4 + $0x2c] sm:$0xf] %v326
  %359 = vst [vmem:[%s4 + $0x30] sm:$0xf] %v327
  %360 = vst [vmem:[%s4 + $0x34] sm:$0xf] %v328
  %361 = vst [vmem:[%s4 + $0x38] sm:$0xf] %v329
  %362 = vst [vmem:[%s4 + $0x3c] sm:$0xf] %v330
  %v363 = vadd.f32 %v221, %v224
  %v364 = vadd.f32 %v363, %v229
  %v365 = vadd.f32 %v364, %v232
  %v366 = vadd.f32 %v365, %v237
  %v367 = vadd.f32 %v366, %v240
  %v368 = vadd.f32 %v367, %v245
  %v369 = vadd.f32 %v368, %v248
  %v370 = vadd.f32 %v369, %v253
  %v371 = vadd.f32 %v370, %v256
  %v372 = vadd.f32 %v371, %v261
  %v373 = vadd.f32 %v372, %v264
  %v374 = vadd.f32 %v373, %v269
  %v375 = vadd.f32 %v374, %v272
  %v376 = vadd.f32 %v375, %v277
  %v377 = vadd.f32 %v376, %v280
  %v378 = vrot.slane %v377, 4
  %v379 = vadd.f32 %v377, %v378
  %v380 = vrot.slane %v379, 2
  %v381 = vadd.f32 %v379, %v380
  %v382 = vrot.slane %v381, 1
  %v383 = vadd.f32 %v381, %v382
  %v384 = vmul.f32 %v221, %v221
  %v385 = vmul.f32 %v224, %v224
  %v386 = vmul.f32 %v229, %v229
  %v387 = vmul.f32 %v232, %v232
  %v388 = vmul.f32 %v237, %v237
  %v389 = vmul.f32 %v240, %v240
  %v390 = vmul.f32 %v245, %v245
  %v391 = vmul.f32 %v248, %v248
  %v392 = vmul.f32 %v253, %v253
  %v393 = vmul.f32 %v256, %v256
  %v394 = vmul.f32 %v261, %v261
  %v395 = vmul.f32 %v264, %v264
  %v396 = vmul.f32 %v269, %v269
  %v397 = vmul.f32 %v272, %v272
  %v398 = vmul.f32 %v277, %v277
  %v399 = vmul.f32 %v280, %v280
  %v400 = vadd.f32 %v384, %v385
  %v401 = vadd.f32 %v400, %v386
  %v402 = vadd.f32 %v401, %v387
  %v403 = vadd.f32 %v402, %v388
  %v404 = vadd.f32 %v403, %v389
  %v405 = vadd.f32 %v404, %v390
  %v406 = vadd.f32 %v405, %v391
  %v407 = vadd.f32 %v406, %v392
  %v408 = vadd.f32 %v407, %v393
  %v409 = vadd.f32 %v408, %v394
  %v410 = vadd.f32 %v409, %v395
  %v411 = vadd.f32 %v410, %v396
  %v412 = vadd.f32 %v411, %v397
  %v413 = vadd.f32 %v412, %v398
  %v414 = vadd.f32 %v413, %v399
  %v415 = vrot.slane %v414, 4
  %v416 = vadd.f32 %v414, %v415
  %v417 = vrot.slane %v416, 2
  %v418 = vadd.f32 %v416, %v417
  %v419 = vrot.slane %v418, 1
  %v420 = vadd.f32 %v418, %v419
  %vm421 = vcmask 1040384
  %v422 = vsel %vm421, %v383, %v420
  %423 = vst [vmem:[%s5] sm:$0x3] %v422
  // Predicated region
  $region18: #{refine_block_forward.18} parent=0 // pred_check
    _
  $region19: #{refine_block_forward.18} parent=0 // pred_check_branch
    %425 = sbr.rel (0) target = $region21
  $region20: #{refine_block_forward.18} parent=0 // pred_region
    _
  $region21: #{refine_block_forward.18} parent=0 // pred_fallthru
    _
  // Predicated region
  $region22: #{refine_block_forward.18} parent=0 // pred_check
    _
  $region23: #{refine_block_forward.18} parent=0 // pred_check_branch
    %427 = sbr.rel (0) target = $region25
  $region24: #{refine_block_forward.18} parent=0 // pred_region
    _
  $region25: #{refine_block_forward.18} parent=0 // pred_fallthru
    _
  // Predicated region
  $region26: #{refine_block_forward.18} parent=0 // pred_check
    _
  $region27: #{refine_block_forward.18} parent=0 // pred_check_branch
    %429 = sbr.rel (0) target = $region29
  $region28: #{refine_block_forward.18} parent=0 // pred_region
    _
  $region29: #{refine_block_forward.18} parent=0 // pred_fallthru
    _
  // Predicated region
  $region30: #{refine_block_forward.18} parent=0 // pred_check
    _
  $region31: #{refine_block_forward.18} parent=0 // pred_check_branch
    %431 = sbr.rel (0) target = $region33
  $region32: #{refine_block_forward.18} parent=0 // pred_region
    _
  $region33: #{refine_block_forward.18} parent=0 // pred_fallthru
    _

// kernel: refine_block_forward.20
$region0: #{refine_block_forward.20}
  #allocation0 [shape = 'u32[]', space=smem, size = 0x4, offset = 0x4, fixed_abs, tag = 'smem constant byte address 0x4 - core index']
  #allocation1 [shape = 'u32[144,128]{1,0:T(1,128)}', space=vmem, size = 0x12000, scoped, tag = 'internal scratch']
  %s0 = inlined_call_operand.vmem [shape: f32[256,67], index: 0, kind: input, shape index: {}]
  %s1 = inlined_call_operand.vmem [shape: bf16[67,128], index: 1, kind: input, shape index: {}]
  %s2 = inlined_call_operand.vmem [shape: bf16[256,128], index: 2, kind: output, shape index: {0}]
  %s3 = inlined_call_operand.vmem [shape: f32[1,2,128], index: 3, kind: output, shape index: {1}]
  %4 = xla_tuple %s2, %s3
  %s5 = sld [smem:[#allocation0]]
  $region26: #{refine_block_forward.20} parent=0
    _
  %s7 = ssub.s32 1, %s5
  %s8 = scalar_select 0, %s7, %s5
  // Predicated region
  $region2: #{refine_block_forward.20} parent=0 // pred_check
    _
  $region3: #{refine_block_forward.20} parent=0 // pred_check_branch
    %10 = sbr.rel (0) target = $region5
  $region4: #{refine_block_forward.20} parent=0 // pred_region
    _
  $region5: #{refine_block_forward.20} parent=0 // pred_fallthru
    _
  // Predicated region
  $region6: #{refine_block_forward.20} parent=0 // pred_check
    _
  $region7: #{refine_block_forward.20} parent=0 // pred_check_branch
    %12 = sbr.rel (0) target = $region9
  $region8: #{refine_block_forward.20} parent=0 // pred_region
    _
  $region9: #{refine_block_forward.20} parent=0 // pred_fallthru
    _
  %v14 = vld [vmem:[%s0] sm:$0xff]
  %v15 = vld [vmem:[%s0 + $0x8] sm:$0xff]
  %v16 = vld [vmem:[%s0 + $0x10] sm:$0xff]
  %v17 = vld [vmem:[%s0 + $0x18] sm:$0xff]
  %v18 = vld [vmem:[%s0 + $0x20] sm:$0xff]
  %v19 = vld [vmem:[%s0 + $0x28] sm:$0xff]
  %v20 = vld [vmem:[%s0 + $0x30] sm:$0xff]
  %v21 = vld [vmem:[%s0 + $0x38] sm:$0xff]
  %v22 = vld [vmem:[%s0 + $0x40] sm:$0xff]
  %v23 = vld [vmem:[%s0 + $0x48] sm:$0xff]
  %v24 = vld [vmem:[%s0 + $0x50] sm:$0xff]
  %v25 = vld [vmem:[%s0 + $0x58] sm:$0xff]
  %v26 = vld [vmem:[%s0 + $0x60] sm:$0xff]
  %v27 = vld [vmem:[%s0 + $0x68] sm:$0xff]
  %v28 = vld [vmem:[%s0 + $0x70] sm:$0xff]
  %v29 = vld [vmem:[%s0 + $0x78] sm:$0xff]
  %v30 = vld [vmem:[%s0 + $0x80] sm:$0xff]
  %v31 = vld [vmem:[%s0 + $0x88] sm:$0xff]
  %v32 = vld [vmem:[%s0 + $0x90] sm:$0xff]
  %v33 = vld [vmem:[%s0 + $0x98] sm:$0xff]
  %v34 = vld [vmem:[%s0 + $0xa0] sm:$0xff]
  %v35 = vld [vmem:[%s0 + $0xa8] sm:$0xff]
  %v36 = vld [vmem:[%s0 + $0xb0] sm:$0xff]
  %v37 = vld [vmem:[%s0 + $0xb8] sm:$0xff]
  %v38 = vld [vmem:[%s0 + $0xc0] sm:$0xff]
  %v39 = vld [vmem:[%s0 + $0xc8] sm:$0xff]
  %v40 = vld [vmem:[%s0 + $0xd0] sm:$0xff]
  %v41 = vld [vmem:[%s0 + $0xd8] sm:$0xff]
  %v42 = vld [vmem:[%s0 + $0xe0] sm:$0xff]
  %v43 = vld [vmem:[%s0 + $0xe8] sm:$0xff]
  %v44 = vld [vmem:[%s0 + $0xf0] sm:$0xff]
  %v45 = vld [vmem:[%s0 + $0xf8] sm:$0xff]
  %v46 = vpack.c.bf16 %v15, %v14
  %v47 = vpack.c.bf16 %v17, %v16
  %v48 = vpack.c.bf16 %v19, %v18
  %v49 = vpack.c.bf16 %v21, %v20
  %v50 = vpack.c.bf16 %v23, %v22
  %v51 = vpack.c.bf16 %v25, %v24
  %v52 = vpack.c.bf16 %v27, %v26
  %v53 = vpack.c.bf16 %v29, %v28
  %v54 = vpack.c.bf16 %v31, %v30
  %v55 = vpack.c.bf16 %v33, %v32
  %v56 = vpack.c.bf16 %v35, %v34
  %v57 = vpack.c.bf16 %v37, %v36
  %v58 = vpack.c.bf16 %v39, %v38
  %v59 = vpack.c.bf16 %v41, %v40
  %v60 = vpack.c.bf16 %v43, %v42
  %v61 = vpack.c.bf16 %v45, %v44
  %v62 = vld [vmem:[%s1] sm:$0xf]
  %v63 = vld [vmem:[%s1 + $0x4] sm:$0xf]
  %v64 = vld [vmem:[%s1 + $0x8] sm:$0xf]
  %v65 = vld [vmem:[%s1 + $0xc] sm:$0xf]
  %v66 = vld [vmem:[%s1 + $0x10] sm:$0xf]
  %v67 = vld [vmem:[%s1 + $0x14] sm:$0xf]
  %v68 = vld [vmem:[%s1 + $0x18] sm:$0xf]
  %v69 = vld [vmem:[%s1 + $0x1c] sm:$0xf]
  %v70 = vld [vmem:[%s1 + $0x20] sm:$0x3]
  %v80 = vunpack.c.l.b16 %v62
  %v81 = vunpack.c.l.b16 %v63
  %v82 = vunpack.c.l.b16 %v64
  %v83 = vunpack.c.l.b16 %v65
  %v84 = vunpack.c.l.b16 %v66
  %v85 = vunpack.c.l.b16 %v67
  %v86 = vunpack.c.l.b16 %v68
  %v87 = vunpack.c.l.b16 %v69
  %v88 = vunpack.c.l.b16 %v70
  %v89 = vpack.c.b16 %v81, %v80
  %v90 = vpack.c.b16 %v83, %v82
  %v91 = vpack.c.b16 %v85, %v84
  %v92 = vpack.c.b16 %v87, %v86
  %v93 = vpack.c.b16 %v88, %v88
  %vm98 = vcmask 547840
  %v100 = vsel %vm98, %v46, 0
  %v103 = vsel %vm98, %v47, 0
  %v106 = vsel %vm98, %v48, 0
  %v109 = vsel %vm98, %v49, 0
  %v112 = vsel %vm98, %v50, 0
  %v115 = vsel %vm98, %v51, 0
  %v118 = vsel %vm98, %v52, 0
  %v121 = vsel %vm98, %v53, 0
  %v124 = vsel %vm98, %v54, 0
  %v127 = vsel %vm98, %v55, 0
  %v130 = vsel %vm98, %v56, 0
  %v133 = vsel %vm98, %v57, 0
  %v136 = vsel %vm98, %v58, 0
  %v139 = vsel %vm98, %v59, 0
  %v142 = vsel %vm98, %v60, 0
  %v145 = vsel %vm98, %v61, 0
  %vm147 = vcmask 1040384
  %vm148 = vcmask 1041408
  %v149 = vsel %vm147, 4294967295, 65535
  %v150 = vsel %vm148, %v149, 0
  %v152 = vand.u32 %v93, %v150
  %154 = vmatprep.subr.bf16.mxu0 0
  %155 = vmatpush1.bf16.msra.mxu0 %v89
  %156 = vmatprep.subr.bf16.mxu0 0
  %157 = vmatpush1.bf16.msra.mxu0 %v90
  %158 = vmatprep.subr.bf16.mxu0 0
  %159 = vmatpush1.bf16.msra.mxu0 %v91
  %160 = vmatprep.subr.bf16.mxu0 0
  %161 = vmatpush1.bf16.msra.mxu0 %v92
  %162 = vmatprep.subr.bf16.mxu0 0
  %163 = vmatpush1.bf16.msra.mxu0 %v152
  %164 = vmatprep.subr.bf16.mxu0 0
  %165 = vmatpush1.bf16.msra.mxu0 0
  %166 = vmatprep.subr.bf16.mxu0 0
  %167 = vmatpush1.bf16.msra.mxu0 0
  %168 = vmatprep.subr.bf16.mxu0 0
  %169 = vmatpush1.bf16.msra.mxu0 0
  %170 = vmatprep.subr.bf16.mxu0 0
  %171 = vmatpush1.bf16.msra.mxu0 0
  %172 = vmatprep.subr.bf16.mxu0 0
  %173 = vmatpush1.bf16.msra.mxu0 0
  %174 = vmatprep.subr.bf16.mxu0 0
  %175 = vmatpush1.bf16.msra.mxu0 0
  %176 = vmatprep.subr.bf16.mxu0 0
  %177 = vmatpush1.bf16.msra.mxu0 0
  %178 = vmatprep.subr.bf16.mxu0 0
  %179 = vmatpush1.bf16.msra.mxu0 0
  %180 = vmatprep.subr.bf16.mxu0 0
  %181 = vmatpush1.bf16.msra.mxu0 0
  %182 = vmatprep.subr.bf16.mxu0 0
  %183 = vmatpush1.bf16.msra.mxu0 0
  %184 = vmatprep.subr.bf16.mxu0 0
  %185 = vmatpush1.bf16.msra.mxu0 0
  %186 = vmatprep.mubr.bf16.mxu0 0
  %187 = vmatmul.mubr.bf16.gmra.mrb[0].mxu0 %v100
  %v188 = vpop.f32.mrb[0].mxu0
  %v189 = vadd.f32 0.0, %v188
  %v190 = vpop.f32.mrb[0].mxu0
  %v191 = vpop.f32.mrb[0].mxu0
  %v192 = vadd.f32 0.0, %v191
  %v193 = vpop.f32.mrb[0].mxu0
  %194 = vmatprep.mubr.bf16.mxu0 0
  %195 = vmatmul.mubr.bf16.gmra.mrb[0].mxu0 %v103
  %v196 = vpop.f32.mrb[0].mxu0
  %v197 = vadd.f32 0.0, %v196
  %v198 = vpop.f32.mrb[0].mxu0
  %v199 = vpop.f32.mrb[0].mxu0
  %v200 = vadd.f32 0.0, %v199
  %v201 = vpop.f32.mrb[0].mxu0
  %202 = vmatprep.mubr.bf16.mxu0 0
  %203 = vmatmul.mubr.bf16.gmra.mrb[0].mxu0 %v106
  %v204 = vpop.f32.mrb[0].mxu0
  %v205 = vadd.f32 0.0, %v204
  %v206 = vpop.f32.mrb[0].mxu0
  %v207 = vpop.f32.mrb[0].mxu0
  %v208 = vadd.f32 0.0, %v207
  %v209 = vpop.f32.mrb[0].mxu0
  %210 = vmatprep.mubr.bf16.mxu0 0
  %211 = vmatmul.mubr.bf16.gmra.mrb[0].mxu0 %v109
  %v212 = vpop.f32.mrb[0].mxu0
  %v213 = vadd.f32 0.0, %v212
  %v214 = vpop.f32.mrb[0].mxu0
  %v215 = vpop.f32.mrb[0].mxu0
  %v216 = vadd.f32 0.0, %v215
  %v217 = vpop.f32.mrb[0].mxu0
  %218 = vmatprep.mubr.bf16.mxu0 0
  %219 = vmatmul.mubr.bf16.gmra.mrb[0].mxu0 %v112
  %v220 = vpop.f32.mrb[0].mxu0
  %v221 = vadd.f32 0.0, %v220
  %v222 = vpop.f32.mrb[0].mxu0
  %v223 = vpop.f32.mrb[0].mxu0
  %v224 = vadd.f32 0.0, %v223
  %v225 = vpop.f32.mrb[0].mxu0
  %226 = vmatprep.mubr.bf16.mxu0 0
  %227 = vmatmul.mubr.bf16.gmra.mrb[0].mxu0 %v115
  %v228 = vpop.f32.mrb[0].mxu0
  %v229 = vadd.f32 0.0, %v228
  %v230 = vpop.f32.mrb[0].mxu0
  %v231 = vpop.f32.mrb[0].mxu0
  %v232 = vadd.f32 0.0, %v231
  %v233 = vpop.f32.mrb[0].mxu0
  %234 = vmatprep.mubr.bf16.mxu0 0
  %235 = vmatmul.mubr.bf16.gmra.mrb[0].mxu0 %v118
  %v236 = vpop.f32.mrb[0].mxu0
  %v237 = vadd.f32 0.0, %v236
  %v238 = vpop.f32.mrb[0].mxu0
  %v239 = vpop.f32.mrb[0].mxu0
  %v240 = vadd.f32 0.0, %v239
  %v241 = vpop.f32.mrb[0].mxu0
  %242 = vmatprep.mubr.bf16.mxu0 0
  %243 = vmatmul.mubr.bf16.gmra.mrb[0].mxu0 %v121
  %v244 = vpop.f32.mrb[0].mxu0
  %v245 = vadd.f32 0.0, %v244
  %v246 = vpop.f32.mrb[0].mxu0
  %v247 = vpop.f32.mrb[0].mxu0
  %v248 = vadd.f32 0.0, %v247
  %v249 = vpop.f32.mrb[0].mxu0
  %250 = vmatprep.mubr.bf16.mxu0 0
  %251 = vmatmul.mubr.bf16.gmra.mrb[0].mxu0 %v124
  %v252 = vpop.f32.mrb[0].mxu0
  %v253 = vadd.f32 0.0, %v252
  %v254 = vpop.f32.mrb[0].mxu0
  %v255 = vpop.f32.mrb[0].mxu0
  %v256 = vadd.f32 0.0, %v255
  %v257 = vpop.f32.mrb[0].mxu0
  %258 = vmatprep.mubr.bf16.mxu0 0
  %259 = vmatmul.mubr.bf16.gmra.mrb[0].mxu0 %v127
  %v260 = vpop.f32.mrb[0].mxu0
  %v261 = vadd.f32 0.0, %v260
  %v262 = vpop.f32.mrb[0].mxu0
  %v263 = vpop.f32.mrb[0].mxu0
  %v264 = vadd.f32 0.0, %v263
  %v265 = vpop.f32.mrb[0].mxu0
  %266 = vmatprep.mubr.bf16.mxu0 0
  %267 = vmatmul.mubr.bf16.gmra.mrb[0].mxu0 %v130
  %v268 = vpop.f32.mrb[0].mxu0
  %v269 = vadd.f32 0.0, %v268
  %v270 = vpop.f32.mrb[0].mxu0
  %v271 = vpop.f32.mrb[0].mxu0
  %v272 = vadd.f32 0.0, %v271
  %v273 = vpop.f32.mrb[0].mxu0
  %274 = vmatprep.mubr.bf16.mxu0 0
  %275 = vmatmul.mubr.bf16.gmra.mrb[0].mxu0 %v133
  %v276 = vpop.f32.mrb[0].mxu0
  %v277 = vadd.f32 0.0, %v276
  %v278 = vpop.f32.mrb[0].mxu0
  %v279 = vpop.f32.mrb[0].mxu0
  %v280 = vadd.f32 0.0, %v279
  %v281 = vpop.f32.mrb[0].mxu0
  %282 = vmatprep.mubr.bf16.mxu0 0
  %283 = vmatmul.mubr.bf16.gmra.mrb[0].mxu0 %v136
  %v284 = vpop.f32.mrb[0].mxu0
  %v285 = vadd.f32 0.0, %v284
  %v286 = vpop.f32.mrb[0].mxu0
  %v287 = vpop.f32.mrb[0].mxu0
  %v288 = vadd.f32 0.0, %v287
  %v289 = vpop.f32.mrb[0].mxu0
  %290 = vmatprep.mubr.bf16.mxu0 0
  %291 = vmatmul.mubr.bf16.gmra.mrb[0].mxu0 %v139
  %v292 = vpop.f32.mrb[0].mxu0
  %v293 = vadd.f32 0.0, %v292
  %v294 = vpop.f32.mrb[0].mxu0
  %v295 = vpop.f32.mrb[0].mxu0
  %v296 = vadd.f32 0.0, %v295
  %v297 = vpop.f32.mrb[0].mxu0
  %298 = vmatprep.mubr.bf16.mxu0 0
  %299 = vmatmul.mubr.bf16.gmra.mrb[0].mxu0 %v142
  %v300 = vpop.f32.mrb[0].mxu0
  %v301 = vadd.f32 0.0, %v300
  %v302 = vpop.f32.mrb[0].mxu0
  %v303 = vpop.f32.mrb[0].mxu0
  %v304 = vadd.f32 0.0, %v303
  %v305 = vpop.f32.mrb[0].mxu0
  %306 = vmatprep.mubr.bf16.mxu0 0
  %307 = vmatmul.mubr.bf16.gmra.mrb[0].mxu0 %v145
  %v308 = vpop.f32.mrb[0].mxu0
  %v309 = vadd.f32 0.0, %v308
  %v310 = vpop.f32.mrb[0].mxu0
  %v311 = vpop.f32.mrb[0].mxu0
  %v312 = vadd.f32 0.0, %v311
  %v313 = vpop.f32.mrb[0].mxu0
  %314 = vdwg.mxu0
  %v315 = vpack.c.bf16 %v192, %v189
  %v316 = vpack.c.bf16 %v200, %v197
  %v317 = vpack.c.bf16 %v208, %v205
  %v318 = vpack.c.bf16 %v216, %v213
  %v319 = vpack.c.bf16 %v224, %v221
  %v320 = vpack.c.bf16 %v232, %v229
  %v321 = vpack.c.bf16 %v240, %v237
  %v322 = vpack.c.bf16 %v248, %v245
  %v323 = vpack.c.bf16 %v256, %v253
  %v324 = vpack.c.bf16 %v264, %v261
  %v325 = vpack.c.bf16 %v272, %v269
  %v326 = vpack.c.bf16 %v280, %v277
  %v327 = vpack.c.bf16 %v288, %v285
  %v328 = vpack.c.bf16 %v296, %v293
  %v329 = vpack.c.bf16 %v304, %v301
  %v330 = vpack.c.bf16 %v312, %v309
  %v347 = vunpack.c.l.b16 %v315
  %v348 = vunpack.c.h.b16 %v315
  %v349 = vunpack.c.l.b16 %v316
  %v350 = vunpack.c.h.b16 %v316
  %v351 = vunpack.c.l.b16 %v317
  %v352 = vunpack.c.h.b16 %v317
  %v353 = vunpack.c.l.b16 %v318
  %v354 = vunpack.c.h.b16 %v318
  %v355 = vunpack.c.l.b16 %v319
  %v356 = vunpack.c.h.b16 %v319
  %v357 = vunpack.c.l.b16 %v320
  %v358 = vunpack.c.h.b16 %v320
  %v359 = vunpack.c.l.b16 %v321
  %v360 = vunpack.c.h.b16 %v321
  %v361 = vunpack.c.l.b16 %v322
  %v362 = vunpack.c.h.b16 %v322
  %v363 = vunpack.c.l.b16 %v323
  %v364 = vunpack.c.h.b16 %v323
  %v365 = vunpack.c.l.b16 %v324
  %v366 = vunpack.c.h.b16 %v324
  %v367 = vunpack.c.l.b16 %v325
  %v368 = vunpack.c.h.b16 %v325
  %v369 = vunpack.c.l.b16 %v326
  %v370 = vunpack.c.h.b16 %v326
  %v371 = vunpack.c.l.b16 %v327
  %v372 = vunpack.c.h.b16 %v327
  %v373 = vunpack.c.l.b16 %v328
  %v374 = vunpack.c.h.b16 %v328
  %v375 = vunpack.c.l.b16 %v329
  %v376 = vunpack.c.h.b16 %v329
  %v377 = vunpack.c.l.b16 %v330
  %v378 = vunpack.c.h.b16 %v330
  %v379 = vpack.c.b16 %v347, %v347
  %v380 = vpack.c.b16 %v348, %v348
  %v381 = vpack.c.b16 %v349, %v349
  %v382 = vpack.c.b16 %v350, %v350
  %v383 = vpack.c.b16 %v351, %v351
  %v384 = vpack.c.b16 %v352, %v352
  %v385 = vpack.c.b16 %v353, %v353
  %v386 = vpack.c.b16 %v354, %v354
  %v387 = vpack.c.b16 %v355, %v355
  %v388 = vpack.c.b16 %v356, %v356
  %v389 = vpack.c.b16 %v357, %v357
  %v390 = vpack.c.b16 %v358, %v358
  %v391 = vpack.c.b16 %v359, %v359
  %v392 = vpack.c.b16 %v360, %v360
  %v393 = vpack.c.b16 %v361, %v361
  %v394 = vpack.c.b16 %v362, %v362
  %v395 = vpack.c.b16 %v363, %v363
  %v396 = vpack.c.b16 %v364, %v364
  %v397 = vpack.c.b16 %v365, %v365
  %v398 = vpack.c.b16 %v366, %v366
  %v399 = vpack.c.b16 %v367, %v367
  %v400 = vpack.c.b16 %v368, %v368
  %v401 = vpack.c.b16 %v369, %v369
  %v402 = vpack.c.b16 %v370, %v370
  %v403 = vpack.c.b16 %v371, %v371
  %v404 = vpack.c.b16 %v372, %v372
  %v405 = vpack.c.b16 %v373, %v373
  %v406 = vpack.c.b16 %v374, %v374
  %v407 = vpack.c.b16 %v375, %v375
  %v408 = vpack.c.b16 %v376, %v376
  %v409 = vpack.c.b16 %v377, %v377
  %v410 = vpack.c.b16 %v378, %v378
  %443 = vst [vmem:[%s2] sm:$0xf] %v379
  %444 = vst [vmem:[%s2 + $0x4] sm:$0xf] %v380
  %445 = vst [vmem:[%s2 + $0x8] sm:$0xf] %v381
  %446 = vst [vmem:[%s2 + $0xc] sm:$0xf] %v382
  %447 = vst [vmem:[%s2 + $0x10] sm:$0xf] %v383
  %448 = vst [vmem:[%s2 + $0x14] sm:$0xf] %v384
  %449 = vst [vmem:[%s2 + $0x18] sm:$0xf] %v385
  %450 = vst [vmem:[%s2 + $0x1c] sm:$0xf] %v386
  %451 = vst [vmem:[%s2 + $0x20] sm:$0xf] %v387
  %452 = vst [vmem:[%s2 + $0x24] sm:$0xf] %v388
  %453 = vst [vmem:[%s2 + $0x28] sm:$0xf] %v389
  %454 = vst [vmem:[%s2 + $0x2c] sm:$0xf] %v390
  %455 = vst [vmem:[%s2 + $0x30] sm:$0xf] %v391
  %456 = vst [vmem:[%s2 + $0x34] sm:$0xf] %v392
  %457 = vst [vmem:[%s2 + $0x38] sm:$0xf] %v393
  %458 = vst [vmem:[%s2 + $0x3c] sm:$0xf] %v394
  %459 = vst [vmem:[%s2 + $0x40] sm:$0xf] %v395
  %460 = vst [vmem:[%s2 + $0x44] sm:$0xf] %v396
  %461 = vst [vmem:[%s2 + $0x48] sm:$0xf] %v397
  %462 = vst [vmem:[%s2 + $0x4c] sm:$0xf] %v398
  %463 = vst [vmem:[%s2 + $0x50] sm:$0xf] %v399
  %464 = vst [vmem:[%s2 + $0x54] sm:$0xf] %v400
  %465 = vst [vmem:[%s2 + $0x58] sm:$0xf] %v401
  %466 = vst [vmem:[%s2 + $0x5c] sm:$0xf] %v402
  %467 = vst [vmem:[%s2 + $0x60] sm:$0xf] %v403
  %468 = vst [vmem:[%s2 + $0x64] sm:$0xf] %v404
  %469 = vst [vmem:[%s2 + $0x68] sm:$0xf] %v405
  %470 = vst [vmem:[%s2 + $0x6c] sm:$0xf] %v406
  %471 = vst [vmem:[%s2 + $0x70] sm:$0xf] %v407
  %472 = vst [vmem:[%s2 + $0x74] sm:$0xf] %v408
  %473 = vst [vmem:[%s2 + $0x78] sm:$0xf] %v409
  %474 = vst [vmem:[%s2 + $0x7c] sm:$0xf] %v410
  %v475 = vadd.f32 %v189, %v192
  %v476 = vadd.f32 %v475, %v197
  %v477 = vadd.f32 %v476, %v200
  %v478 = vadd.f32 %v477, %v205
  %v479 = vadd.f32 %v478, %v208
  %v480 = vadd.f32 %v479, %v213
  %v481 = vadd.f32 %v480, %v216
  %v482 = vadd.f32 %v481, %v221
  %v483 = vadd.f32 %v482, %v224
  %v484 = vadd.f32 %v483, %v229
  %v485 = vadd.f32 %v484, %v232
  %v486 = vadd.f32 %v485, %v237
  %v487 = vadd.f32 %v486, %v240
  %v488 = vadd.f32 %v487, %v245
  %v489 = vadd.f32 %v488, %v248
  %v490 = vadd.f32 %v489, %v253
  %v491 = vadd.f32 %v490, %v256
  %v492 = vadd.f32 %v491, %v261
  %v493 = vadd.f32 %v492, %v264
  %v494 = vadd.f32 %v493, %v269
  %v495 = vadd.f32 %v494, %v272
  %v496 = vadd.f32 %v495, %v277
  %v497 = vadd.f32 %v496, %v280
  %v498 = vadd.f32 %v497, %v285
  %v499 = vadd.f32 %v498, %v288
  %v500 = vadd.f32 %v499, %v293
  %v501 = vadd.f32 %v500, %v296
  %v502 = vadd.f32 %v501, %v301
  %v503 = vadd.f32 %v502, %v304
  %v504 = vadd.f32 %v503, %v309
  %v505 = vadd.f32 %v504, %v312
  %v506 = vrot.slane %v505, 4
  %v507 = vadd.f32 %v505, %v506
  %v508 = vrot.slane %v507, 2
  %v509 = vadd.f32 %v507, %v508
  %v510 = vrot.slane %v509, 1
  %v511 = vadd.f32 %v509, %v510
  %v512 = vmul.f32 %v189, %v189
  %v513 = vmul.f32 %v192, %v192
  %v514 = vmul.f32 %v197, %v197
  %v515 = vmul.f32 %v200, %v200
  %v516 = vmul.f32 %v205, %v205
  %v517 = vmul.f32 %v208, %v208
  %v518 = vmul.f32 %v213, %v213
  %v519 = vmul.f32 %v216, %v216
  %v520 = vmul.f32 %v221, %v221
  %v521 = vmul.f32 %v224, %v224
  %v522 = vmul.f32 %v229, %v229
  %v523 = vmul.f32 %v232, %v232
  %v524 = vmul.f32 %v237, %v237
  %v525 = vmul.f32 %v240, %v240
  %v526 = vmul.f32 %v245, %v245
  %v527 = vmul.f32 %v248, %v248
  %v528 = vmul.f32 %v253, %v253
  %v529 = vmul.f32 %v256, %v256
  %v530 = vmul.f32 %v261, %v261
  %v531 = vmul.f32 %v264, %v264
  %v532 = vmul.f32 %v269, %v269
  %v533 = vmul.f32 %v272, %v272
  %v534 = vmul.f32 %v277, %v277
  %v535 = vmul.f32 %v280, %v280
  %v536 = vmul.f32 %v285, %v285
  %v537 = vmul.f32 %v288, %v288
  %v538 = vmul.f32 %v293, %v293
  %v539 = vmul.f32 %v296, %v296
  %v540 = vmul.f32 %v301, %v301
  %v541 = vmul.f32 %v304, %v304
  %v542 = vmul.f32 %v309, %v309
  %v543 = vmul.f32 %v312, %v312
  %v544 = vadd.f32 %v512, %v513
  %v545 = vadd.f32 %v544, %v514
  %v546 = vadd.f32 %v545, %v515
  %v547 = vadd.f32 %v546, %v516
  %v548 = vadd.f32 %v547, %v517
  %v549 = vadd.f32 %v548, %v518
  %v550 = vadd.f32 %v549, %v519
  %v551 = vadd.f32 %v550, %v520
  %v552 = vadd.f32 %v551, %v521
  %v553 = vadd.f32 %v552, %v522
  %v554 = vadd.f32 %v553, %v523
  %v555 = vadd.f32 %v554, %v524
  %v556 = vadd.f32 %v555, %v525
  %v557 = vadd.f32 %v556, %v526
  %v558 = vadd.f32 %v557, %v527
  %v559 = vadd.f32 %v558, %v528
  %v560 = vadd.f32 %v559, %v529
  %v561 = vadd.f32 %v560, %v530
  %v562 = vadd.f32 %v561, %v531
  %v563 = vadd.f32 %v562, %v532
  %v564 = vadd.f32 %v563, %v533
  %v565 = vadd.f32 %v564, %v534
  %v566 = vadd.f32 %v565, %v535
  %v567 = vadd.f32 %v566, %v536
  %v568 = vadd.f32 %v567, %v537
  %v569 = vadd.f32 %v568, %v538
  %v570 = vadd.f32 %v569, %v539
  %v571 = vadd.f32 %v570, %v540
  %v572 = vadd.f32 %v571, %v541
  %v573 = vadd.f32 %v572, %v542
  %v574 = vadd.f32 %v573, %v543
  %v575 = vrot.slane %v574, 4
  %v576 = vadd.f32 %v574, %v575
  %v577 = vrot.slane %v576, 2
  %v578 = vadd.f32 %v576, %v577
  %v579 = vrot.slane %v578, 1
  %v580 = vadd.f32 %v578, %v579
  %v581 = vsel %vm147, %v511, %v580
  %582 = vst [vmem:[%s3] sm:$0x3] %v581
  // Predicated region
  $region10: #{refine_block_forward.20} parent=0 // pred_check
    _
  $region11: #{refine_block_forward.20} parent=0 // pred_check_branch
    %584 = sbr.rel (0) target = $region13
  $region12: #{refine_block_forward.20} parent=0 // pred_region
    _
  $region13: #{refine_block_forward.20} parent=0 // pred_fallthru
    _
  // Predicated region
  $region14: #{refine_block_forward.20} parent=0 // pred_check
    _
  $region15: #{refine_block_forward.20} parent=0 // pred_check_branch
    %586 = sbr.rel (0) target = $region17
  $region16: #{refine_block_forward.20} parent=0 // pred_region
    _
  $region17: #{refine_block_forward.20} parent=0 // pred_fallthru
    _
  // Predicated region
  $region18: #{refine_block_forward.20} parent=0 // pred_check
    _
  $region19: #{refine_block_forward.20} parent=0 // pred_check_branch
    %588 = sbr.rel (0) target = $region21
  $region20: #{refine_block_forward.20} parent=0 // pred_region
    _
  $region21: #{refine_block_forward.20} parent=0 // pred_fallthru
    _
  // Predicated region
  $region22: #{refine_block_forward.20} parent=0 // pred_check
    _
  $region23: #{refine_block_forward.20} parent=0 // pred_check_branch
    %590 = sbr.rel (0) target = $region25
  $region24: #{refine_block_forward.20} parent=0 // pred_region
    _
  $region25: #{refine_block_forward.20} parent=0 // pred_fallthru
    _

// kernel: refine_block_forward.21
$region0: #{refine_block_forward.21}
  #allocation0 [shape = 'u32[]', space=smem, size = 0x4, offset = 0x4, fixed_abs, tag = 'smem constant byte address 0x4 - core index']
  #allocation1 [shape = 'u32[144,128]{1,0:T(1,128)}', space=vmem, size = 0x12000, scoped, tag = 'internal scratch']
  %s0 = inlined_call_operand.vmem [shape: bf16[256,128], index: 0, kind: input, shape index: {}]
  %s1 = inlined_call_operand.vmem [shape: f32[1,128], index: 1, kind: input, shape index: {}]
  %s2 = inlined_call_operand.vmem [shape: f32[1,128], index: 2, kind: input, shape index: {}]
  %s3 = inlined_call_operand.vmem [shape: bf16[128,128], index: 3, kind: input, shape index: {}]
  %s4 = inlined_call_operand.vmem [shape: bf16[256,128], index: 4, kind: output, shape index: {0}]
  %s5 = inlined_call_operand.vmem [shape: f32[1,2,128], index: 5, kind: output, shape index: {1}]
  %6 = xla_tuple %s4, %s5
  %s7 = sld [smem:[#allocation0]]
  $region34: #{refine_block_forward.21} parent=0
    _
  %s9 = ssub.s32 1, %s7
  %s10 = scalar_select 0, %s9, %s7
  // Predicated region
  $region2: #{refine_block_forward.21} parent=0 // pred_check
    _
  $region3: #{refine_block_forward.21} parent=0 // pred_check_branch
    %12 = sbr.rel (0) target = $region5
  $region4: #{refine_block_forward.21} parent=0 // pred_region
    _
  $region5: #{refine_block_forward.21} parent=0 // pred_fallthru
    _
  // Predicated region
  $region6: #{refine_block_forward.21} parent=0 // pred_check
    _
  $region7: #{refine_block_forward.21} parent=0 // pred_check_branch
    %14 = sbr.rel (0) target = $region9
  $region8: #{refine_block_forward.21} parent=0 // pred_region
    _
  $region9: #{refine_block_forward.21} parent=0 // pred_fallthru
    _
  // Predicated region
  $region10: #{refine_block_forward.21} parent=0 // pred_check
    _
  $region11: #{refine_block_forward.21} parent=0 // pred_check_branch
    %16 = sbr.rel (0) target = $region13
  $region12: #{refine_block_forward.21} parent=0 // pred_region
    _
  $region13: #{refine_block_forward.21} parent=0 // pred_fallthru
    _
  // Predicated region
  $region14: #{refine_block_forward.21} parent=0 // pred_check
    _
  $region15: #{refine_block_forward.21} parent=0 // pred_check_branch
    %18 = sbr.rel (0) target = $region17
  $region16: #{refine_block_forward.21} parent=0 // pred_region
    _
  $region17: #{refine_block_forward.21} parent=0 // pred_fallthru
    _
  %v20 = vld [vmem:[%s0] sm:$0xf]
  %v21 = vld [vmem:[%s0 + $0x4] sm:$0xf]
  %v22 = vld [vmem:[%s0 + $0x8] sm:$0xf]
  %v23 = vld [vmem:[%s0 + $0xc] sm:$0xf]
  %v24 = vld [vmem:[%s0 + $0x10] sm:$0xf]
  %v25 = vld [vmem:[%s0 + $0x14] sm:$0xf]
  %v26 = vld [vmem:[%s0 + $0x18] sm:$0xf]
  %v27 = vld [vmem:[%s0 + $0x1c] sm:$0xf]
  %v28 = vld [vmem:[%s0 + $0x20] sm:$0xf]
  %v29 = vld [vmem:[%s0 + $0x24] sm:$0xf]
  %v30 = vld [vmem:[%s0 + $0x28] sm:$0xf]
  %v31 = vld [vmem:[%s0 + $0x2c] sm:$0xf]
  %v32 = vld [vmem:[%s0 + $0x30] sm:$0xf]
  %v33 = vld [vmem:[%s0 + $0x34] sm:$0xf]
  %v34 = vld [vmem:[%s0 + $0x38] sm:$0xf]
  %v35 = vld [vmem:[%s0 + $0x3c] sm:$0xf]
  %v36 = vld [vmem:[%s0 + $0x40] sm:$0xf]
  %v37 = vld [vmem:[%s0 + $0x44] sm:$0xf]
  %v38 = vld [vmem:[%s0 + $0x48] sm:$0xf]
  %v39 = vld [vmem:[%s0 + $0x4c] sm:$0xf]
  %v40 = vld [vmem:[%s0 + $0x50] sm:$0xf]
  %v41 = vld [vmem:[%s0 + $0x54] sm:$0xf]
  %v42 = vld [vmem:[%s0 + $0x58] sm:$0xf]
  %v43 = vld [vmem:[%s0 + $0x5c] sm:$0xf]
  %v44 = vld [vmem:[%s0 + $0x60] sm:$0xf]
  %v45 = vld [vmem:[%s0 + $0x64] sm:$0xf]
  %v46 = vld [vmem:[%s0 + $0x68] sm:$0xf]
  %v47 = vld [vmem:[%s0 + $0x6c] sm:$0xf]
  %v48 = vld [vmem:[%s0 + $0x70] sm:$0xf]
  %v49 = vld [vmem:[%s0 + $0x74] sm:$0xf]
  %v50 = vld [vmem:[%s0 + $0x78] sm:$0xf]
  %v51 = vld [vmem:[%s0 + $0x7c] sm:$0xf]
  %v52 = vunpack.c.l.bf16 %v20
  %v53 = vunpack.c.l.bf16 %v21
  %v54 = vunpack.c.l.bf16 %v22
  %v55 = vunpack.c.l.bf16 %v23
  %v56 = vunpack.c.l.bf16 %v24
  %v57 = vunpack.c.l.bf16 %v25
  %v58 = vunpack.c.l.bf16 %v26
  %v59 = vunpack.c.l.bf16 %v27
  %v60 = vunpack.c.l.bf16 %v28
  %v61 = vunpack.c.l.bf16 %v29
  %v62 = vunpack.c.l.bf16 %v30
  %v63 = vunpack.c.l.bf16 %v31
  %v64 = vunpack.c.l.bf16 %v32
  %v65 = vunpack.c.l.bf16 %v33
  %v66 = vunpack.c.l.bf16 %v34
  %v67 = vunpack.c.l.bf16 %v35
  %v68 = vunpack.c.l.bf16 %v36
  %v69 = vunpack.c.l.bf16 %v37
  %v70 = vunpack.c.l.bf16 %v38
  %v71 = vunpack.c.l.bf16 %v39
  %v72 = vunpack.c.l.bf16 %v40
  %v73 = vunpack.c.l.bf16 %v41
  %v74 = vunpack.c.l.bf16 %v42
  %v75 = vunpack.c.l.bf16 %v43
  %v76 = vunpack.c.l.bf16 %v44
  %v77 = vunpack.c.l.bf16 %v45
  %v78 = vunpack.c.l.bf16 %v46
  %v79 = vunpack.c.l.bf16 %v47
  %v80 = vunpack.c.l.bf16 %v48
  %v81 = vunpack.c.l.bf16 %v49
  %v82 = vunpack.c.l.bf16 %v50
  %v83 = vunpack.c.l.bf16 %v51
  %v84 = vld [vmem:[%s1] sm:$0x1]
  %v86 = vlaneseq
  %v87 = vshrl.u32 %v86, 7
  %v88 = vsub.s32 0, %v87
  %v89 = vrot.slane %v84, %v88
  %v91 = vmul.f32 %v52, %v89
  %v92 = vmul.f32 %v53, %v89
  %v93 = vmul.f32 %v54, %v89
  %v94 = vmul.f32 %v55, %v89
  %v95 = vmul.f32 %v56, %v89
  %v96 = vmul.f32 %v57, %v89
  %v97 = vmul.f32 %v58, %v89
  %v98 = vmul.f32 %v59, %v89
  %v99 = vmul.f32 %v60, %v89
  %v100 = vmul.f32 %v61, %v89
  %v101 = vmul.f32 %v62, %v89
  %v102 = vmul.f32 %v63, %v89
  %v103 = vmul.f32 %v64, %v89
  %v104 = vmul.f32 %v65, %v89
  %v105 = vmul.f32 %v66, %v89
  %v106 = vmul.f32 %v67, %v89
  %v107 = vmul.f32 %v68, %v89
  %v108 = vmul.f32 %v69, %v89
  %v109 = vmul.f32 %v70, %v89
  %v110 = vmul.f32 %v71, %v89
  %v111 = vmul.f32 %v72, %v89
  %v112 = vmul.f32 %v73, %v89
  %v113 = vmul.f32 %v74, %v89
  %v114 = vmul.f32 %v75, %v89
  %v115 = vmul.f32 %v76, %v89
  %v116 = vmul.f32 %v77, %v89
  %v117 = vmul.f32 %v78, %v89
  %v118 = vmul.f32 %v79, %v89
  %v119 = vmul.f32 %v80, %v89
  %v120 = vmul.f32 %v81, %v89
  %v121 = vmul.f32 %v82, %v89
  %v122 = vmul.f32 %v83, %v89
  %v123 = vld [vmem:[%s2] sm:$0x1]
  %v125 = vlaneseq
  %v126 = vshrl.u32 %v125, 7
  %v127 = vsub.s32 0, %v126
  %v128 = vrot.slane %v123, %v127
  %v130 = vadd.f32 %v91, %v128
  %v131 = vadd.f32 %v92, %v128
  %v132 = vadd.f32 %v93, %v128
  %v133 = vadd.f32 %v94, %v128
  %v134 = vadd.f32 %v95, %v128
  %v135 = vadd.f32 %v96, %v128
  %v136 = vadd.f32 %v97, %v128
  %v137 = vadd.f32 %v98, %v128
  %v138 = vadd.f32 %v99, %v128
  %v139 = vadd.f32 %v100, %v128
  %v140 = vadd.f32 %v101, %v128
  %v141 = vadd.f32 %v102, %v128
  %v142 = vadd.f32 %v103, %v128
  %v143 = vadd.f32 %v104, %v128
  %v144 = vadd.f32 %v105, %v128
  %v145 = vadd.f32 %v106, %v128
  %v146 = vadd.f32 %v107, %v128
  %v147 = vadd.f32 %v108, %v128
  %v148 = vadd.f32 %v109, %v128
  %v149 = vadd.f32 %v110, %v128
  %v150 = vadd.f32 %v111, %v128
  %v151 = vadd.f32 %v112, %v128
  %v152 = vadd.f32 %v113, %v128
  %v153 = vadd.f32 %v114, %v128
  %v154 = vadd.f32 %v115, %v128
  %v155 = vadd.f32 %v116, %v128
  %v156 = vadd.f32 %v117, %v128
  %v157 = vadd.f32 %v118, %v128
  %v158 = vadd.f32 %v119, %v128
  %v159 = vadd.f32 %v120, %v128
  %v160 = vadd.f32 %v121, %v128
  %v161 = vadd.f32 %v122, %v128
  %v162 = vmax.f32 %v130, 0.0
  %v163 = vmax.f32 %v131, 0.0
  %v164 = vmax.f32 %v132, 0.0
  %v165 = vmax.f32 %v133, 0.0
  %v166 = vmax.f32 %v134, 0.0
  %v167 = vmax.f32 %v135, 0.0
  %v168 = vmax.f32 %v136, 0.0
  %v169 = vmax.f32 %v137, 0.0
  %v170 = vmax.f32 %v138, 0.0
  %v171 = vmax.f32 %v139, 0.0
  %v172 = vmax.f32 %v140, 0.0
  %v173 = vmax.f32 %v141, 0.0
  %v174 = vmax.f32 %v142, 0.0
  %v175 = vmax.f32 %v143, 0.0
  %v176 = vmax.f32 %v144, 0.0
  %v177 = vmax.f32 %v145, 0.0
  %v178 = vmax.f32 %v146, 0.0
  %v179 = vmax.f32 %v147, 0.0
  %v180 = vmax.f32 %v148, 0.0
  %v181 = vmax.f32 %v149, 0.0
  %v182 = vmax.f32 %v150, 0.0
  %v183 = vmax.f32 %v151, 0.0
  %v184 = vmax.f32 %v152, 0.0
  %v185 = vmax.f32 %v153, 0.0
  %v186 = vmax.f32 %v154, 0.0
  %v187 = vmax.f32 %v155, 0.0
  %v188 = vmax.f32 %v156, 0.0
  %v189 = vmax.f32 %v157, 0.0
  %v190 = vmax.f32 %v158, 0.0
  %v191 = vmax.f32 %v159, 0.0
  %v192 = vmax.f32 %v160, 0.0
  %v193 = vmax.f32 %v161, 0.0
  %v194 = vpack.c.bf16 %v163, %v162
  %v195 = vpack.c.bf16 %v165, %v164
  %v196 = vpack.c.bf16 %v167, %v166
  %v197 = vpack.c.bf16 %v169, %v168
  %v198 = vpack.c.bf16 %v171, %v170
  %v199 = vpack.c.bf16 %v173, %v172
  %v200 = vpack.c.bf16 %v175, %v174
  %v201 = vpack.c.bf16 %v177, %v176
  %v202 = vpack.c.bf16 %v179, %v178
  %v203 = vpack.c.bf16 %v181, %v180
  %v204 = vpack.c.bf16 %v183, %v182
  %v205 = vpack.c.bf16 %v185, %v184
  %v206 = vpack.c.bf16 %v187, %v186
  %v207 = vpack.c.bf16 %v189, %v188
  %v208 = vpack.c.bf16 %v191, %v190
  %v209 = vpack.c.bf16 %v193, %v192
  %v210 = vld [vmem:[%s3] sm:$0xf]
  %v211 = vld [vmem:[%s3 + $0x4] sm:$0xf]
  %v212 = vld [vmem:[%s3 + $0x8] sm:$0xf]
  %v213 = vld [vmem:[%s3 + $0xc] sm:$0xf]
  %v214 = vld [vmem:[%s3 + $0x10] sm:$0xf]
  %v215 = vld [vmem:[%s3 + $0x14] sm:$0xf]
  %v216 = vld [vmem:[%s3 + $0x18] sm:$0xf]
  %v217 = vld [vmem:[%s3 + $0x1c] sm:$0xf]
  %v218 = vld [vmem:[%s3 + $0x20] sm:$0xf]
  %v219 = vld [vmem:[%s3 + $0x24] sm:$0xf]
  %v220 = vld [vmem:[%s3 + $0x28] sm:$0xf]
  %v221 = vld [vmem:[%s3 + $0x2c] sm:$0xf]
  %v222 = vld [vmem:[%s3 + $0x30] sm:$0xf]
  %v223 = vld [vmem:[%s3 + $0x34] sm:$0xf]
  %v224 = vld [vmem:[%s3 + $0x38] sm:$0xf]
  %v225 = vld [vmem:[%s3 + $0x3c] sm:$0xf]
  %v242 = vunpack.c.l.b16 %v210
  %v243 = vunpack.c.l.b16 %v211
  %v244 = vunpack.c.l.b16 %v212
  %v245 = vunpack.c.l.b16 %v213
  %v246 = vunpack.c.l.b16 %v214
  %v247 = vunpack.c.l.b16 %v215
  %v248 = vunpack.c.l.b16 %v216
  %v249 = vunpack.c.l.b16 %v217
  %v250 = vunpack.c.l.b16 %v218
  %v251 = vunpack.c.l.b16 %v219
  %v252 = vunpack.c.l.b16 %v220
  %v253 = vunpack.c.l.b16 %v221
  %v254 = vunpack.c.l.b16 %v222
  %v255 = vunpack.c.l.b16 %v223
  %v256 = vunpack.c.l.b16 %v224
  %v257 = vunpack.c.l.b16 %v225
  %v258 = vpack.c.b16 %v243, %v242
  %v259 = vpack.c.b16 %v245, %v244
  %v260 = vpack.c.b16 %v247, %v246
  %v261 = vpack.c.b16 %v249, %v248
  %v262 = vpack.c.b16 %v251, %v250
  %v263 = vpack.c.b16 %v253, %v252
  %v264 = vpack.c.b16 %v255, %v254
  %v265 = vpack.c.b16 %v257, %v256
  %274 = vmatprep.subr.bf16.mxu0 0
  %275 = vmatpush1.bf16.msra.mxu0 %v258
  %276 = vmatprep.subr.bf16.mxu0 0
  %277 = vmatpush1.bf16.msra.mxu0 %v259
  %278 = vmatprep.subr.bf16.mxu0 0
  %279 = vmatpush1.bf16.msra.mxu0 %v260
  %280 = vmatprep.subr.bf16.mxu0 0
  %281 = vmatpush1.bf16.msra.mxu0 %v261
  %282 = vmatprep.subr.bf16.mxu0 0
  %283 = vmatpush1.bf16.msra.mxu0 %v262
  %284 = vmatprep.subr.bf16.mxu0 0
  %285 = vmatpush1.bf16.msra.mxu0 %v263
  %286 = vmatprep.subr.bf16.mxu0 0
  %287 = vmatpush1.bf16.msra.mxu0 %v264
  %288 = vmatprep.subr.bf16.mxu0 0
  %289 = vmatpush1.bf16.msra.mxu0 %v265
  %290 = vmatprep.subr.bf16.mxu0 0
  %291 = vmatpush1.bf16.msra.mxu0 0
  %292 = vmatprep.subr.bf16.mxu0 0
  %293 = vmatpush1.bf16.msra.mxu0 0
  %294 = vmatprep.subr.bf16.mxu0 0
  %295 = vmatpush1.bf16.msra.mxu0 0
  %296 = vmatprep.subr.bf16.mxu0 0
  %297 = vmatpush1.bf16.msra.mxu0 0
  %298 = vmatprep.subr.bf16.mxu0 0
  %299 = vmatpush1.bf16.msra.mxu0 0
  %300 = vmatprep.subr.bf16.mxu0 0
  %301 = vmatpush1.bf16.msra.mxu0 0
  %302 = vmatprep.subr.bf16.mxu0 0
  %303 = vmatpush1.bf16.msra.mxu0 0
  %304 = vmatprep.subr.bf16.mxu0 0
  %305 = vmatpush1.bf16.msra.mxu0 0
  %306 = vmatprep.mubr.bf16.mxu0 0
  %307 = vmatmul.mubr.bf16.gmra.mrb[0].mxu0 %v194
  %v308 = vpop.f32.mrb[0].mxu0
  %v309 = vadd.f32 0.0, %v308
  %v310 = vpop.f32.mrb[0].mxu0
  %v311 = vpop.f32.mrb[0].mxu0
  %v312 = vadd.f32 0.0, %v311
  %v313 = vpop.f32.mrb[0].mxu0
  %314 = vmatprep.mubr.bf16.mxu0 0
  %315 = vmatmul.mubr.bf16.gmra.mrb[0].mxu0 %v195
  %v316 = vpop.f32.mrb[0].mxu0
  %v317 = vadd.f32 0.0, %v316
  %v318 = vpop.f32.mrb[0].mxu0
  %v319 = vpop.f32.mrb[0].mxu0
  %v320 = vadd.f32 0.0, %v319
  %v321 = vpop.f32.mrb[0].mxu0
  %322 = vmatprep.mubr.bf16.mxu0 0
  %323 = vmatmul.mubr.bf16.gmra.mrb[0].mxu0 %v196
  %v324 = vpop.f32.mrb[0].mxu0
  %v325 = vadd.f32 0.0, %v324
  %v326 = vpop.f32.mrb[0].mxu0
  %v327 = vpop.f32.mrb[0].mxu0
  %v328 = vadd.f32 0.0, %v327
  %v329 = vpop.f32.mrb[0].mxu0
  %330 = vmatprep.mubr.bf16.mxu0 0
  %331 = vmatmul.mubr.bf16.gmra.mrb[0].mxu0 %v197
  %v332 = vpop.f32.mrb[0].mxu0
  %v333 = vadd.f32 0.0, %v332
  %v334 = vpop.f32.mrb[0].mxu0
  %v335 = vpop.f32.mrb[0].mxu0
  %v336 = vadd.f32 0.0, %v335
  %v337 = vpop.f32.mrb[0].mxu0
  %338 = vmatprep.mubr.bf16.mxu0 0
  %339 = vmatmul.mubr.bf16.gmra.mrb[0].mxu0 %v198
  %v340 = vpop.f32.mrb[0].mxu0
  %v341 = vadd.f32 0.0, %v340
  %v342 = vpop.f32.mrb[0].mxu0
  %v343 = vpop.f32.mrb[0].mxu0
  %v344 = vadd.f32 0.0, %v343
  %v345 = vpop.f32.mrb[0].mxu0
  %346 = vmatprep.mubr.bf16.mxu0 0
  %347 = vmatmul.mubr.bf16.gmra.mrb[0].mxu0 %v199
  %v348 = vpop.f32.mrb[0].mxu0
  %v349 = vadd.f32 0.0, %v348
  %v350 = vpop.f32.mrb[0].mxu0
  %v351 = vpop.f32.mrb[0].mxu0
  %v352 = vadd.f32 0.0, %v351
  %v353 = vpop.f32.mrb[0].mxu0
  %354 = vmatprep.mubr.bf16.mxu0 0
  %355 = vmatmul.mubr.bf16.gmra.mrb[0].mxu0 %v200
  %v356 = vpop.f32.mrb[0].mxu0
  %v357 = vadd.f32 0.0, %v356
  %v358 = vpop.f32.mrb[0].mxu0
  %v359 = vpop.f32.mrb[0].mxu0
  %v360 = vadd.f32 0.0, %v359
  %v361 = vpop.f32.mrb[0].mxu0
  %362 = vmatprep.mubr.bf16.mxu0 0
  %363 = vmatmul.mubr.bf16.gmra.mrb[0].mxu0 %v201
  %v364 = vpop.f32.mrb[0].mxu0
  %v365 = vadd.f32 0.0, %v364
  %v366 = vpop.f32.mrb[0].mxu0
  %v367 = vpop.f32.mrb[0].mxu0
  %v368 = vadd.f32 0.0, %v367
  %v369 = vpop.f32.mrb[0].mxu0
  %370 = vmatprep.mubr.bf16.mxu0 0
  %371 = vmatmul.mubr.bf16.gmra.mrb[0].mxu0 %v202
  %v372 = vpop.f32.mrb[0].mxu0
  %v373 = vadd.f32 0.0, %v372
  %v374 = vpop.f32.mrb[0].mxu0
  %v375 = vpop.f32.mrb[0].mxu0
  %v376 = vadd.f32 0.0, %v375
  %v377 = vpop.f32.mrb[0].mxu0
  %378 = vmatprep.mubr.bf16.mxu0 0
  %379 = vmatmul.mubr.bf16.gmra.mrb[0].mxu0 %v203
  %v380 = vpop.f32.mrb[0].mxu0
  %v381 = vadd.f32 0.0, %v380
  %v382 = vpop.f32.mrb[0].mxu0
  %v383 = vpop.f32.mrb[0].mxu0
  %v384 = vadd.f32 0.0, %v383
  %v385 = vpop.f32.mrb[0].mxu0
  %386 = vmatprep.mubr.bf16.mxu0 0
  %387 = vmatmul.mubr.bf16.gmra.mrb[0].mxu0 %v204
  %v388 = vpop.f32.mrb[0].mxu0
  %v389 = vadd.f32 0.0, %v388
  %v390 = vpop.f32.mrb[0].mxu0
  %v391 = vpop.f32.mrb[0].mxu0
  %v392 = vadd.f32 0.0, %v391
  %v393 = vpop.f32.mrb[0].mxu0
  %394 = vmatprep.mubr.bf16.mxu0 0
  %395 = vmatmul.mubr.bf16.gmra.mrb[0].mxu0 %v205
  %v396 = vpop.f32.mrb[0].mxu0
  %v397 = vadd.f32 0.0, %v396
  %v398 = vpop.f32.mrb[0].mxu0
  %v399 = vpop.f32.mrb[0].mxu0
  %v400 = vadd.f32 0.0, %v399
  %v401 = vpop.f32.mrb[0].mxu0
  %402 = vmatprep.mubr.bf16.mxu0 0
  %403 = vmatmul.mubr.bf16.gmra.mrb[0].mxu0 %v206
  %v404 = vpop.f32.mrb[0].mxu0
  %v405 = vadd.f32 0.0, %v404
  %v406 = vpop.f32.mrb[0].mxu0
  %v407 = vpop.f32.mrb[0].mxu0
  %v408 = vadd.f32 0.0, %v407
  %v409 = vpop.f32.mrb[0].mxu0
  %410 = vmatprep.mubr.bf16.mxu0 0
  %411 = vmatmul.mubr.bf16.gmra.mrb[0].mxu0 %v207
  %v412 = vpop.f32.mrb[0].mxu0
  %v413 = vadd.f32 0.0, %v412
  %v414 = vpop.f32.mrb[0].mxu0
  %v415 = vpop.f32.mrb[0].mxu0
  %v416 = vadd.f32 0.0, %v415
  %v417 = vpop.f32.mrb[0].mxu0
  %418 = vmatprep.mubr.bf16.mxu0 0
  %419 = vmatmul.mubr.bf16.gmra.mrb[0].mxu0 %v208
  %v420 = vpop.f32.mrb[0].mxu0
  %v421 = vadd.f32 0.0, %v420
  %v422 = vpop.f32.mrb[0].mxu0
  %v423 = vpop.f32.mrb[0].mxu0
  %v424 = vadd.f32 0.0, %v423
  %v425 = vpop.f32.mrb[0].mxu0
  %426 = vmatprep.mubr.bf16.mxu0 0
  %427 = vmatmul.mubr.bf16.gmra.mrb[0].mxu0 %v209
  %v428 = vpop.f32.mrb[0].mxu0
  %v429 = vadd.f32 0.0, %v428
  %v430 = vpop.f32.mrb[0].mxu0
  %v431 = vpop.f32.mrb[0].mxu0
  %v432 = vadd.f32 0.0, %v431
  %v433 = vpop.f32.mrb[0].mxu0
  %434 = vdwg.mxu0
  %v435 = vpack.c.bf16 %v312, %v309
  %v436 = vpack.c.bf16 %v320, %v317
  %v437 = vpack.c.bf16 %v328, %v325
  %v438 = vpack.c.bf16 %v336, %v333
  %v439 = vpack.c.bf16 %v344, %v341
  %v440 = vpack.c.bf16 %v352, %v349
  %v441 = vpack.c.bf16 %v360, %v357
  %v442 = vpack.c.bf16 %v368, %v365
  %v443 = vpack.c.bf16 %v376, %v373
  %v444 = vpack.c.bf16 %v384, %v381
  %v445 = vpack.c.bf16 %v392, %v389
  %v446 = vpack.c.bf16 %v400, %v397
  %v447 = vpack.c.bf16 %v408, %v405
  %v448 = vpack.c.bf16 %v416, %v413
  %v449 = vpack.c.bf16 %v424, %v421
  %v450 = vpack.c.bf16 %v432, %v429
  %v467 = vunpack.c.l.b16 %v435
  %v468 = vunpack.c.h.b16 %v435
  %v469 = vunpack.c.l.b16 %v436
  %v470 = vunpack.c.h.b16 %v436
  %v471 = vunpack.c.l.b16 %v437
  %v472 = vunpack.c.h.b16 %v437
  %v473 = vunpack.c.l.b16 %v438
  %v474 = vunpack.c.h.b16 %v438
  %v475 = vunpack.c.l.b16 %v439
  %v476 = vunpack.c.h.b16 %v439
  %v477 = vunpack.c.l.b16 %v440
  %v478 = vunpack.c.h.b16 %v440
  %v479 = vunpack.c.l.b16 %v441
  %v480 = vunpack.c.h.b16 %v441
  %v481 = vunpack.c.l.b16 %v442
  %v482 = vunpack.c.h.b16 %v442
  %v483 = vunpack.c.l.b16 %v443
  %v484 = vunpack.c.h.b16 %v443
  %v485 = vunpack.c.l.b16 %v444
  %v486 = vunpack.c.h.b16 %v444
  %v487 = vunpack.c.l.b16 %v445
  %v488 = vunpack.c.h.b16 %v445
  %v489 = vunpack.c.l.b16 %v446
  %v490 = vunpack.c.h.b16 %v446
  %v491 = vunpack.c.l.b16 %v447
  %v492 = vunpack.c.h.b16 %v447
  %v493 = vunpack.c.l.b16 %v448
  %v494 = vunpack.c.h.b16 %v448
  %v495 = vunpack.c.l.b16 %v449
  %v496 = vunpack.c.h.b16 %v449
  %v497 = vunpack.c.l.b16 %v450
  %v498 = vunpack.c.h.b16 %v450
  %v499 = vpack.c.b16 %v467, %v467
  %v500 = vpack.c.b16 %v468, %v468
  %v501 = vpack.c.b16 %v469, %v469
  %v502 = vpack.c.b16 %v470, %v470
  %v503 = vpack.c.b16 %v471, %v471
  %v504 = vpack.c.b16 %v472, %v472
  %v505 = vpack.c.b16 %v473, %v473
  %v506 = vpack.c.b16 %v474, %v474
  %v507 = vpack.c.b16 %v475, %v475
  %v508 = vpack.c.b16 %v476, %v476
  %v509 = vpack.c.b16 %v477, %v477
  %v510 = vpack.c.b16 %v478, %v478
  %v511 = vpack.c.b16 %v479, %v479
  %v512 = vpack.c.b16 %v480, %v480
  %v513 = vpack.c.b16 %v481, %v481
  %v514 = vpack.c.b16 %v482, %v482
  %v515 = vpack.c.b16 %v483, %v483
  %v516 = vpack.c.b16 %v484, %v484
  %v517 = vpack.c.b16 %v485, %v485
  %v518 = vpack.c.b16 %v486, %v486
  %v519 = vpack.c.b16 %v487, %v487
  %v520 = vpack.c.b16 %v488, %v488
  %v521 = vpack.c.b16 %v489, %v489
  %v522 = vpack.c.b16 %v490, %v490
  %v523 = vpack.c.b16 %v491, %v491
  %v524 = vpack.c.b16 %v492, %v492
  %v525 = vpack.c.b16 %v493, %v493
  %v526 = vpack.c.b16 %v494, %v494
  %v527 = vpack.c.b16 %v495, %v495
  %v528 = vpack.c.b16 %v496, %v496
  %v529 = vpack.c.b16 %v497, %v497
  %v530 = vpack.c.b16 %v498, %v498
  %563 = vst [vmem:[%s4] sm:$0xf] %v499
  %564 = vst [vmem:[%s4 + $0x4] sm:$0xf] %v500
  %565 = vst [vmem:[%s4 + $0x8] sm:$0xf] %v501
  %566 = vst [vmem:[%s4 + $0xc] sm:$0xf] %v502
  %567 = vst [vmem:[%s4 + $0x10] sm:$0xf] %v503
  %568 = vst [vmem:[%s4 + $0x14] sm:$0xf] %v504
  %569 = vst [vmem:[%s4 + $0x18] sm:$0xf] %v505
  %570 = vst [vmem:[%s4 + $0x1c] sm:$0xf] %v506
  %571 = vst [vmem:[%s4 + $0x20] sm:$0xf] %v507
  %572 = vst [vmem:[%s4 + $0x24] sm:$0xf] %v508
  %573 = vst [vmem:[%s4 + $0x28] sm:$0xf] %v509
  %574 = vst [vmem:[%s4 + $0x2c] sm:$0xf] %v510
  %575 = vst [vmem:[%s4 + $0x30] sm:$0xf] %v511
  %576 = vst [vmem:[%s4 + $0x34] sm:$0xf] %v512
  %577 = vst [vmem:[%s4 + $0x38] sm:$0xf] %v513
  %578 = vst [vmem:[%s4 + $0x3c] sm:$0xf] %v514
  %579 = vst [vmem:[%s4 + $0x40] sm:$0xf] %v515
  %580 = vst [vmem:[%s4 + $0x44] sm:$0xf] %v516
  %581 = vst [vmem:[%s4 + $0x48] sm:$0xf] %v517
  %582 = vst [vmem:[%s4 + $0x4c] sm:$0xf] %v518
  %583 = vst [vmem:[%s4 + $0x50] sm:$0xf] %v519
  %584 = vst [vmem:[%s4 + $0x54] sm:$0xf] %v520
  %585 = vst [vmem:[%s4 + $0x58] sm:$0xf] %v521
  %586 = vst [vmem:[%s4 + $0x5c] sm:$0xf] %v522
  %587 = vst [vmem:[%s4 + $0x60] sm:$0xf] %v523
  %588 = vst [vmem:[%s4 + $0x64] sm:$0xf] %v524
  %589 = vst [vmem:[%s4 + $0x68] sm:$0xf] %v525
  %590 = vst [vmem:[%s4 + $0x6c] sm:$0xf] %v526
  %591 = vst [vmem:[%s4 + $0x70] sm:$0xf] %v527
  %592 = vst [vmem:[%s4 + $0x74] sm:$0xf] %v528
  %593 = vst [vmem:[%s4 + $0x78] sm:$0xf] %v529
  %594 = vst [vmem:[%s4 + $0x7c] sm:$0xf] %v530
  %v595 = vadd.f32 %v309, %v312
  %v596 = vadd.f32 %v595, %v317
  %v597 = vadd.f32 %v596, %v320
  %v598 = vadd.f32 %v597, %v325
  %v599 = vadd.f32 %v598, %v328
  %v600 = vadd.f32 %v599, %v333
  %v601 = vadd.f32 %v600, %v336
  %v602 = vadd.f32 %v601, %v341
  %v603 = vadd.f32 %v602, %v344
  %v604 = vadd.f32 %v603, %v349
  %v605 = vadd.f32 %v604, %v352
  %v606 = vadd.f32 %v605, %v357
  %v607 = vadd.f32 %v606, %v360
  %v608 = vadd.f32 %v607, %v365
  %v609 = vadd.f32 %v608, %v368
  %v610 = vadd.f32 %v609, %v373
  %v611 = vadd.f32 %v610, %v376
  %v612 = vadd.f32 %v611, %v381
  %v613 = vadd.f32 %v612, %v384
  %v614 = vadd.f32 %v613, %v389
  %v615 = vadd.f32 %v614, %v392
  %v616 = vadd.f32 %v615, %v397
  %v617 = vadd.f32 %v616, %v400
  %v618 = vadd.f32 %v617, %v405
  %v619 = vadd.f32 %v618, %v408
  %v620 = vadd.f32 %v619, %v413
  %v621 = vadd.f32 %v620, %v416
  %v622 = vadd.f32 %v621, %v421
  %v623 = vadd.f32 %v622, %v424
  %v624 = vadd.f32 %v623, %v429
  %v625 = vadd.f32 %v624, %v432
  %v626 = vrot.slane %v625, 4
  %v627 = vadd.f32 %v625, %v626
  %v628 = vrot.slane %v627, 2
  %v629 = vadd.f32 %v627, %v628
  %v630 = vrot.slane %v629, 1
  %v631 = vadd.f32 %v629, %v630
  %v632 = vmul.f32 %v309, %v309
  %v633 = vmul.f32 %v312, %v312
  %v634 = vmul.f32 %v317, %v317
  %v635 = vmul.f32 %v320, %v320
  %v636 = vmul.f32 %v325, %v325
  %v637 = vmul.f32 %v328, %v328
  %v638 = vmul.f32 %v333, %v333
  %v639 = vmul.f32 %v336, %v336
  %v640 = vmul.f32 %v341, %v341
  %v641 = vmul.f32 %v344, %v344
  %v642 = vmul.f32 %v349, %v349
  %v643 = vmul.f32 %v352, %v352
  %v644 = vmul.f32 %v357, %v357
  %v645 = vmul.f32 %v360, %v360
  %v646 = vmul.f32 %v365, %v365
  %v647 = vmul.f32 %v368, %v368
  %v648 = vmul.f32 %v373, %v373
  %v649 = vmul.f32 %v376, %v376
  %v650 = vmul.f32 %v381, %v381
  %v651 = vmul.f32 %v384, %v384
  %v652 = vmul.f32 %v389, %v389
  %v653 = vmul.f32 %v392, %v392
  %v654 = vmul.f32 %v397, %v397
  %v655 = vmul.f32 %v400, %v400
  %v656 = vmul.f32 %v405, %v405
  %v657 = vmul.f32 %v408, %v408
  %v658 = vmul.f32 %v413, %v413
  %v659 = vmul.f32 %v416, %v416
  %v660 = vmul.f32 %v421, %v421
  %v661 = vmul.f32 %v424, %v424
  %v662 = vmul.f32 %v429, %v429
  %v663 = vmul.f32 %v432, %v432
  %v664 = vadd.f32 %v632, %v633
  %v665 = vadd.f32 %v664, %v634
  %v666 = vadd.f32 %v665, %v635
  %v667 = vadd.f32 %v666, %v636
  %v668 = vadd.f32 %v667, %v637
  %v669 = vadd.f32 %v668, %v638
  %v670 = vadd.f32 %v669, %v639
  %v671 = vadd.f32 %v670, %v640
  %v672 = vadd.f32 %v671, %v641
  %v673 = vadd.f32 %v672, %v642
  %v674 = vadd.f32 %v673, %v643
  %v675 = vadd.f32 %v674, %v644
  %v676 = vadd.f32 %v675, %v645
  %v677 = vadd.f32 %v676, %v646
  %v678 = vadd.f32 %v677, %v647
  %v679 = vadd.f32 %v678, %v648
  %v680 = vadd.f32 %v679, %v649
  %v681 = vadd.f32 %v680, %v650
  %v682 = vadd.f32 %v681, %v651
  %v683 = vadd.f32 %v682, %v652
  %v684 = vadd.f32 %v683, %v653
  %v685 = vadd.f32 %v684, %v654
  %v686 = vadd.f32 %v685, %v655
  %v687 = vadd.f32 %v686, %v656
  %v688 = vadd.f32 %v687, %v657
  %v689 = vadd.f32 %v688, %v658
  %v690 = vadd.f32 %v689, %v659
  %v691 = vadd.f32 %v690, %v660
  %v692 = vadd.f32 %v691, %v661
  %v693 = vadd.f32 %v692, %v662
  %v694 = vadd.f32 %v693, %v663
  %v695 = vrot.slane %v694, 4
  %v696 = vadd.f32 %v694, %v695
  %v697 = vrot.slane %v696, 2
  %v698 = vadd.f32 %v696, %v697
  %v699 = vrot.slane %v698, 1
  %v700 = vadd.f32 %v698, %v699
  %vm701 = vcmask 1040384
  %v702 = vsel %vm701, %v631, %v700
  %703 = vst [vmem:[%s5] sm:$0x3] %v702
  // Predicated region
  $region18: #{refine_block_forward.21} parent=0 // pred_check
    _
  $region19: #{refine_block_forward.21} parent=0 // pred_check_branch
    %705 = sbr.rel (0) target = $region21
  $region20: #{refine_block_forward.21} parent=0 // pred_region
    _
  $region21: #{refine_block_forward.21} parent=0 // pred_fallthru
    _
  // Predicated region
  $region22: #{refine_block_forward.21} parent=0 // pred_check
    _
  $region23: #{refine_block_forward.21} parent=0 // pred_check_branch
    %707 = sbr.rel (0) target = $region25
  $region24: #{refine_block_forward.21} parent=0 // pred_region
    _
  $region25: #{refine_block_forward.21} parent=0 // pred_fallthru
    _
  // Predicated region
  $region26: #{refine_block_forward.21} parent=0 // pred_check
    _
  $region27: #{refine_block_forward.21} parent=0 // pred_check_branch
    %709 = sbr.rel (0) target = $region29
  $region28: #{refine_block_forward.21} parent=0 // pred_region
    _
  $region29: #{refine_block_forward.21} parent=0 // pred_fallthru
    _
  // Predicated region
  $region30: #{refine_block_forward.21} parent=0 // pred_check
    _
  $region31: #{refine_block_forward.21} parent=0 // pred_check_branch
    %711 = sbr.rel (0) target = $region33
  $region32: #{refine_block_forward.21} parent=0 // pred_region
    _
  $region33: #{refine_block_forward.21} parent=0 // pred_fallthru
    _

// kernel: refine_block_forward.23
$region0: #{refine_block_forward.23}
  #allocation0 [shape = 'u32[]', space=smem, size = 0x4, offset = 0x4, fixed_abs, tag = 'smem constant byte address 0x4 - core index']
  #allocation1 [shape = 'u32[144,128]{1,0:T(1,128)}', space=vmem, size = 0x12000, scoped, tag = 'internal scratch']
  %s0 = inlined_call_operand.vmem [shape: f32[32,68], index: 0, kind: input, shape index: {}]
  %s1 = inlined_call_operand.vmem [shape: bf16[68,128], index: 1, kind: input, shape index: {}]
  %s2 = inlined_call_operand.vmem [shape: bf16[32,128], index: 2, kind: output, shape index: {0}]
  %s3 = inlined_call_operand.vmem [shape: f32[1,2,128], index: 3, kind: output, shape index: {1}]
  %4 = xla_tuple %s2, %s3
  %s5 = sld [smem:[#allocation0]]
  $region26: #{refine_block_forward.23} parent=0
    _
  %s7 = ssub.s32 1, %s5
  %s8 = scalar_select 0, %s7, %s5
  // Predicated region
  $region2: #{refine_block_forward.23} parent=0 // pred_check
    _
  $region3: #{refine_block_forward.23} parent=0 // pred_check_branch
    %10 = sbr.rel (0) target = $region5
  $region4: #{refine_block_forward.23} parent=0 // pred_region
    _
  $region5: #{refine_block_forward.23} parent=0 // pred_fallthru
    _
  // Predicated region
  $region6: #{refine_block_forward.23} parent=0 // pred_check
    _
  $region7: #{refine_block_forward.23} parent=0 // pred_check_branch
    %12 = sbr.rel (0) target = $region9
  $region8: #{refine_block_forward.23} parent=0 // pred_region
    _
  $region9: #{refine_block_forward.23} parent=0 // pred_fallthru
    _
  %v14 = vld [vmem:[%s0] sm:$0xff]
  %v15 = vld [vmem:[%s0 + $0x8] sm:$0xff]
  %v16 = vld [vmem:[%s0 + $0x10] sm:$0xff]
  %v17 = vld [vmem:[%s0 + $0x18] sm:$0xff]
  %v18 = vpack.c.bf16 %v15, %v14
  %v19 = vpack.c.bf16 %v17, %v16
  %v20 = vld [vmem:[%s1] sm:$0xf]
  %v21 = vld [vmem:[%s1 + $0x4] sm:$0xf]
  %v22 = vld [vmem:[%s1 + $0x8] sm:$0xf]
  %v23 = vld [vmem:[%s1 + $0xc] sm:$0xf]
  %v24 = vld [vmem:[%s1 + $0x10] sm:$0xf]
  %v25 = vld [vmem:[%s1 + $0x14] sm:$0xf]
  %v26 = vld [vmem:[%s1 + $0x18] sm:$0xf]
  %v27 = vld [vmem:[%s1 + $0x1c] sm:$0xf]
  %v28 = vld [vmem:[%s1 + $0x20] sm:$0x3]
  %v38 = vunpack.c.l.b16 %v20
  %v39 = vunpack.c.l.b16 %v21
  %v40 = vunpack.c.l.b16 %v22
  %v41 = vunpack.c.l.b16 %v23
  %v42 = vunpack.c.l.b16 %v24
  %v43 = vunpack.c.l.b16 %v25
  %v44 = vunpack.c.l.b16 %v26
  %v45 = vunpack.c.l.b16 %v27
  %v46 = vunpack.c.l.b16 %v28
  %v47 = vpack.c.b16 %v39, %v38
  %v48 = vpack.c.b16 %v41, %v40
  %v49 = vpack.c.b16 %v43, %v42
  %v50 = vpack.c.b16 %v45, %v44
  %v51 = vpack.c.b16 %v46, %v46
  %vm56 = vcmask 556032
  %v58 = vsel %vm56, %v18, 0
  %v61 = vsel %vm56, %v19, 0
  %vm63 = vcmask 1041408
  %v65 = vsel %vm63, %v51, 0
  %67 = vmatprep.subr.bf16.mxu0 0
  %68 = vmatpush1.bf16.msra.mxu0 %v47
  %69 = vmatprep.subr.bf16.mxu0 0
  %70 = vmatpush1.bf16.msra.mxu0 %v48
  %71 = vmatprep.subr.bf16.mxu0 0
  %72 = vmatpush1.bf16.msra.mxu0 %v49
  %73 = vmatprep.subr.bf16.mxu0 0
  %74 = vmatpush1.bf16.msra.mxu0 %v50
  %75 = vmatprep.subr.bf16.mxu0 0
  %76 = vmatpush1.bf16.msra.mxu0 %v65
  %77 = vmatprep.subr.bf16.mxu0 0
  %78 = vmatpush1.bf16.msra.mxu0 0
  %79 = vmatprep.subr.bf16.mxu0 0
  %80 = vmatpush1.bf16.msra.mxu0 0
  %81 = vmatprep.subr.bf16.mxu0 0
  %82 = vmatpush1.bf16.msra.mxu0 0
  %83 = vmatprep.subr.bf16.mxu0 0
  %84 = vmatpush1.bf16.msra.mxu0 0
  %85 = vmatprep.subr.bf16.mxu0 0
  %86 = vmatpush1.bf16.msra.mxu0 0
  %87 = vmatprep.subr.bf16.mxu0 0
  %88 = vmatpush1.bf16.msra.mxu0 0
  %89 = vmatprep.subr.bf16.mxu0 0
  %90 = vmatpush1.bf16.msra.mxu0 0
  %91 = vmatprep.subr.bf16.mxu0 0
  %92 = vmatpush1.bf16.msra.mxu0 0
  %93 = vmatprep.subr.bf16.mxu0 0
  %94 = vmatpush1.bf16.msra.mxu0 0
  %95 = vmatprep.subr.bf16.mxu0 0
  %96 = vmatpush1.bf16.msra.mxu0 0
  %97 = vmatprep.subr.bf16.mxu0 0
  %98 = vmatpush1.bf16.msra.mxu0 0
  %99 = vmatprep.mubr.bf16.mxu0 0
  %100 = vmatmul.mubr.bf16.gmra.mrb[0].mxu0 %v58
  %v101 = vpop.f32.mrb[0].mxu0
  %v102 = vadd.f32 0.0, %v101
  %v103 = vpop.f32.mrb[0].mxu0
  %v104 = vpop.f32.mrb[0].mxu0
  %v105 = vadd.f32 0.0, %v104
  %v106 = vpop.f32.mrb[0].mxu0
  %107 = vmatprep.mubr.bf16.mxu0 0
  %108 = vmatmul.mubr.bf16.gmra.mrb[0].mxu0 %v61
  %v109 = vpop.f32.mrb[0].mxu0
  %v110 = vadd.f32 0.0, %v109
  %v111 = vpop.f32.mrb[0].mxu0
  %v112 = vpop.f32.mrb[0].mxu0
  %v113 = vadd.f32 0.0, %v112
  %v114 = vpop.f32.mrb[0].mxu0
  %115 = vdwg.mxu0
  %v116 = vpack.c.bf16 %v105, %v102
  %v117 = vpack.c.bf16 %v113, %v110
  %v120 = vunpack.c.l.b16 %v116
  %v121 = vunpack.c.h.b16 %v116
  %v122 = vunpack.c.l.b16 %v117
  %v123 = vunpack.c.h.b16 %v117
  %v124 = vpack.c.b16 %v120, %v120
  %v125 = vpack.c.b16 %v121, %v121
  %v126 = vpack.c.b16 %v122, %v122
  %v127 = vpack.c.b16 %v123, %v123
  %132 = vst [vmem:[%s2] sm:$0xf] %v124
  %133 = vst [vmem:[%s2 + $0x4] sm:$0xf] %v125
  %134 = vst [vmem:[%s2 + $0x8] sm:$0xf] %v126
  %135 = vst [vmem:[%s2 + $0xc] sm:$0xf] %v127
  %v136 = vadd.f32 %v102, %v105
  %v137 = vadd.f32 %v136, %v110
  %v138 = vadd.f32 %v137, %v113
  %v139 = vrot.slane %v138, 4
  %v140 = vadd.f32 %v138, %v139
  %v141 = vrot.slane %v140, 2
  %v142 = vadd.f32 %v140, %v141
  %v143 = vrot.slane %v142, 1
  %v144 = vadd.f32 %v142, %v143
  %v145 = vmul.f32 %v102, %v102
  %v146 = vmul.f32 %v105, %v105
  %v147 = vmul.f32 %v110, %v110
  %v148 = vmul.f32 %v113, %v113
  %v149 = vadd.f32 %v145, %v146
  %v150 = vadd.f32 %v149, %v147
  %v151 = vadd.f32 %v150, %v148
  %v152 = vrot.slane %v151, 4
  %v153 = vadd.f32 %v151, %v152
  %v154 = vrot.slane %v153, 2
  %v155 = vadd.f32 %v153, %v154
  %v156 = vrot.slane %v155, 1
  %v157 = vadd.f32 %v155, %v156
  %vm158 = vcmask 1040384
  %v159 = vsel %vm158, %v144, %v157
  %160 = vst [vmem:[%s3] sm:$0x3] %v159
  // Predicated region
  $region10: #{refine_block_forward.23} parent=0 // pred_check
    _
  $region11: #{refine_block_forward.23} parent=0 // pred_check_branch
    %162 = sbr.rel (0) target = $region13
  $region12: #{refine_block_forward.23} parent=0 // pred_region
    _
  $region13: #{refine_block_forward.23} parent=0 // pred_fallthru
    _
  // Predicated region
  $region14: #{refine_block_forward.23} parent=0 // pred_check
    _
  $region15: #{refine_block_forward.23} parent=0 // pred_check_branch
    %164 = sbr.rel (0) target = $region17
  $region16: #{refine_block_forward.23} parent=0 // pred_region
    _
  $region17: #{refine_block_forward.23} parent=0 // pred_fallthru
    _
  // Predicated region
  $region18: #{refine_block_forward.23} parent=0 // pred_check
    _
  $region19: #{refine_block_forward.23} parent=0 // pred_check_branch
    %166 = sbr.rel (0) target = $region21
  $region20: #{refine_block_forward.23} parent=0 // pred_region
    _
  $region21: #{refine_block_forward.23} parent=0 // pred_fallthru
    _
  // Predicated region
  $region22: #{refine_block_forward.23} parent=0 // pred_check
    _
  $region23: #{refine_block_forward.23} parent=0 // pred_check_branch
    %168 = sbr.rel (0) target = $region25
  $region24: #{refine_block_forward.23} parent=0 // pred_region
    _
  $region25: #{refine_block_forward.23} parent=0 // pred_fallthru
    _

// kernel: refine_block_forward.22
$region0: #{refine_block_forward.22}
  #allocation0 [shape = 'u32[]', space=smem, size = 0x4, offset = 0x4, fixed_abs, tag = 'smem constant byte address 0x4 - core index']
  #allocation1 [shape = 'u32[144,128]{1,0:T(1,128)}', space=vmem, size = 0x12000, scoped, tag = 'internal scratch']
  %s0 = inlined_call_operand.vmem [shape: bf16[32,8,128], index: 0, kind: input, shape index: {}]
  %s1 = inlined_call_operand.vmem [shape: f32[1,128], index: 1, kind: input, shape index: {}]
  %s2 = inlined_call_operand.vmem [shape: f32[1,128], index: 2, kind: input, shape index: {}]
  %s3 = inlined_call_operand.vmem [shape: f32[32,128], index: 3, kind: output, shape index: {}]
  %s4 = sld [smem:[#allocation0]]
  $region22: #{refine_block_forward.22} parent=0
    _
  %s6 = ssub.s32 1, %s4
  %s7 = scalar_select 0, %s6, %s4
  // Predicated region
  $region2: #{refine_block_forward.22} parent=0 // pred_check
    _
  $region3: #{refine_block_forward.22} parent=0 // pred_check_branch
    %9 = sbr.rel (0) target = $region5
  $region4: #{refine_block_forward.22} parent=0 // pred_region
    _
  $region5: #{refine_block_forward.22} parent=0 // pred_fallthru
    _
  // Predicated region
  $region6: #{refine_block_forward.22} parent=0 // pred_check
    _
  $region7: #{refine_block_forward.22} parent=0 // pred_check_branch
    %11 = sbr.rel (0) target = $region9
  $region8: #{refine_block_forward.22} parent=0 // pred_region
    _
  $region9: #{refine_block_forward.22} parent=0 // pred_fallthru
    _
  // Predicated region
  $region10: #{refine_block_forward.22} parent=0 // pred_check
    _
  $region11: #{refine_block_forward.22} parent=0 // pred_check_branch
    %13 = sbr.rel (0) target = $region13
  $region12: #{refine_block_forward.22} parent=0 // pred_region
    _
  $region13: #{refine_block_forward.22} parent=0 // pred_fallthru
    _
  %v14 = vld [vmem:[%s0] sm:$0xf]
  %v15 = vld [vmem:[%s0 + $0x4] sm:$0xf]
  %v16 = vld [vmem:[%s0 + $0x8] sm:$0xf]
  %v17 = vld [vmem:[%s0 + $0xc] sm:$0xf]
  %v18 = vld [vmem:[%s0 + $0x10] sm:$0xf]
  %v19 = vld [vmem:[%s0 + $0x14] sm:$0xf]
  %v20 = vld [vmem:[%s0 + $0x18] sm:$0xf]
  %v21 = vld [vmem:[%s0 + $0x1c] sm:$0xf]
  %v22 = vld [vmem:[%s0 + $0x20] sm:$0xf]
  %v23 = vld [vmem:[%s0 + $0x24] sm:$0xf]
  %v24 = vld [vmem:[%s0 + $0x28] sm:$0xf]
  %v25 = vld [vmem:[%s0 + $0x2c] sm:$0xf]
  %v26 = vld [vmem:[%s0 + $0x30] sm:$0xf]
  %v27 = vld [vmem:[%s0 + $0x34] sm:$0xf]
  %v28 = vld [vmem:[%s0 + $0x38] sm:$0xf]
  %v29 = vld [vmem:[%s0 + $0x3c] sm:$0xf]
  %v30 = vld [vmem:[%s0 + $0x40] sm:$0xf]
  %v31 = vld [vmem:[%s0 + $0x44] sm:$0xf]
  %v32 = vld [vmem:[%s0 + $0x48] sm:$0xf]
  %v33 = vld [vmem:[%s0 + $0x4c] sm:$0xf]
  %v34 = vld [vmem:[%s0 + $0x50] sm:$0xf]
  %v35 = vld [vmem:[%s0 + $0x54] sm:$0xf]
  %v36 = vld [vmem:[%s0 + $0x58] sm:$0xf]
  %v37 = vld [vmem:[%s0 + $0x5c] sm:$0xf]
  %v38 = vld [vmem:[%s0 + $0x60] sm:$0xf]
  %v39 = vld [vmem:[%s0 + $0x64] sm:$0xf]
  %v40 = vld [vmem:[%s0 + $0x68] sm:$0xf]
  %v41 = vld [vmem:[%s0 + $0x6c] sm:$0xf]
  %v42 = vld [vmem:[%s0 + $0x70] sm:$0xf]
  %v43 = vld [vmem:[%s0 + $0x74] sm:$0xf]
  %v44 = vld [vmem:[%s0 + $0x78] sm:$0xf]
  %v45 = vld [vmem:[%s0 + $0x7c] sm:$0xf]
  %v46 = vunpack.c.l.bf16 %v14
  %v47 = vunpack.c.l.bf16 %v15
  %v48 = vunpack.c.l.bf16 %v16
  %v49 = vunpack.c.l.bf16 %v17
  %v50 = vunpack.c.l.bf16 %v18
  %v51 = vunpack.c.l.bf16 %v19
  %v52 = vunpack.c.l.bf16 %v20
  %v53 = vunpack.c.l.bf16 %v21
  %v54 = vunpack.c.l.bf16 %v22
  %v55 = vunpack.c.l.bf16 %v23
  %v56 = vunpack.c.l.bf16 %v24
  %v57 = vunpack.c.l.bf16 %v25
  %v58 = vunpack.c.l.bf16 %v26
  %v59 = vunpack.c.l.bf16 %v27
  %v60 = vunpack.c.l.bf16 %v28
  %v61 = vunpack.c.l.bf16 %v29
  %v62 = vunpack.c.l.bf16 %v30
  %v63 = vunpack.c.l.bf16 %v31
  %v64 = vunpack.c.l.bf16 %v32
  %v65 = vunpack.c.l.bf16 %v33
  %v66 = vunpack.c.l.bf16 %v34
  %v67 = vunpack.c.l.bf16 %v35
  %v68 = vunpack.c.l.bf16 %v36
  %v69 = vunpack.c.l.bf16 %v37
  %v70 = vunpack.c.l.bf16 %v38
  %v71 = vunpack.c.l.bf16 %v39
  %v72 = vunpack.c.l.bf16 %v40
  %v73 = vunpack.c.l.bf16 %v41
  %v74 = vunpack.c.l.bf16 %v42
  %v75 = vunpack.c.l.bf16 %v43
  %v76 = vunpack.c.l.bf16 %v44
  %v77 = vunpack.c.l.bf16 %v45
  %v78 = vld [vmem:[%s1] sm:$0x1]
  %v80 = vlaneseq
  %v81 = vshrl.u32 %v80, 7
  %v82 = vsub.s32 0, %v81
  %v83 = vrot.slane %v78, %v82
  %v85 = vmul.f32 %v46, %v83
  %v86 = vmul.f32 %v47, %v83
  %v87 = vmul.f32 %v48, %v83
  %v88 = vmul.f32 %v49, %v83
  %v89 = vmul.f32 %v50, %v83
  %v90 = vmul.f32 %v51, %v83
  %v91 = vmul.f32 %v52, %v83
  %v92 = vmul.f32 %v53, %v83
  %v93 = vmul.f32 %v54, %v83
  %v94 = vmul.f32 %v55, %v83
  %v95 = vmul.f32 %v56, %v83
  %v96 = vmul.f32 %v57, %v83
  %v97 = vmul.f32 %v58, %v83
  %v98 = vmul.f32 %v59, %v83
  %v99 = vmul.f32 %v60, %v83
  %v100 = vmul.f32 %v61, %v83
  %v101 = vmul.f32 %v62, %v83
  %v102 = vmul.f32 %v63, %v83
  %v103 = vmul.f32 %v64, %v83
  %v104 = vmul.f32 %v65, %v83
  %v105 = vmul.f32 %v66, %v83
  %v106 = vmul.f32 %v67, %v83
  %v107 = vmul.f32 %v68, %v83
  %v108 = vmul.f32 %v69, %v83
  %v109 = vmul.f32 %v70, %v83
  %v110 = vmul.f32 %v71, %v83
  %v111 = vmul.f32 %v72, %v83
  %v112 = vmul.f32 %v73, %v83
  %v113 = vmul.f32 %v74, %v83
  %v114 = vmul.f32 %v75, %v83
  %v115 = vmul.f32 %v76, %v83
  %v116 = vmul.f32 %v77, %v83
  %v117 = vld [vmem:[%s2] sm:$0x1]
  %v119 = vlaneseq
  %v120 = vshrl.u32 %v119, 7
  %v121 = vsub.s32 0, %v120
  %v122 = vrot.slane %v117, %v121
  %v124 = vadd.f32 %v85, %v122
  %v125 = vadd.f32 %v86, %v122
  %v126 = vadd.f32 %v87, %v122
  %v127 = vadd.f32 %v88, %v122
  %v128 = vadd.f32 %v89, %v122
  %v129 = vadd.f32 %v90, %v122
  %v130 = vadd.f32 %v91, %v122
  %v131 = vadd.f32 %v92, %v122
  %v132 = vadd.f32 %v93, %v122
  %v133 = vadd.f32 %v94, %v122
  %v134 = vadd.f32 %v95, %v122
  %v135 = vadd.f32 %v96, %v122
  %v136 = vadd.f32 %v97, %v122
  %v137 = vadd.f32 %v98, %v122
  %v138 = vadd.f32 %v99, %v122
  %v139 = vadd.f32 %v100, %v122
  %v140 = vadd.f32 %v101, %v122
  %v141 = vadd.f32 %v102, %v122
  %v142 = vadd.f32 %v103, %v122
  %v143 = vadd.f32 %v104, %v122
  %v144 = vadd.f32 %v105, %v122
  %v145 = vadd.f32 %v106, %v122
  %v146 = vadd.f32 %v107, %v122
  %v147 = vadd.f32 %v108, %v122
  %v148 = vadd.f32 %v109, %v122
  %v149 = vadd.f32 %v110, %v122
  %v150 = vadd.f32 %v111, %v122
  %v151 = vadd.f32 %v112, %v122
  %v152 = vadd.f32 %v113, %v122
  %v153 = vadd.f32 %v114, %v122
  %v154 = vadd.f32 %v115, %v122
  %v155 = vadd.f32 %v116, %v122
  %v156 = vmax.f32 %v124, 0.0
  %v157 = vmax.f32 %v125, 0.0
  %v158 = vmax.f32 %v126, 0.0
  %v159 = vmax.f32 %v127, 0.0
  %v160 = vmax.f32 %v128, 0.0
  %v161 = vmax.f32 %v129, 0.0
  %v162 = vmax.f32 %v130, 0.0
  %v163 = vmax.f32 %v131, 0.0
  %v164 = vmax.f32 %v132, 0.0
  %v165 = vmax.f32 %v133, 0.0
  %v166 = vmax.f32 %v134, 0.0
  %v167 = vmax.f32 %v135, 0.0
  %v168 = vmax.f32 %v136, 0.0
  %v169 = vmax.f32 %v137, 0.0
  %v170 = vmax.f32 %v138, 0.0
  %v171 = vmax.f32 %v139, 0.0
  %v172 = vmax.f32 %v140, 0.0
  %v173 = vmax.f32 %v141, 0.0
  %v174 = vmax.f32 %v142, 0.0
  %v175 = vmax.f32 %v143, 0.0
  %v176 = vmax.f32 %v144, 0.0
  %v177 = vmax.f32 %v145, 0.0
  %v178 = vmax.f32 %v146, 0.0
  %v179 = vmax.f32 %v147, 0.0
  %v180 = vmax.f32 %v148, 0.0
  %v181 = vmax.f32 %v149, 0.0
  %v182 = vmax.f32 %v150, 0.0
  %v183 = vmax.f32 %v151, 0.0
  %v184 = vmax.f32 %v152, 0.0
  %v185 = vmax.f32 %v153, 0.0
  %v186 = vmax.f32 %v154, 0.0
  %v187 = vmax.f32 %v155, 0.0
  %v188 = vrot.slane %v156, 4
  %v189 = vmax.f32 %v156, %v188
  %v190 = vrot.slane %v189, 2
  %v191 = vmax.f32 %v189, %v190
  %v192 = vrot.slane %v191, 1
  %v193 = vmax.f32 %v191, %v192
  %v194 = vrot.slane %v157, 4
  %v195 = vmax.f32 %v157, %v194
  %v196 = vrot.slane %v195, 2
  %v197 = vmax.f32 %v195, %v196
  %v198 = vrot.slane %v197, 1
  %v199 = vmax.f32 %v197, %v198
  %v200 = vrot.slane %v158, 4
  %v201 = vmax.f32 %v158, %v200
  %v202 = vrot.slane %v201, 2
  %v203 = vmax.f32 %v201, %v202
  %v204 = vrot.slane %v203, 1
  %v205 = vmax.f32 %v203, %v204
  %v206 = vrot.slane %v159, 4
  %v207 = vmax.f32 %v159, %v206
  %v208 = vrot.slane %v207, 2
  %v209 = vmax.f32 %v207, %v208
  %v210 = vrot.slane %v209, 1
  %v211 = vmax.f32 %v209, %v210
  %v212 = vrot.slane %v160, 4
  %v213 = vmax.f32 %v160, %v212
  %v214 = vrot.slane %v213, 2
  %v215 = vmax.f32 %v213, %v214
  %v216 = vrot.slane %v215, 1
  %v217 = vmax.f32 %v215, %v216
  %v218 = vrot.slane %v161, 4
  %v219 = vmax.f32 %v161, %v218
  %v220 = vrot.slane %v219, 2
  %v221 = vmax.f32 %v219, %v220
  %v222 = vrot.slane %v221, 1
  %v223 = vmax.f32 %v221, %v222
  %v224 = vrot.slane %v162, 4
  %v225 = vmax.f32 %v162, %v224
  %v226 = vrot.slane %v225, 2
  %v227 = vmax.f32 %v225, %v226
  %v228 = vrot.slane %v227, 1
  %v229 = vmax.f32 %v227, %v228
  %v230 = vrot.slane %v163, 4
  %v231 = vmax.f32 %v163, %v230
  %v232 = vrot.slane %v231, 2
  %v233 = vmax.f32 %v231, %v232
  %v234 = vrot.slane %v233, 1
  %v235 = vmax.f32 %v233, %v234
  %v236 = vrot.slane %v164, 4
  %v237 = vmax.f32 %v164, %v236
  %v238 = vrot.slane %v237, 2
  %v239 = vmax.f32 %v237, %v238
  %v240 = vrot.slane %v239, 1
  %v241 = vmax.f32 %v239, %v240
  %v242 = vrot.slane %v165, 4
  %v243 = vmax.f32 %v165, %v242
  %v244 = vrot.slane %v243, 2
  %v245 = vmax.f32 %v243, %v244
  %v246 = vrot.slane %v245, 1
  %v247 = vmax.f32 %v245, %v246
  %v248 = vrot.slane %v166, 4
  %v249 = vmax.f32 %v166, %v248
  %v250 = vrot.slane %v249, 2
  %v251 = vmax.f32 %v249, %v250
  %v252 = vrot.slane %v251, 1
  %v253 = vmax.f32 %v251, %v252
  %v254 = vrot.slane %v167, 4
  %v255 = vmax.f32 %v167, %v254
  %v256 = vrot.slane %v255, 2
  %v257 = vmax.f32 %v255, %v256
  %v258 = vrot.slane %v257, 1
  %v259 = vmax.f32 %v257, %v258
  %v260 = vrot.slane %v168, 4
  %v261 = vmax.f32 %v168, %v260
  %v262 = vrot.slane %v261, 2
  %v263 = vmax.f32 %v261, %v262
  %v264 = vrot.slane %v263, 1
  %v265 = vmax.f32 %v263, %v264
  %v266 = vrot.slane %v169, 4
  %v267 = vmax.f32 %v169, %v266
  %v268 = vrot.slane %v267, 2
  %v269 = vmax.f32 %v267, %v268
  %v270 = vrot.slane %v269, 1
  %v271 = vmax.f32 %v269, %v270
  %v272 = vrot.slane %v170, 4
  %v273 = vmax.f32 %v170, %v272
  %v274 = vrot.slane %v273, 2
  %v275 = vmax.f32 %v273, %v274
  %v276 = vrot.slane %v275, 1
  %v277 = vmax.f32 %v275, %v276
  %v278 = vrot.slane %v171, 4
  %v279 = vmax.f32 %v171, %v278
  %v280 = vrot.slane %v279, 2
  %v281 = vmax.f32 %v279, %v280
  %v282 = vrot.slane %v281, 1
  %v283 = vmax.f32 %v281, %v282
  %v284 = vrot.slane %v172, 4
  %v285 = vmax.f32 %v172, %v284
  %v286 = vrot.slane %v285, 2
  %v287 = vmax.f32 %v285, %v286
  %v288 = vrot.slane %v287, 1
  %v289 = vmax.f32 %v287, %v288
  %v290 = vrot.slane %v173, 4
  %v291 = vmax.f32 %v173, %v290
  %v292 = vrot.slane %v291, 2
  %v293 = vmax.f32 %v291, %v292
  %v294 = vrot.slane %v293, 1
  %v295 = vmax.f32 %v293, %v294
  %v296 = vrot.slane %v174, 4
  %v297 = vmax.f32 %v174, %v296
  %v298 = vrot.slane %v297, 2
  %v299 = vmax.f32 %v297, %v298
  %v300 = vrot.slane %v299, 1
  %v301 = vmax.f32 %v299, %v300
  %v302 = vrot.slane %v175, 4
  %v303 = vmax.f32 %v175, %v302
  %v304 = vrot.slane %v303, 2
  %v305 = vmax.f32 %v303, %v304
  %v306 = vrot.slane %v305, 1
  %v307 = vmax.f32 %v305, %v306
  %v308 = vrot.slane %v176, 4
  %v309 = vmax.f32 %v176, %v308
  %v310 = vrot.slane %v309, 2
  %v311 = vmax.f32 %v309, %v310
  %v312 = vrot.slane %v311, 1
  %v313 = vmax.f32 %v311, %v312
  %v314 = vrot.slane %v177, 4
  %v315 = vmax.f32 %v177, %v314
  %v316 = vrot.slane %v315, 2
  %v317 = vmax.f32 %v315, %v316
  %v318 = vrot.slane %v317, 1
  %v319 = vmax.f32 %v317, %v318
  %v320 = vrot.slane %v178, 4
  %v321 = vmax.f32 %v178, %v320
  %v322 = vrot.slane %v321, 2
  %v323 = vmax.f32 %v321, %v322
  %v324 = vrot.slane %v323, 1
  %v325 = vmax.f32 %v323, %v324
  %v326 = vrot.slane %v179, 4
  %v327 = vmax.f32 %v179, %v326
  %v328 = vrot.slane %v327, 2
  %v329 = vmax.f32 %v327, %v328
  %v330 = vrot.slane %v329, 1
  %v331 = vmax.f32 %v329, %v330
  %v332 = vrot.slane %v180, 4
  %v333 = vmax.f32 %v180, %v332
  %v334 = vrot.slane %v333, 2
  %v335 = vmax.f32 %v333, %v334
  %v336 = vrot.slane %v335, 1
  %v337 = vmax.f32 %v335, %v336
  %v338 = vrot.slane %v181, 4
  %v339 = vmax.f32 %v181, %v338
  %v340 = vrot.slane %v339, 2
  %v341 = vmax.f32 %v339, %v340
  %v342 = vrot.slane %v341, 1
  %v343 = vmax.f32 %v341, %v342
  %v344 = vrot.slane %v182, 4
  %v345 = vmax.f32 %v182, %v344
  %v346 = vrot.slane %v345, 2
  %v347 = vmax.f32 %v345, %v346
  %v348 = vrot.slane %v347, 1
  %v349 = vmax.f32 %v347, %v348
  %v350 = vrot.slane %v183, 4
  %v351 = vmax.f32 %v183, %v350
  %v352 = vrot.slane %v351, 2
  %v353 = vmax.f32 %v351, %v352
  %v354 = vrot.slane %v353, 1
  %v355 = vmax.f32 %v353, %v354
  %v356 = vrot.slane %v184, 4
  %v357 = vmax.f32 %v184, %v356
  %v358 = vrot.slane %v357, 2
  %v359 = vmax.f32 %v357, %v358
  %v360 = vrot.slane %v359, 1
  %v361 = vmax.f32 %v359, %v360
  %v362 = vrot.slane %v185, 4
  %v363 = vmax.f32 %v185, %v362
  %v364 = vrot.slane %v363, 2
  %v365 = vmax.f32 %v363, %v364
  %v366 = vrot.slane %v365, 1
  %v367 = vmax.f32 %v365, %v366
  %v368 = vrot.slane %v186, 4
  %v369 = vmax.f32 %v186, %v368
  %v370 = vrot.slane %v369, 2
  %v371 = vmax.f32 %v369, %v370
  %v372 = vrot.slane %v371, 1
  %v373 = vmax.f32 %v371, %v372
  %v374 = vrot.slane %v187, 4
  %v375 = vmax.f32 %v187, %v374
  %v376 = vrot.slane %v375, 2
  %v377 = vmax.f32 %v375, %v376
  %v378 = vrot.slane %v377, 1
  %v379 = vmax.f32 %v377, %v378
  %vm412 = vcmask 1041409
  %v413 = vsel %vm412, %v199, %v193
  %vm414 = vcmask 1042434
  %v415 = vsel %vm414, %v205, %v413
  %vm416 = vcmask 1043459
  %v417 = vsel %vm416, %v211, %v415
  %vm418 = vcmask 1044484
  %v419 = vsel %vm418, %v217, %v417
  %vm420 = vcmask 1045509
  %v421 = vsel %vm420, %v223, %v419
  %vm422 = vcmask 1046534
  %v423 = vsel %vm422, %v229, %v421
  %vm424 = vcmask 1047559
  %v425 = vsel %vm424, %v235, %v423
  %v426 = vsel %vm412, %v247, %v241
  %v427 = vsel %vm414, %v253, %v426
  %v428 = vsel %vm416, %v259, %v427
  %v429 = vsel %vm418, %v265, %v428
  %v430 = vsel %vm420, %v271, %v429
  %v431 = vsel %vm422, %v277, %v430
  %v432 = vsel %vm424, %v283, %v431
  %v433 = vsel %vm412, %v295, %v289
  %v434 = vsel %vm414, %v301, %v433
  %v435 = vsel %vm416, %v307, %v434
  %v436 = vsel %vm418, %v313, %v435
  %v437 = vsel %vm420, %v319, %v436
  %v438 = vsel %vm422, %v325, %v437
  %v439 = vsel %vm424, %v331, %v438
  %v440 = vsel %vm412, %v343, %v337
  %v441 = vsel %vm414, %v349, %v440
  %v442 = vsel %vm416, %v355, %v441
  %v443 = vsel %vm418, %v361, %v442
  %v444 = vsel %vm420, %v367, %v443
  %v445 = vsel %vm422, %v373, %v444
  %v446 = vsel %vm424, %v379, %v445
  %451 = vst [vmem:[%s3] sm:$0xff] %v425
  %452 = vst [vmem:[%s3 + $0x8] sm:$0xff] %v432
  %453 = vst [vmem:[%s3 + $0x10] sm:$0xff] %v439
  %454 = vst [vmem:[%s3 + $0x18] sm:$0xff] %v446
  // Predicated region
  $region14: #{refine_block_forward.22} parent=0 // pred_check
    _
  $region15: #{refine_block_forward.22} parent=0 // pred_check_branch
    %456 = sbr.rel (0) target = $region17
  $region16: #{refine_block_forward.22} parent=0 // pred_region
    _
  $region17: #{refine_block_forward.22} parent=0 // pred_fallthru
    _
  // Predicated region
  $region18: #{refine_block_forward.22} parent=0 // pred_check
    _
  $region19: #{refine_block_forward.22} parent=0 // pred_check_branch
    %458 = sbr.rel (0) target = $region21
  $region20: #{refine_block_forward.22} parent=0 // pred_region
    _
  $region21: #{refine_block_forward.22} parent=0 // pred_fallthru
    _

// kernel: refine_block_forward.25
$region0: #{refine_block_forward.25}
  #allocation0 [shape = 'u32[]', space=smem, size = 0x4, offset = 0x4, fixed_abs, tag = 'smem constant byte address 0x4 - core index']
  #allocation1 [shape = 'u32[144,128]{1,0:T(1,128)}', space=vmem, size = 0x12000, scoped, tag = 'internal scratch']
  %s0 = inlined_call_operand.vmem [shape: bf16[32,128], index: 0, kind: input, shape index: {}]
  %s1 = inlined_call_operand.vmem [shape: f32[1,128], index: 1, kind: input, shape index: {}]
  %s2 = inlined_call_operand.vmem [shape: f32[1,128], index: 2, kind: input, shape index: {}]
  %s3 = inlined_call_operand.vmem [shape: f32[32,128], index: 3, kind: output, shape index: {}]
  %s4 = sld [smem:[#allocation0]]
  $region22: #{refine_block_forward.25} parent=0
    _
  %s6 = ssub.s32 1, %s4
  %s7 = scalar_select 0, %s6, %s4
  // Predicated region
  $region2: #{refine_block_forward.25} parent=0 // pred_check
    _
  $region3: #{refine_block_forward.25} parent=0 // pred_check_branch
    %9 = sbr.rel (0) target = $region5
  $region4: #{refine_block_forward.25} parent=0 // pred_region
    _
  $region5: #{refine_block_forward.25} parent=0 // pred_fallthru
    _
  // Predicated region
  $region6: #{refine_block_forward.25} parent=0 // pred_check
    _
  $region7: #{refine_block_forward.25} parent=0 // pred_check_branch
    %11 = sbr.rel (0) target = $region9
  $region8: #{refine_block_forward.25} parent=0 // pred_region
    _
  $region9: #{refine_block_forward.25} parent=0 // pred_fallthru
    _
  // Predicated region
  $region10: #{refine_block_forward.25} parent=0 // pred_check
    _
  $region11: #{refine_block_forward.25} parent=0 // pred_check_branch
    %13 = sbr.rel (0) target = $region13
  $region12: #{refine_block_forward.25} parent=0 // pred_region
    _
  $region13: #{refine_block_forward.25} parent=0 // pred_fallthru
    _
  %v14 = vld [vmem:[%s0] sm:$0xf]
  %v15 = vld [vmem:[%s0 + $0x4] sm:$0xf]
  %v16 = vld [vmem:[%s0 + $0x8] sm:$0xf]
  %v17 = vld [vmem:[%s0 + $0xc] sm:$0xf]
  %v18 = vunpack.c.l.bf16 %v14
  %v19 = vunpack.c.l.bf16 %v15
  %v20 = vunpack.c.l.bf16 %v16
  %v21 = vunpack.c.l.bf16 %v17
  %v22 = vld [vmem:[%s1] sm:$0x1]
  %v24 = vlaneseq
  %v25 = vshrl.u32 %v24, 7
  %v26 = vsub.s32 0, %v25
  %v27 = vrot.slane %v22, %v26
  %v29 = vmul.f32 %v18, %v27
  %v30 = vmul.f32 %v19, %v27
  %v31 = vmul.f32 %v20, %v27
  %v32 = vmul.f32 %v21, %v27
  %v33 = vld [vmem:[%s2] sm:$0x1]
  %v35 = vlaneseq
  %v36 = vshrl.u32 %v35, 7
  %v37 = vsub.s32 0, %v36
  %v38 = vrot.slane %v33, %v37
  %v40 = vadd.f32 %v29, %v38
  %v41 = vadd.f32 %v30, %v38
  %v42 = vadd.f32 %v31, %v38
  %v43 = vadd.f32 %v32, %v38
  %v44 = vxor.u32 %v40, 2147483648
  %v45 = vxor.u32 %v41, 2147483648
  %v46 = vxor.u32 %v42, 2147483648
  %v47 = vxor.u32 %v43, 2147483648
  %v48 = vmul.f32 %v44, 1.442695
  %v49 = vpow.pop %v48
  %v50 = vmul.f32 %v45, 1.442695
  %v51 = vpow.pop %v50
  %v52 = vmul.f32 %v46, 1.442695
  %v53 = vpow.pop %v52
  %v54 = vmul.f32 %v47, 1.442695
  %v55 = vpow.pop %v54
  %v56 = vadd.f32 %v49, 1.0
  %v57 = vadd.f32 %v51, 1.0
  %v58 = vadd.f32 %v53, 1.0
  %v59 = vadd.f32 %v55, 1.0
  %v60 = vrcp.pop %v56
  %v61 = vmul.f32 1.0, %v60
  %v62 = vrcp.pop %v57
  %v63 = vmul.f32 1.0, %v62
  %v64 = vrcp.pop %v58
  %v65 = vmul.f32 1.0, %v64
  %v66 = vrcp.pop %v59
  %v67 = vmul.f32 1.0, %v66
  %v68 = vmul.f32 %v40, %v61
  %v69 = vmul.f32 %v41, %v63
  %v70 = vmul.f32 %v42, %v65
  %v71 = vmul.f32 %v43, %v67
  %72 = vst [vmem:[%s3] sm:$0xff] %v68
  %73 = vst [vmem:[%s3 + $0x8] sm:$0xff] %v69
  %74 = vst [vmem:[%s3 + $0x10] sm:$0xff] %v70
  %75 = vst [vmem:[%s3 + $0x18] sm:$0xff] %v71
  // Predicated region
  $region14: #{refine_block_forward.25} parent=0 // pred_check
    _
  $region15: #{refine_block_forward.25} parent=0 // pred_check_branch
    %77 = sbr.rel (0) target = $region17
  $region16: #{refine_block_forward.25} parent=0 // pred_region
    _
  $region17: #{refine_block_forward.25} parent=0 // pred_fallthru
    _
  // Predicated region
  $region18: #{refine_block_forward.25} parent=0 // pred_check
    _
  $region19: #{refine_block_forward.25} parent=0 // pred_check_branch
    %79 = sbr.rel (0) target = $region21
  $region20: #{refine_block_forward.25} parent=0 // pred_region
    _
  $region21: #{refine_block_forward.25} parent=0 // pred_fallthru
    _

// kernel: refine_block_forward.24
$region0: #{refine_block_forward.24}
  #allocation0 [shape = 'u32[]', space=smem, size = 0x4, offset = 0x4, fixed_abs, tag = 'smem constant byte address 0x4 - core index']
  #allocation1 [shape = 'u32[144,128]{1,0:T(1,128)}', space=vmem, size = 0x12000, scoped, tag = 'internal scratch']
  %s0 = inlined_call_operand.vmem [shape: bf16[32,128], index: 0, kind: input, shape index: {}]
  %s1 = inlined_call_operand.vmem [shape: f32[1,128], index: 1, kind: input, shape index: {}]
  %s2 = inlined_call_operand.vmem [shape: f32[1,128], index: 2, kind: input, shape index: {}]
  %s3 = inlined_call_operand.vmem [shape: bf16[128,128], index: 3, kind: input, shape index: {}]
  %s4 = inlined_call_operand.vmem [shape: bf16[32,128], index: 4, kind: output, shape index: {0}]
  %s5 = inlined_call_operand.vmem [shape: f32[1,2,128], index: 5, kind: output, shape index: {1}]
  %6 = xla_tuple %s4, %s5
  %s7 = sld [smem:[#allocation0]]
  $region34: #{refine_block_forward.24} parent=0
    _
  %s9 = ssub.s32 1, %s7
  %s10 = scalar_select 0, %s9, %s7
  // Predicated region
  $region2: #{refine_block_forward.24} parent=0 // pred_check
    _
  $region3: #{refine_block_forward.24} parent=0 // pred_check_branch
    %12 = sbr.rel (0) target = $region5
  $region4: #{refine_block_forward.24} parent=0 // pred_region
    _
  $region5: #{refine_block_forward.24} parent=0 // pred_fallthru
    _
  // Predicated region
  $region6: #{refine_block_forward.24} parent=0 // pred_check
    _
  $region7: #{refine_block_forward.24} parent=0 // pred_check_branch
    %14 = sbr.rel (0) target = $region9
  $region8: #{refine_block_forward.24} parent=0 // pred_region
    _
  $region9: #{refine_block_forward.24} parent=0 // pred_fallthru
    _
  // Predicated region
  $region10: #{refine_block_forward.24} parent=0 // pred_check
    _
  $region11: #{refine_block_forward.24} parent=0 // pred_check_branch
    %16 = sbr.rel (0) target = $region13
  $region12: #{refine_block_forward.24} parent=0 // pred_region
    _
  $region13: #{refine_block_forward.24} parent=0 // pred_fallthru
    _
  // Predicated region
  $region14: #{refine_block_forward.24} parent=0 // pred_check
    _
  $region15: #{refine_block_forward.24} parent=0 // pred_check_branch
    %18 = sbr.rel (0) target = $region17
  $region16: #{refine_block_forward.24} parent=0 // pred_region
    _
  $region17: #{refine_block_forward.24} parent=0 // pred_fallthru
    _
  %v20 = vld [vmem:[%s0] sm:$0xf]
  %v21 = vld [vmem:[%s0 + $0x4] sm:$0xf]
  %v22 = vld [vmem:[%s0 + $0x8] sm:$0xf]
  %v23 = vld [vmem:[%s0 + $0xc] sm:$0xf]
  %v24 = vunpack.c.l.bf16 %v20
  %v25 = vunpack.c.l.bf16 %v21
  %v26 = vunpack.c.l.bf16 %v22
  %v27 = vunpack.c.l.bf16 %v23
  %v28 = vld [vmem:[%s1] sm:$0x1]
  %v30 = vlaneseq
  %v31 = vshrl.u32 %v30, 7
  %v32 = vsub.s32 0, %v31
  %v33 = vrot.slane %v28, %v32
  %v35 = vmul.f32 %v24, %v33
  %v36 = vmul.f32 %v25, %v33
  %v37 = vmul.f32 %v26, %v33
  %v38 = vmul.f32 %v27, %v33
  %v39 = vld [vmem:[%s2] sm:$0x1]
  %v41 = vlaneseq
  %v42 = vshrl.u32 %v41, 7
  %v43 = vsub.s32 0, %v42
  %v44 = vrot.slane %v39, %v43
  %v46 = vadd.f32 %v35, %v44
  %v47 = vadd.f32 %v36, %v44
  %v48 = vadd.f32 %v37, %v44
  %v49 = vadd.f32 %v38, %v44
  %v50 = vmax.f32 %v46, 0.0
  %v51 = vmax.f32 %v47, 0.0
  %v52 = vmax.f32 %v48, 0.0
  %v53 = vmax.f32 %v49, 0.0
  %v54 = vpack.c.bf16 %v51, %v50
  %v55 = vpack.c.bf16 %v53, %v52
  %v56 = vld [vmem:[%s3] sm:$0xf]
  %v57 = vld [vmem:[%s3 + $0x4] sm:$0xf]
  %v58 = vld [vmem:[%s3 + $0x8] sm:$0xf]
  %v59 = vld [vmem:[%s3 + $0xc] sm:$0xf]
  %v60 = vld [vmem:[%s3 + $0x10] sm:$0xf]
  %v61 = vld [vmem:[%s3 + $0x14] sm:$0xf]
  %v62 = vld [vmem:[%s3 + $0x18] sm:$0xf]
  %v63 = vld [vmem:[%s3 + $0x1c] sm:$0xf]
  %v64 = vld [vmem:[%s3 + $0x20] sm:$0xf]
  %v65 = vld [vmem:[%s3 + $0x24] sm:$0xf]
  %v66 = vld [vmem:[%s3 + $0x28] sm:$0xf]
  %v67 = vld [vmem:[%s3 + $0x2c] sm:$0xf]
  %v68 = vld [vmem:[%s3 + $0x30] sm:$0xf]
  %v69 = vld [vmem:[%s3 + $0x34] sm:$0xf]
  %v70 = vld [vmem:[%s3 + $0x38] sm:$0xf]
  %v71 = vld [vmem:[%s3 + $0x3c] sm:$0xf]
  %v88 = vunpack.c.l.b16 %v56
  %v89 = vunpack.c.l.b16 %v57
  %v90 = vunpack.c.l.b16 %v58
  %v91 = vunpack.c.l.b16 %v59
  %v92 = vunpack.c.l.b16 %v60
  %v93 = vunpack.c.l.b16 %v61
  %v94 = vunpack.c.l.b16 %v62
  %v95 = vunpack.c.l.b16 %v63
  %v96 = vunpack.c.l.b16 %v64
  %v97 = vunpack.c.l.b16 %v65
  %v98 = vunpack.c.l.b16 %v66
  %v99 = vunpack.c.l.b16 %v67
  %v100 = vunpack.c.l.b16 %v68
  %v101 = vunpack.c.l.b16 %v69
  %v102 = vunpack.c.l.b16 %v70
  %v103 = vunpack.c.l.b16 %v71
  %v104 = vpack.c.b16 %v89, %v88
  %v105 = vpack.c.b16 %v91, %v90
  %v106 = vpack.c.b16 %v93, %v92
  %v107 = vpack.c.b16 %v95, %v94
  %v108 = vpack.c.b16 %v97, %v96
  %v109 = vpack.c.b16 %v99, %v98
  %v110 = vpack.c.b16 %v101, %v100
  %v111 = vpack.c.b16 %v103, %v102
  %120 = vmatprep.subr.bf16.mxu0 0
  %121 = vmatpush1.bf16.msra.mxu0 %v104
  %122 = vmatprep.subr.bf16.mxu0 0
  %123 = vmatpush1.bf16.msra.mxu0 %v105
  %124 = vmatprep.subr.bf16.mxu0 0
  %125 = vmatpush1.bf16.msra.mxu0 %v106
  %126 = vmatprep.subr.bf16.mxu0 0
  %127 = vmatpush1.bf16.msra.mxu0 %v107
  %128 = vmatprep.subr.bf16.mxu0 0
  %129 = vmatpush1.bf16.msra.mxu0 %v108
  %130 = vmatprep.subr.bf16.mxu0 0
  %131 = vmatpush1.bf16.msra.mxu0 %v109
  %132 = vmatprep.subr.bf16.mxu0 0
  %133 = vmatpush1.bf16.msra.mxu0 %v110
  %134 = vmatprep.subr.bf16.mxu0 0
  %135 = vmatpush1.bf16.msra.mxu0 %v111
  %136 = vmatprep.subr.bf16.mxu0 0
  %137 = vmatpush1.bf16.msra.mxu0 0
  %138 = vmatprep.subr.bf16.mxu0 0
  %139 = vmatpush1.bf16.msra.mxu0 0
  %140 = vmatprep.subr.bf16.mxu0 0
  %141 = vmatpush1.bf16.msra.mxu0 0
  %142 = vmatprep.subr.bf16.mxu0 0
  %143 = vmatpush1.bf16.msra.mxu0 0
  %144 = vmatprep.subr.bf16.mxu0 0
  %145 = vmatpush1.bf16.msra.mxu0 0
  %146 = vmatprep.subr.bf16.mxu0 0
  %147 = vmatpush1.bf16.msra.mxu0 0
  %148 = vmatprep.subr.bf16.mxu0 0
  %149 = vmatpush1.bf16.msra.mxu0 0
  %150 = vmatprep.subr.bf16.mxu0 0
  %151 = vmatpush1.bf16.msra.mxu0 0
  %152 = vmatprep.mubr.bf16.mxu0 0
  %153 = vmatmul.mubr.bf16.gmra.mrb[0].mxu0 %v54
  %v154 = vpop.f32.mrb[0].mxu0
  %v155 = vadd.f32 0.0, %v154
  %v156 = vpop.f32.mrb[0].mxu0
  %v157 = vpop.f32.mrb[0].mxu0
  %v158 = vadd.f32 0.0, %v157
  %v159 = vpop.f32.mrb[0].mxu0
  %160 = vmatprep.mubr.bf16.mxu0 0
  %161 = vmatmul.mubr.bf16.gmra.mrb[0].mxu0 %v55
  %v162 = vpop.f32.mrb[0].mxu0
  %v163 = vadd.f32 0.0, %v162
  %v164 = vpop.f32.mrb[0].mxu0
  %v165 = vpop.f32.mrb[0].mxu0
  %v166 = vadd.f32 0.0, %v165
  %v167 = vpop.f32.mrb[0].mxu0
  %168 = vdwg.mxu0
  %v169 = vpack.c.bf16 %v158, %v155
  %v170 = vpack.c.bf16 %v166, %v163
  %v173 = vunpack.c.l.b16 %v169
  %v174 = vunpack.c.h.b16 %v169
  %v175 = vunpack.c.l.b16 %v170
  %v176 = vunpack.c.h.b16 %v170
  %v177 = vpack.c.b16 %v173, %v173
  %v178 = vpack.c.b16 %v174, %v174
  %v179 = vpack.c.b16 %v175, %v175
  %v180 = vpack.c.b16 %v176, %v176
  %185 = vst [vmem:[%s4] sm:$0xf] %v177
  %186 = vst [vmem:[%s4 + $0x4] sm:$0xf] %v178
  %187 = vst [vmem:[%s4 + $0x8] sm:$0xf] %v179
  %188 = vst [vmem:[%s4 + $0xc] sm:$0xf] %v180
  %v189 = vadd.f32 %v155, %v158
  %v190 = vadd.f32 %v189, %v163
  %v191 = vadd.f32 %v190, %v166
  %v192 = vrot.slane %v191, 4
  %v193 = vadd.f32 %v191, %v192
  %v194 = vrot.slane %v193, 2
  %v195 = vadd.f32 %v193, %v194
  %v196 = vrot.slane %v195, 1
  %v197 = vadd.f32 %v195, %v196
  %v198 = vmul.f32 %v155, %v155
  %v199 = vmul.f32 %v158, %v158
  %v200 = vmul.f32 %v163, %v163
  %v201 = vmul.f32 %v166, %v166
  %v202 = vadd.f32 %v198, %v199
  %v203 = vadd.f32 %v202, %v200
  %v204 = vadd.f32 %v203, %v201
  %v205 = vrot.slane %v204, 4
  %v206 = vadd.f32 %v204, %v205
  %v207 = vrot.slane %v206, 2
  %v208 = vadd.f32 %v206, %v207
  %v209 = vrot.slane %v208, 1
  %v210 = vadd.f32 %v208, %v209
  %vm211 = vcmask 1040384
  %v212 = vsel %vm211, %v197, %v210
  %213 = vst [vmem:[%s5] sm:$0x3] %v212
  // Predicated region
  $region18: #{refine_block_forward.24} parent=0 // pred_check
    _
  $region19: #{refine_block_forward.24} parent=0 // pred_check_branch
    %215 = sbr.rel (0) target = $region21
  $region20: #{refine_block_forward.24} parent=0 // pred_region
    _
  $region21: #{refine_block_forward.24} parent=0 // pred_fallthru
    _
  // Predicated region
  $region22: #{refine_block_forward.24} parent=0 // pred_check
    _
  $region23: #{refine_block_forward.24} parent=0 // pred_check_branch
    %217 = sbr.rel (0) target = $region25
  $region24: #{refine_block_forward.24} parent=0 // pred_region
    _
  $region25: #{refine_block_forward.24} parent=0 // pred_fallthru
    _
  // Predicated region
  $region26: #{refine_block_forward.24} parent=0 // pred_check
    _
  $region27: #{refine_block_forward.24} parent=0 // pred_check_branch
    %219 = sbr.rel (0) target = $region29
  $region28: #{refine_block_forward.24} parent=0 // pred_region
    _
  $region29: #{refine_block_forward.24} parent=0 // pred_fallthru
    _
  // Predicated region
  $region30: #{refine_block_forward.24} parent=0 // pred_check
    _
  $region31: #{refine_block_forward.24} parent=0 // pred_check_branch
    %221 = sbr.rel (0) target = $region33
  $region32: #{refine_block_forward.24} parent=0 // pred_region
    _
  $region33: #{refine_block_forward.24} parent=0 // pred_fallthru
    _

</llo_original>
